<compile_context>
chip_gen: v7x
topology: tpu7x:2x2x1
jax: 0.10.0
libtpu: 0.0.40
codegen_flags: <defaults>
</compile_context>

<pallas_src>
import functools

import jax
import jax.numpy as jnp
from jax.experimental import pallas as pl
from jax.experimental.pallas import tpu as pltpu

_BN_EPS = 1e-5
_NEG_FILL = -3.0e38              # "-inf" stand-in for masking padded point rows
_VMEM_LIMIT = 32 * 1024 * 1024   # explicit scoped-VMEM budget (valid on v5e/v6e/v7x)

# padded channel widths (lane-dense layouts)
_CIN_PAD = 128                   # 2   -> 128 (contraction dim of the first matmul)
_C1_PAD = 128                    # 64  -> 128
_C2 = 128
_C3 = 1024
_F1, _F2 = 512, 256


def _round_up(x, m):
    return (x + m - 1) // m * m


def _choose_point_tile(n):
    for cand in (256, 128, 64, 32, 16, 8):
        if n >= cand:
            return cand
    return 8


# ----------------------------------------------------------------------------
# Kernel 1: fused per-point MLP (3 layers, folded BN) + global max over points
# ----------------------------------------------------------------------------
def _point_mlp_max_kernel(x_ref, w1_ref, s1_ref, b1_ref, w2_ref, s2_ref, b2_ref,
                          w3_ref, s3_ref, b3_ref, o_ref, *, n_points, tp):
    j = pl.program_id(1)                       # point-tile index (reduction axis)

    x = x_ref[0]                               # (tp, CIN_PAD) bf16
    h = jnp.dot(x, w1_ref[...], preferred_element_type=jnp.float32)
    h = jnp.maximum(h * s1_ref[...] + b1_ref[...], 0.0)        # BN + ReLU (f32)
    h = jnp.dot(h.astype(jnp.bfloat16), w2_ref[...],
                preferred_element_type=jnp.float32)
    h = jnp.maximum(h * s2_ref[...] + b2_ref[...], 0.0)        # BN + ReLU (f32)
    h = jnp.dot(h.astype(jnp.bfloat16), w3_ref[...],
                preferred_element_type=jnp.float32)
    h = h * s3_ref[...] + b3_ref[...]                          # BN only (no ReLU pre-max)

    # mask padded point rows so they can never win the max
    row = j * tp + jax.lax.broadcasted_iota(jnp.int32, (tp, 1), 0)
    h = jnp.where(row < n_points, h, _NEG_FILL)

    tile_max = jnp.max(h, axis=0, keepdims=True)               # (1, C3)

    @pl.when(j == 0)
    def _():
        o_ref[...] = jnp.full(o_ref.shape, _NEG_FILL, o_ref.dtype)

    o_ref[...] = jnp.maximum(o_ref[...], tile_max[None])       # running max, VMEM-resident


def _point_mlp_max(x, n_points, w1, s1, b1, w2, s2, b2, w3, s3, b3):
    """x: (B, Np0, CIN_PAD) bf16 per-point rows -> (B, C3) f32 pooled features."""
    B, np0, cin = x.shape
    tp = _choose_point_tile(n_points)
    np_pad = _round_up(np0, tp)
    if np_pad != np0:
        x = jnp.pad(x, ((0, 0), (0, np_pad - np0), (0, 0)))
    n_tiles = np_pad // tp
    c3 = w3.shape[1]

    wconst = lambda b, j: (0, 0)
    kern = functools.partial(_point_mlp_max_kernel, n_points=n_points, tp=tp)

    out = pl.pallas_call(
        kern,
        grid_spec=pltpu.PrefetchScalarGridSpec(
            num_scalar_prefetch=0,
            grid=(B, n_tiles),
            in_specs=[
                pl.BlockSpec((1, tp, cin), lambda b, j: (b, j, 0)),
                pl.BlockSpec(w1.shape, wconst), pl.BlockSpec(s1.shape, wconst),
                pl.BlockSpec(b1.shape, wconst),
                pl.BlockSpec(w2.shape, wconst), pl.BlockSpec(s2.shape, wconst),
                pl.BlockSpec(b2.shape, wconst),
                pl.BlockSpec(w3.shape, wconst), pl.BlockSpec(s3.shape, wconst),
                pl.BlockSpec(b3.shape, wconst),
            ],
            out_specs=pl.BlockSpec((1, 1, c3), lambda b, j: (b, 0, 0)),
        ),
        out_shape=jax.ShapeDtypeStruct((B, 1, c3), jnp.float32),
        compiler_params=pltpu.CompilerParams(
            dimension_semantics=("parallel", "arbitrary"),
            vmem_limit_bytes=_VMEM_LIMIT),
    )(x, w1, s1, b1, w2, s2, b2, w3, s3, b3)
    return out.reshape(B, c3)


# ----------------------------------------------------------------------------
# Kernel 2: fused FC head (1024 -> 512 -> 256 -> n_embd_pad), BN+ReLU epilogues
# ----------------------------------------------------------------------------
def _fc_head_kernel(f_ref, w4_ref, s4_ref, b4_ref, w5_ref, s5_ref, b5_ref,
                    w6_ref, b6_ref, o_ref):
    h = jnp.dot(f_ref[...], w4_ref[...], preferred_element_type=jnp.float32)
    h = jnp.maximum(h * s4_ref[...] + b4_ref[...], 0.0)
    h = jnp.dot(h.astype(jnp.bfloat16), w5_ref[...],
                preferred_element_type=jnp.float32)
    h = jnp.maximum(h * s5_ref[...] + b5_ref[...], 0.0)
    h = jnp.dot(h.astype(jnp.bfloat16), w6_ref[...],
                preferred_element_type=jnp.float32)
    o_ref[...] = h + b6_ref[...]


def _fc_head(f, w4, s4, b4, w5, s5, b5, w6, b6):
    """f: (B, 1024) f32 -> (B, n_out_pad) f32."""
    B, K = f.shape
    n_out = w6.shape[1]
    tb = 16                                   # bf16 sublane-packing friendly batch tile
    b_pad = _round_up(B, tb)
    if b_pad != B:
        f = jnp.pad(f, ((0, b_pad - B), (0, 0)))
    f = f.astype(jnp.bfloat16)

    wconst = lambda i: (0, 0)
    out = pl.pallas_call(
        _fc_head_kernel,
        grid_spec=pltpu.PrefetchScalarGridSpec(
            num_scalar_prefetch=0,
            grid=(b_pad // tb,),
            in_specs=[
                pl.BlockSpec((tb, K), lambda i: (i, 0)),
                pl.BlockSpec(w4.shape, wconst), pl.BlockSpec(s4.shape, wconst),
                pl.BlockSpec(b4.shape, wconst),
                pl.BlockSpec(w5.shape, wconst), pl.BlockSpec(s5.shape, wconst),
                pl.BlockSpec(b5.shape, wconst),
                pl.BlockSpec(w6.shape, wconst), pl.BlockSpec(b6.shape, wconst),
            ],
            out_specs=pl.BlockSpec((tb, n_out), lambda i: (i, 0)),
        ),
        out_shape=jax.ShapeDtypeStruct((b_pad, n_out), jnp.float32),
        compiler_params=pltpu.CompilerParams(
            dimension_semantics=("parallel",),
            vmem_limit_bytes=_VMEM_LIMIT),
    )(f, w4, s4, b4, w5, s5, b5, w6, b6)
    return out[:B]


# ----------------------------------------------------------------------------
# BN folding / padding helpers (plain-JAX glue; negligible cost, jit-fused)
# ----------------------------------------------------------------------------
def _fold_bn(lin_bias, bn):
    scale = bn["gamma"] / jnp.sqrt(bn["var"] + _BN_EPS)
    bias = (lin_bias - bn["mean"]) * scale + bn["beta"]
    return scale.astype(jnp.float32), bias.astype(jnp.float32)


def _pad2(a, rows, cols):
    return jnp.pad(a, ((0, rows - a.shape[0]), (0, cols - a.shape[1])))


def _pad_vec(v, n):
    return jnp.pad(v, (0, n - v.shape[0])).reshape(1, n).astype(jnp.float32)


# ----------------------------------------------------------------------------
# Forward: PointNetTokenizer(x) == PointNet(x)
# ----------------------------------------------------------------------------
def pointnet_tokenizer_forward(params, x):
    """x: (B, 2, n_points) -- PyTorch (batch, channel, points) layout."""
    B, cin, n_points = x.shape
    assert cin <= _CIN_PAD
    n_embd = params["fc3"]["w"].shape[1]
    embd_pad = _round_up(n_embd, 128)

    # fold BN and zero-pad weights / affine terms to lane-dense shapes
    w1 = _pad2(params["conv1"]["w"], _CIN_PAD, _C1_PAD).astype(jnp.bfloat16)
    s1, b1 = _fold_bn(params["conv1"]["b"], params["bn1"])
    s1, b1 = _pad_vec(s1, _C1_PAD), _pad_vec(b1, _C1_PAD)

    w2 = _pad2(params["conv2"]["w"], _C1_PAD, _C2).astype(jnp.bfloat16)
    s2, b2 = _fold_bn(params["conv2"]["b"], params["bn2"])
    s2, b2 = s2.reshape(1, _C2), b2.reshape(1, _C2)

    w3 = params["conv3"]["w"].astype(jnp.bfloat16)
    s3, b3 = _fold_bn(params["conv3"]["b"], params["bn3"])
    s3, b3 = s3.reshape(1, _C3), b3.reshape(1, _C3)

    w4 = params["fc1"]["w"].astype(jnp.bfloat16)
    s4, b4 = _fold_bn(params["fc1"]["b"], params["bn4"])
    s4, b4 = s4.reshape(1, _F1), b4.reshape(1, _F1)

    w5 = params["fc2"]["w"].astype(jnp.bfloat16)
    s5, b5 = _fold_bn(params["fc2"]["b"], params["bn5"])
    s5, b5 = s5.reshape(1, _F2), b5.reshape(1, _F2)

    w6 = _pad2(params["fc3"]["w"], _F2, embd_pad).astype(jnp.bfloat16)
    b6 = _pad_vec(params["fc3"]["b"], embd_pad)

    # per-point rows, channel-last, channels zero-padded to 128 lanes, bf16 for the MXU
    xt = jnp.transpose(x, (0, 2, 1)).astype(jnp.float32)            # (B, N, cin)
    xt = jnp.pad(xt, ((0, 0), (0, 0), (0, _CIN_PAD - cin))).astype(jnp.bfloat16)

    feat = _point_mlp_max(xt, n_points, w1, s1, b1, w2, s2, b2, w3, s3, b3)  # (B, 1024)
    tok = _fc_head(feat, w4, s4, b4, w5, s5, b5, w6, b6)                     # (B, pad)
    return tok[:, :n_embd]


# ----------------------------------------------------------------------------
# Deterministic synthetic parameters (torch-like layout, eval-mode BN stats)
# ----------------------------------------------------------------------------
def init_params(key, n_embd, cin=2):
    ks = iter(jax.random.split(key, 16))

    def lin(k, ci, co):
        k1, k2 = jax.random.split(k)
        bound = 1.0 / jnp.sqrt(ci)
        return {"w": jax.random.uniform(k1, (ci, co), jnp.float32, -bound, bound),
                "b": jax.random.uniform(k2, (co,), jnp.float32, -bound, bound)}

    def bn(k, c):
        kg, kb, km, kv = jax.random.split(k, 4)
        return {"gamma": 1.0 + 0.1 * jax.random.normal(kg, (c,), jnp.float32),
                "beta": 0.1 * jax.random.normal(kb, (c,), jnp.float32),
                "mean": 0.1 * jax.random.normal(km, (c,), jnp.float32),
                "var": 1.0 + 0.1 * jnp.abs(jax.random.normal(kv, (c,), jnp.float32))}

    p = {}
    p["conv1"], p["bn1"] = lin(next(ks), cin, 64), bn(next(ks), 64)
    p["conv2"], p["bn2"] = lin(next(ks), 64, 128), bn(next(ks), 128)
    p["conv3"], p["bn3"] = lin(next(ks), 128, 1024), bn(next(ks), 1024)
    p["fc1"], p["bn4"] = lin(next(ks), 1024, 512), bn(next(ks), 512)
    p["fc2"], p["bn5"] = lin(next(ks), 512, 256), bn(next(ks), 256)
    p["fc3"] = lin(next(ks), 256, n_embd)
    return p


# ----------------------------------------------------------------------------
# Pure-JAX reference (f32) for correctness checking
# ----------------------------------------------------------------------------
def _reference_forward(params, x):
    def bn(h, p):
        return (h - p["mean"]) / jnp.sqrt(p["var"] + _BN_EPS) * p["gamma"] + p["beta"]

    h = jnp.transpose(x, (0, 2, 1)).astype(jnp.float32)                    # (B, N, 2)
    h = jax.nn.relu(bn(h @ params["conv1"]["w"] + params["conv1"]["b"], params["bn1"]))
    h = jax.nn.relu(bn(h @ params["conv2"]["w"] + params["conv2"]["b"], params["bn2"]))
    h = bn(h @ params["conv3"]["w"] + params["conv3"]["b"], params["bn3"])
    g = jnp.max(h, axis=1)                                                 # (B, 1024)
    g = jax.nn.relu(bn(g @ params["fc1"]["w"] + params["fc1"]["b"], params["bn4"]))
    g = jax.nn.relu(bn(g @ params["fc2"]["w"] + params["fc2"]["b"], params["bn5"]))
    return g @ params["fc3"]["w"] + params["fc3"]["b"]


if __name__ == "__main__":
    key = jax.random.PRNGKey(0)
    k_par, k_x = jax.random.split(key)

    n_embd = 32
    batch = 2
    n_channel, n_points = 2, 720     # module's batch_input_size = (-1, 2, 720)

    params = init_params(k_par, n_embd, n_channel)
    x = jax.random.normal(k_x, (batch, n_channel, n_points), jnp.float32)

    fwd = jax.jit(pointnet_tokenizer_forward)
    out = jax.block_until_ready(fwd(params, x))

    assert out.shape == (batch, n_embd), out.shape
    assert bool(jnp.all(jnp.isfinite(out))), "non-finite output"

    ref = _reference_forward(params, x)
    err = float(jnp.max(jnp.abs(out - ref)))
    assert err < 1e-1, f"mismatch vs pure-JAX reference: max abs err = {err}"

    print("KERNEL_OK")
</pallas_src>

<mosaic_0001>
module attributes {stable_mosaic.version = 11 : i64} {
  func.func @_point_mlp_max_kernel(%arg0: i32, %arg1: i32, %arg2: memref<1x256x128xbf16, #tpu.memory_space<vmem>>, %arg3: memref<128x128xbf16, #tpu.memory_space<vmem>>, %arg4: memref<1x128xf32, #tpu.memory_space<vmem>>, %arg5: memref<1x128xf32, #tpu.memory_space<vmem>>, %arg6: memref<128x128xbf16, #tpu.memory_space<vmem>>, %arg7: memref<1x128xf32, #tpu.memory_space<vmem>>, %arg8: memref<1x128xf32, #tpu.memory_space<vmem>>, %arg9: memref<128x1024xbf16, #tpu.memory_space<vmem>>, %arg10: memref<1x1024xf32, #tpu.memory_space<vmem>>, %arg11: memref<1x1024xf32, #tpu.memory_space<vmem>>, %arg12: memref<1x1x1024xf32, #tpu.memory_space<vmem>>) attributes {dimension_semantics = [#tpu.dimension_semantics<parallel>, #tpu.dimension_semantics<arbitrary>], iteration_bounds = array<i64: 2, 3>, scalar_prefetch = 0 : i64, scratch_operands = 0 : i64, tpu.core_type = #tpu.core_type<tc>, window_params = [{transform_indices = @transform_0, window_bounds = array<i64: 1, 256, 128>}, {pipeline_mode = #tpu.pipeline_mode<synchronous>, transform_indices = @transform_1, window_bounds = array<i64: 128, 128>}, {pipeline_mode = #tpu.pipeline_mode<synchronous>, transform_indices = @transform_2, window_bounds = array<i64: 1, 128>}, {pipeline_mode = #tpu.pipeline_mode<synchronous>, transform_indices = @transform_3, window_bounds = array<i64: 1, 128>}, {pipeline_mode = #tpu.pipeline_mode<synchronous>, transform_indices = @transform_4, window_bounds = array<i64: 128, 128>}, {pipeline_mode = #tpu.pipeline_mode<synchronous>, transform_indices = @transform_5, window_bounds = array<i64: 1, 128>}, {pipeline_mode = #tpu.pipeline_mode<synchronous>, transform_indices = @transform_6, window_bounds = array<i64: 1, 128>}, {pipeline_mode = #tpu.pipeline_mode<synchronous>, transform_indices = @transform_7, window_bounds = array<i64: 128, 1024>}, {pipeline_mode = #tpu.pipeline_mode<synchronous>, transform_indices = @transform_8, window_bounds = array<i64: 1, 1024>}, {pipeline_mode = #tpu.pipeline_mode<synchronous>, transform_indices = @transform_9, window_bounds = array<i64: 1, 1024>}, {transform_indices = @transform_10, window_bounds = array<i64: 1, 1, 1024>}]} {
    %c0 = arith.constant 0 : index
    %c0_0 = arith.constant 0 : index
    %c0_1 = arith.constant 0 : index
    %0 = vector.load %arg2[%c0, %c0_0, %c0_1] : memref<1x256x128xbf16, #tpu.memory_space<vmem>>, vector<1x256x128xbf16>
    %1 = vector.shape_cast %0 : vector<1x256x128xbf16> to vector<256x128xbf16>
    %c0_2 = arith.constant 0 : index
    %c0_3 = arith.constant 0 : index
    %2 = vector.load %arg3[%c0_2, %c0_3] : memref<128x128xbf16, #tpu.memory_space<vmem>>, vector<128x128xbf16>
    %cst = arith.constant dense<0.000000e+00> : vector<256x128xf32>
    %3 = tpu.matmul %1, %2, %cst {dimension_numbers = #tpu.dot_dimension_numbers<[1], [0], [0], [1], [0, 0, 1, 1], [], []>} : vector<256x128xbf16>, vector<128x128xbf16>, vector<256x128xf32> -> vector<256x128xf32>
    %c0_4 = arith.constant 0 : index
    %c0_5 = arith.constant 0 : index
    %4 = vector.load %arg4[%c0_4, %c0_5] : memref<1x128xf32, #tpu.memory_space<vmem>>, vector<1x128xf32>
    %5 = vector.broadcast %4 : vector<1x128xf32> to vector<256x128xf32>
    %6 = arith.mulf %3, %5 : vector<256x128xf32>
    %c0_6 = arith.constant 0 : index
    %c0_7 = arith.constant 0 : index
    %7 = vector.load %arg5[%c0_6, %c0_7] : memref<1x128xf32, #tpu.memory_space<vmem>>, vector<1x128xf32>
    %8 = vector.broadcast %7 : vector<1x128xf32> to vector<256x128xf32>
    %9 = arith.addf %6, %8 : vector<256x128xf32>
    %cst_8 = arith.constant 0.000000e+00 : f32
    %10 = vector.broadcast %cst_8 : f32 to vector<256x128xf32>
    %11 = arith.maximumf %9, %10 : vector<256x128xf32>
    %12 = arith.truncf %11 : vector<256x128xf32> to vector<256x128xbf16>
    %c0_9 = arith.constant 0 : index
    %c0_10 = arith.constant 0 : index
    %13 = vector.load %arg6[%c0_9, %c0_10] : memref<128x128xbf16, #tpu.memory_space<vmem>>, vector<128x128xbf16>
    %cst_11 = arith.constant dense<0.000000e+00> : vector<256x128xf32>
    %14 = tpu.matmul %12, %13, %cst_11 {dimension_numbers = #tpu.dot_dimension_numbers<[1], [0], [0], [1], [0, 0, 1, 1], [], []>} : vector<256x128xbf16>, vector<128x128xbf16>, vector<256x128xf32> -> vector<256x128xf32>
    %c0_12 = arith.constant 0 : index
    %c0_13 = arith.constant 0 : index
    %15 = vector.load %arg7[%c0_12, %c0_13] : memref<1x128xf32, #tpu.memory_space<vmem>>, vector<1x128xf32>
    %16 = vector.broadcast %15 : vector<1x128xf32> to vector<256x128xf32>
    %17 = arith.mulf %14, %16 : vector<256x128xf32>
    %c0_14 = arith.constant 0 : index
    %c0_15 = arith.constant 0 : index
    %18 = vector.load %arg8[%c0_14, %c0_15] : memref<1x128xf32, #tpu.memory_space<vmem>>, vector<1x128xf32>
    %19 = vector.broadcast %18 : vector<1x128xf32> to vector<256x128xf32>
    %20 = arith.addf %17, %19 : vector<256x128xf32>
    %cst_16 = arith.constant 0.000000e+00 : f32
    %21 = vector.broadcast %cst_16 : f32 to vector<256x128xf32>
    %22 = arith.maximumf %20, %21 : vector<256x128xf32>
    %23 = arith.truncf %22 : vector<256x128xf32> to vector<256x128xbf16>
    %c0_17 = arith.constant 0 : index
    %c0_18 = arith.constant 0 : index
    %24 = vector.load %arg9[%c0_17, %c0_18] : memref<128x1024xbf16, #tpu.memory_space<vmem>>, vector<128x1024xbf16>
    %cst_19 = arith.constant dense<0.000000e+00> : vector<256x1024xf32>
    %25 = tpu.matmul %23, %24, %cst_19 {dimension_numbers = #tpu.dot_dimension_numbers<[1], [0], [0], [1], [0, 0, 1, 1], [], []>} : vector<256x128xbf16>, vector<128x1024xbf16>, vector<256x1024xf32> -> vector<256x1024xf32>
    %c0_20 = arith.constant 0 : index
    %c0_21 = arith.constant 0 : index
    %26 = vector.load %arg10[%c0_20, %c0_21] : memref<1x1024xf32, #tpu.memory_space<vmem>>, vector<1x1024xf32>
    %27 = vector.broadcast %26 : vector<1x1024xf32> to vector<256x1024xf32>
    %28 = arith.mulf %25, %27 : vector<256x1024xf32>
    %c0_22 = arith.constant 0 : index
    %c0_23 = arith.constant 0 : index
    %29 = vector.load %arg11[%c0_22, %c0_23] : memref<1x1024xf32, #tpu.memory_space<vmem>>, vector<1x1024xf32>
    %30 = vector.broadcast %29 : vector<1x1024xf32> to vector<256x1024xf32>
    %31 = arith.addf %28, %30 : vector<256x1024xf32>
    %c256_i32 = arith.constant 256 : i32
    %32 = arith.muli %arg1, %c256_i32 : i32
    %33 = tpu.iota {dimensions = array<i32: 0>} : vector<256x1xi32>
    %34 = vector.broadcast %32 : i32 to vector<256x1xi32>
    %35 = arith.addi %34, %33 : vector<256x1xi32>
    %c720_i32 = arith.constant 720 : i32
    %36 = vector.broadcast %c720_i32 : i32 to vector<256x1xi32>
    %37 = arith.cmpi slt, %35, %36 : vector<256x1xi32>
    %cst_24 = arith.constant -3.000000e+38 : f32
    %38 = vector.shape_cast %37 : vector<256x1xi1> to vector<256x1xi1>
    %39 = vector.broadcast %38 : vector<256x1xi1> to vector<256x1024xi1>
    %40 = vector.broadcast %cst_24 : f32 to vector<256x1024xf32>
    %41 = arith.select %39, %31, %40 : vector<256x1024xi1>, vector<256x1024xf32>
    %cst_25 = arith.constant dense<0xFF800000> : vector<1024xf32>
    %42 = vector.multi_reduction <maximumf>, %41, %cst_25 [0] : vector<256x1024xf32> to vector<1024xf32>
    %43 = vector.shape_cast %42 : vector<1024xf32> to vector<1x1024xf32>
    %c0_i32 = arith.constant 0 : i32
    %44 = arith.cmpi eq, %arg1, %c0_i32 : i32
    %45 = arith.extui %44 : i1 to i32
    %c0_i32_26 = arith.constant 0 : i32
    %46 = arith.cmpi ne, %45, %c0_i32_26 : i32
    scf.if %46 {
      %cst_33 = arith.constant -3.000000e+38 : f32
      %51 = vector.broadcast %cst_33 : f32 to vector<1x1x1024xf32>
      %c0_34 = arith.constant 0 : index
      %c0_35 = arith.constant 0 : index
      %c0_36 = arith.constant 0 : index
      %52 = vector.load %arg12[%c0_34, %c0_35, %c0_36] : memref<1x1x1024xf32, #tpu.memory_space<vmem>>, vector<1x1x1024xf32>
      tpu.vector_store %arg12[%c0_34, %c0_35, %c0_36], %51 {strides = array<i32>} : memref<1x1x1024xf32, #tpu.memory_space<vmem>>, vector<1x1x1024xf32>,
    } else {
    }
    %c0_27 = arith.constant 0 : index
    %c0_28 = arith.constant 0 : index
    %c0_29 = arith.constant 0 : index
    %47 = vector.load %arg12[%c0_27, %c0_28, %c0_29] : memref<1x1x1024xf32, #tpu.memory_space<vmem>>, vector<1x1x1024xf32>
    %48 = vector.shape_cast %43 : vector<1x1024xf32> to vector<1x1x1024xf32>
    %49 = arith.maximumf %47, %48 : vector<1x1x1024xf32>
    %c0_30 = arith.constant 0 : index
    %c0_31 = arith.constant 0 : index
    %c0_32 = arith.constant 0 : index
    %50 = vector.load %arg12[%c0_30, %c0_31, %c0_32] : memref<1x1x1024xf32, #tpu.memory_space<vmem>>, vector<1x1x1024xf32>
    tpu.vector_store %arg12[%c0_30, %c0_31, %c0_32], %49 {strides = array<i32>} : memref<1x1x1024xf32, #tpu.memory_space<vmem>>, vector<1x1x1024xf32>,
    return
  }
  func.func @transform_0(%arg0: i32, %arg1: i32) -> (i32, i32, i32) {
    %c0_i32 = arith.constant 0 : i32
    %c0_i32_0 = arith.constant 0 : i32
    return %arg0, %arg1, %c0_i32 : i32, i32, i32
  }
  func.func @transform_1(%arg0: i32, %arg1: i32) -> (i32, i32) {
    %c0_i32 = arith.constant 0 : i32
    %c0_i32_0 = arith.constant 0 : i32
    %c0_i32_1 = arith.constant 0 : i32
    return %c0_i32, %c0_i32_0 : i32, i32
  }
  func.func @transform_2(%arg0: i32, %arg1: i32) -> (i32, i32) {
    %c0_i32 = arith.constant 0 : i32
    %c0_i32_0 = arith.constant 0 : i32
    %c0_i32_1 = arith.constant 0 : i32
    return %c0_i32, %c0_i32_0 : i32, i32
  }
  func.func @transform_3(%arg0: i32, %arg1: i32) -> (i32, i32) {
    %c0_i32 = arith.constant 0 : i32
    %c0_i32_0 = arith.constant 0 : i32
    %c0_i32_1 = arith.constant 0 : i32
    return %c0_i32, %c0_i32_0 : i32, i32
  }
  func.func @transform_4(%arg0: i32, %arg1: i32) -> (i32, i32) {
    %c0_i32 = arith.constant 0 : i32
    %c0_i32_0 = arith.constant 0 : i32
    %c0_i32_1 = arith.constant 0 : i32
    return %c0_i32, %c0_i32_0 : i32, i32
  }
  func.func @transform_5(%arg0: i32, %arg1: i32) -> (i32, i32) {
    %c0_i32 = arith.constant 0 : i32
    %c0_i32_0 = arith.constant 0 : i32
    %c0_i32_1 = arith.constant 0 : i32
    return %c0_i32, %c0_i32_0 : i32, i32
  }
  func.func @transform_6(%arg0: i32, %arg1: i32) -> (i32, i32) {
    %c0_i32 = arith.constant 0 : i32
    %c0_i32_0 = arith.constant 0 : i32
    %c0_i32_1 = arith.constant 0 : i32
    return %c0_i32, %c0_i32_0 : i32, i32
  }
  func.func @transform_7(%arg0: i32, %arg1: i32) -> (i32, i32) {
    %c0_i32 = arith.constant 0 : i32
    %c0_i32_0 = arith.constant 0 : i32
    %c0_i32_1 = arith.constant 0 : i32
    return %c0_i32, %c0_i32_0 : i32, i32
  }
  func.func @transform_8(%arg0: i32, %arg1: i32) -> (i32, i32) {
    %c0_i32 = arith.constant 0 : i32
    %c0_i32_0 = arith.constant 0 : i32
    %c0_i32_1 = arith.constant 0 : i32
    return %c0_i32, %c0_i32_0 : i32, i32
  }
  func.func @transform_9(%arg0: i32, %arg1: i32) -> (i32, i32) {
    %c0_i32 = arith.constant 0 : i32
    %c0_i32_0 = arith.constant 0 : i32
    %c0_i32_1 = arith.constant 0 : i32
    return %c0_i32, %c0_i32_0 : i32, i32
  }
  func.func @transform_10(%arg0: i32, %arg1: i32) -> (i32, i32, i32) {
    %c0_i32 = arith.constant 0 : i32
    %c0_i32_0 = arith.constant 0 : i32
    %c0_i32_1 = arith.constant 0 : i32
    return %arg0, %c0_i32, %c0_i32_0 : i32, i32, i32
  }
}

module attributes {stable_mosaic.version = 11 : i64} {
  func.func @_fc_head_kernel(%arg0: i32, %arg1: memref<16x1024xbf16, #tpu.memory_space<vmem>>, %arg2: memref<1024x512xbf16, #tpu.memory_space<vmem>>, %arg3: memref<1x512xf32, #tpu.memory_space<vmem>>, %arg4: memref<1x512xf32, #tpu.memory_space<vmem>>, %arg5: memref<512x256xbf16, #tpu.memory_space<vmem>>, %arg6: memref<1x256xf32, #tpu.memory_space<vmem>>, %arg7: memref<1x256xf32, #tpu.memory_space<vmem>>, %arg8: memref<256x128xbf16, #tpu.memory_space<vmem>>, %arg9: memref<1x128xf32, #tpu.memory_space<vmem>>, %arg10: memref<16x128xf32, #tpu.memory_space<vmem>>) attributes {dimension_semantics = [#tpu.dimension_semantics<parallel>], iteration_bounds = array<i64: 1>, scalar_prefetch = 0 : i64, scratch_operands = 0 : i64, tpu.core_type = #tpu.core_type<tc>, window_params = [{transform_indices = @transform_0, window_bounds = array<i64: 16, 1024>}, {pipeline_mode = #tpu.pipeline_mode<synchronous>, transform_indices = @transform_1, window_bounds = array<i64: 1024, 512>}, {pipeline_mode = #tpu.pipeline_mode<synchronous>, transform_indices = @transform_2, window_bounds = array<i64: 1, 512>}, {pipeline_mode = #tpu.pipeline_mode<synchronous>, transform_indices = @transform_3, window_bounds = array<i64: 1, 512>}, {pipeline_mode = #tpu.pipeline_mode<synchronous>, transform_indices = @transform_4, window_bounds = array<i64: 512, 256>}, {pipeline_mode = #tpu.pipeline_mode<synchronous>, transform_indices = @transform_5, window_bounds = array<i64: 1, 256>}, {pipeline_mode = #tpu.pipeline_mode<synchronous>, transform_indices = @transform_6, window_bounds = array<i64: 1, 256>}, {pipeline_mode = #tpu.pipeline_mode<synchronous>, transform_indices = @transform_7, window_bounds = array<i64: 256, 128>}, {pipeline_mode = #tpu.pipeline_mode<synchronous>, transform_indices = @transform_8, window_bounds = array<i64: 1, 128>}, {transform_indices = @transform_9, window_bounds = array<i64: 16, 128>}]} {
    %c0 = arith.constant 0 : index
    %c0_0 = arith.constant 0 : index
    %0 = vector.load %arg1[%c0, %c0_0] : memref<16x1024xbf16, #tpu.memory_space<vmem>>, vector<16x1024xbf16>
    %c0_1 = arith.constant 0 : index
    %c0_2 = arith.constant 0 : index
    %1 = vector.load %arg2[%c0_1, %c0_2] : memref<1024x512xbf16, #tpu.memory_space<vmem>>, vector<1024x512xbf16>
    %cst = arith.constant dense<0.000000e+00> : vector<16x512xf32>
    %2 = tpu.matmul %0, %1, %cst {dimension_numbers = #tpu.dot_dimension_numbers<[1], [0], [0], [1], [0, 0, 1, 1], [], []>} : vector<16x1024xbf16>, vector<1024x512xbf16>, vector<16x512xf32> -> vector<16x512xf32>
    %c0_3 = arith.constant 0 : index
    %c0_4 = arith.constant 0 : index
    %3 = vector.load %arg3[%c0_3, %c0_4] : memref<1x512xf32, #tpu.memory_space<vmem>>, vector<1x512xf32>
    %4 = vector.broadcast %3 : vector<1x512xf32> to vector<16x512xf32>
    %5 = arith.mulf %2, %4 : vector<16x512xf32>
    %c0_5 = arith.constant 0 : index
    %c0_6 = arith.constant 0 : index
    %6 = vector.load %arg4[%c0_5, %c0_6] : memref<1x512xf32, #tpu.memory_space<vmem>>, vector<1x512xf32>
    %7 = vector.broadcast %6 : vector<1x512xf32> to vector<16x512xf32>
    %8 = arith.addf %5, %7 : vector<16x512xf32>
    %cst_7 = arith.constant 0.000000e+00 : f32
    %9 = vector.broadcast %cst_7 : f32 to vector<16x512xf32>
    %10 = arith.maximumf %8, %9 : vector<16x512xf32>
    %11 = arith.truncf %10 : vector<16x512xf32> to vector<16x512xbf16>
    %c0_8 = arith.constant 0 : index
    %c0_9 = arith.constant 0 : index
    %12 = vector.load %arg5[%c0_8, %c0_9] : memref<512x256xbf16, #tpu.memory_space<vmem>>, vector<512x256xbf16>
    %cst_10 = arith.constant dense<0.000000e+00> : vector<16x256xf32>
    %13 = tpu.matmul %11, %12, %cst_10 {dimension_numbers = #tpu.dot_dimension_numbers<[1], [0], [0], [1], [0, 0, 1, 1], [], []>} : vector<16x512xbf16>, vector<512x256xbf16>, vector<16x256xf32> -> vector<16x256xf32>
    %c0_11 = arith.constant 0 : index
    %c0_12 = arith.constant 0 : index
    %14 = vector.load %arg6[%c0_11, %c0_12] : memref<1x256xf32, #tpu.memory_space<vmem>>, vector<1x256xf32>
    %15 = vector.broadcast %14 : vector<1x256xf32> to vector<16x256xf32>
    %16 = arith.mulf %13, %15 : vector<16x256xf32>
    %c0_13 = arith.constant 0 : index
    %c0_14 = arith.constant 0 : index
    %17 = vector.load %arg7[%c0_13, %c0_14] : memref<1x256xf32, #tpu.memory_space<vmem>>, vector<1x256xf32>
    %18 = vector.broadcast %17 : vector<1x256xf32> to vector<16x256xf32>
    %19 = arith.addf %16, %18 : vector<16x256xf32>
    %cst_15 = arith.constant 0.000000e+00 : f32
    %20 = vector.broadcast %cst_15 : f32 to vector<16x256xf32>
    %21 = arith.maximumf %19, %20 : vector<16x256xf32>
    %22 = arith.truncf %21 : vector<16x256xf32> to vector<16x256xbf16>
    %c0_16 = arith.constant 0 : index
    %c0_17 = arith.constant 0 : index
    %23 = vector.load %arg8[%c0_16, %c0_17] : memref<256x128xbf16, #tpu.memory_space<vmem>>, vector<256x128xbf16>
    %cst_18 = arith.constant dense<0.000000e+00> : vector<16x128xf32>
    %24 = tpu.matmul %22, %23, %cst_18 {dimension_numbers = #tpu.dot_dimension_numbers<[1], [0], [0], [1], [0, 0, 1, 1], [], []>} : vector<16x256xbf16>, vector<256x128xbf16>, vector<16x128xf32> -> vector<16x128xf32>
    %c0_19 = arith.constant 0 : index
    %c0_20 = arith.constant 0 : index
    %25 = vector.load %arg9[%c0_19, %c0_20] : memref<1x128xf32, #tpu.memory_space<vmem>>, vector<1x128xf32>
    %26 = vector.broadcast %25 : vector<1x128xf32> to vector<16x128xf32>
    %27 = arith.addf %24, %26 : vector<16x128xf32>
    %c0_21 = arith.constant 0 : index
    %c0_22 = arith.constant 0 : index
    %28 = vector.load %arg10[%c0_21, %c0_22] : memref<16x128xf32, #tpu.memory_space<vmem>>, vector<16x128xf32>
    tpu.vector_store %arg10[%c0_21, %c0_22], %27 {strides = array<i32>} : memref<16x128xf32, #tpu.memory_space<vmem>>, vector<16x128xf32>,
    return
  }
  func.func @transform_0(%arg0: i32) -> (i32, i32) {
    %c0_i32 = arith.constant 0 : i32
    %c0_i32_0 = arith.constant 0 : i32
    return %arg0, %c0_i32 : i32, i32
  }
  func.func @transform_1(%arg0: i32) -> (i32, i32) {
    %c0_i32 = arith.constant 0 : i32
    %c0_i32_0 = arith.constant 0 : i32
    %c0_i32_1 = arith.constant 0 : i32
    return %c0_i32, %c0_i32_0 : i32, i32
  }
  func.func @transform_2(%arg0: i32) -> (i32, i32) {
    %c0_i32 = arith.constant 0 : i32
    %c0_i32_0 = arith.constant 0 : i32
    %c0_i32_1 = arith.constant 0 : i32
    return %c0_i32, %c0_i32_0 : i32, i32
  }
  func.func @transform_3(%arg0: i32) -> (i32, i32) {
    %c0_i32 = arith.constant 0 : i32
    %c0_i32_0 = arith.constant 0 : i32
    %c0_i32_1 = arith.constant 0 : i32
    return %c0_i32, %c0_i32_0 : i32, i32
  }
  func.func @transform_4(%arg0: i32) -> (i32, i32) {
    %c0_i32 = arith.constant 0 : i32
    %c0_i32_0 = arith.constant 0 : i32
    %c0_i32_1 = arith.constant 0 : i32
    return %c0_i32, %c0_i32_0 : i32, i32
  }
  func.func @transform_5(%arg0: i32) -> (i32, i32) {
    %c0_i32 = arith.constant 0 : i32
    %c0_i32_0 = arith.constant 0 : i32
    %c0_i32_1 = arith.constant 0 : i32
    return %c0_i32, %c0_i32_0 : i32, i32
  }
  func.func @transform_6(%arg0: i32) -> (i32, i32) {
    %c0_i32 = arith.constant 0 : i32
    %c0_i32_0 = arith.constant 0 : i32
    %c0_i32_1 = arith.constant 0 : i32
    return %c0_i32, %c0_i32_0 : i32, i32
  }
  func.func @transform_7(%arg0: i32) -> (i32, i32) {
    %c0_i32 = arith.constant 0 : i32
    %c0_i32_0 = arith.constant 0 : i32
    %c0_i32_1 = arith.constant 0 : i32
    return %c0_i32, %c0_i32_0 : i32, i32
  }
  func.func @transform_8(%arg0: i32) -> (i32, i32) {
    %c0_i32 = arith.constant 0 : i32
    %c0_i32_0 = arith.constant 0 : i32
    %c0_i32_1 = arith.constant 0 : i32
    return %c0_i32, %c0_i32_0 : i32, i32
  }
  func.func @transform_9(%arg0: i32) -> (i32, i32) {
    %c0_i32 = arith.constant 0 : i32
    %c0_i32_0 = arith.constant 0 : i32
    return %arg0, %c0_i32 : i32, i32
  }
}

</mosaic_0001>

<llo_original>
// kernel: pointnet_tokenizer_forward.2
$region0: #{pointnet_tokenizer_forward.2}
  #allocation0 [shape = 'u32[]', space=smem, size = 0x4, offset = 0x4, fixed_abs, tag = 'smem constant byte address 0x4 - core index']
  #allocation1 [shape = 'u32[144,128]{1,0:T(1,128)}', space=vmem, size = 0x12000, scoped, tag = 'internal scratch']
  %s0 = inlined_call_operand.vmem [shape: bf16[2,768,128], index: 0, kind: input, shape index: {}]
  %s1 = inlined_call_operand.vmem [shape: bf16[128,128], index: 1, kind: input, shape index: {}]
  %s2 = inlined_call_operand.vmem [shape: f32[1,128], index: 2, kind: input, shape index: {}]
  %s3 = inlined_call_operand.vmem [shape: f32[1,128], index: 3, kind: input, shape index: {}]
  %s4 = inlined_call_operand.vmem [shape: bf16[128,128], index: 4, kind: input, shape index: {}]
  %s5 = inlined_call_operand.vmem [shape: f32[1,128], index: 5, kind: input, shape index: {}]
  %s6 = inlined_call_operand.vmem [shape: f32[1,128], index: 6, kind: input, shape index: {}]
  %s7 = inlined_call_operand.vmem [shape: bf16[128,1024], index: 7, kind: input, shape index: {}]
  %s8 = inlined_call_operand.vmem [shape: f32[1,1024], index: 8, kind: input, shape index: {}]
  %s9 = inlined_call_operand.vmem [shape: f32[1,1024], index: 9, kind: input, shape index: {}]
  %s10 = inlined_call_operand.vmem [shape: f32[2,1,1024], index: 10, kind: output, shape index: {}]
  %s11 = sld [smem:[#allocation0]]
  $region77: #{pointnet_tokenizer_forward.2} parent=0
    _
  %s13 = ssub.s32 1, %s11
  %s14 = scalar_select 0, %s13, %s11
  loop: start=0, step=1, limit=8
  $region2: #{pointnet_tokenizer_forward.2} parent=0 // loop_pre_header
    _
  $region3: #{pointnet_tokenizer_forward.2} parent=0 // loop_header
    %s16 = sphi 0, %s20
    %p17 = scmp.ge.s32.totalorder %s16, 8
    %s23 = sphi 0, %s35
    %s24 = sphi 0, %s31
    %s25 = sphi 0, %s23
    %s26 = sphi 0, %s24
    %s27 = sphi 0, %s25
    %s28 = sphi 0, %s26
    %s40 = sphi 0, %s42
    %s43 = sphi 0, %s40
    %s44 = sphi 0, %s43
    %s60 = sphi 0, %s44
    %s64 = sphi 0, %s64
    %s66 = sphi 0, %s64
    %s67 = sphi 0, %s66
    %s81 = sphi 0, %s67
    %s85 = sphi 0, %s85
    %s87 = sphi 0, %s85
    %s88 = sphi 0, %s87
    %s102 = sphi 0, %s88
    %s106 = sphi 0, %s106
    %s108 = sphi 0, %s106
    %s109 = sphi 0, %s108
    %s123 = sphi 0, %s109
    %s127 = sphi 0, %s127
    %s129 = sphi 0, %s127
    %s130 = sphi 0, %s129
    %s144 = sphi 0, %s130
    %s148 = sphi 0, %s148
    %s150 = sphi 0, %s148
    %s151 = sphi 0, %s150
    %s165 = sphi 0, %s151
    %s169 = sphi 0, %s169
    %s171 = sphi 0, %s169
    %s172 = sphi 0, %s171
    %s186 = sphi 0, %s172
    %s190 = sphi 0, %s190
    %s192 = sphi 0, %s190
    %s193 = sphi 0, %s192
    %s207 = sphi 0, %s193
    %s211 = sphi 0, %s211
    %s213 = sphi 0, %s211
    %s214 = sphi 0, %s213
    %s228 = sphi 0, %s214
    %s232 = sphi 0, %s232
    %s234 = sphi 0, %s232
    %s235 = sphi 0, %s234
    %s249 = sphi 0, %s235
    %s255 = sphi 0, %s257
    %s258 = sphi 0, %s255
    %s259 = sphi 0, %s258
    %s275 = sphi 0, %s259
  $region4: #{pointnet_tokenizer_forward.2} parent=0 // loop_header_branch
    %19 = sbr.rel (%p17) target = $region8
  $region5: #{pointnet_tokenizer_forward.2} parent=0 // loop_body
    %s21 = ssub.s32 %s16, 1
    %s22 = ssub.s32 %s16, 2
    %s29 = sadd.s32 1, %s24
    %p30 = scmp.ge.s32.totalorder %s29, 3
    %s31 = scalar_select %p30, 0, %s29
    %s32 = sadd.s32 1, %s23
    %s33 = scalar_select %p30, %s32, %s23
    %p34 = scmp.ge.s32.totalorder %s33, 2
    %s35 = scalar_select %p34, 0, %s33
    %s36 = ssub.s32 %s23, %s35
    %s37 = ssub.s32 %s24, %s31
    %s38 = sor.u32 %s36, %s37
    %p39 = scmp.eq.s32.totalorder %s38, 0
    %s41 = sadd.s32 %s40, 1
    %s42 = scalar_select %p39, %s40, %s41
    %p45 = pneg %p39
    %p46 = scmp.eq.s32.totalorder %s16, 5
    %p47 = por %p45, %p46
    %p48 = scmp.ne.s32.totalorder %s40, %s43
    %p49 = scmp.eq.s32.totalorder %s16, 0
    %p50 = por %p48, %p49
    %p51 = scmp.ne.s32.totalorder %s40, %s43
    %p52 = scmp.eq.s32.totalorder %s21, 5
    %p53 = por %p51, %p52
    %p54 = scmp.ne.s32.totalorder %s43, %s44
    %p55 = scmp.eq.s32.totalorder %s21, 0
    %p56 = por %p54, %p55
    %p57 = scmp.ne.s32.totalorder %s43, %s44
    %p58 = scmp.eq.s32.totalorder %s22, 5
    %p59 = por %p57, %p58
    %p61 = scmp.ne.s32.totalorder %s44, %s60
    %p62 = scmp.eq.s32.totalorder %s22, 0
    %p63 = por %p61, %p62
    %s65 = sadd.s32 %s64, 1
    %p68 = scmp.eq.s32.totalorder %s16, 5
    %p69 = scmp.ne.s32.totalorder %s64, %s66
    %p70 = scmp.eq.s32.totalorder %s16, 0
    %p71 = por %p69, %p70
    %p72 = scmp.ne.s32.totalorder %s64, %s66
    %p73 = scmp.eq.s32.totalorder %s21, 5
    %p74 = por %p72, %p73
    %p75 = scmp.ne.s32.totalorder %s66, %s67
    %p76 = scmp.eq.s32.totalorder %s21, 0
    %p77 = por %p75, %p76
    %p78 = scmp.ne.s32.totalorder %s66, %s67
    %p79 = scmp.eq.s32.totalorder %s22, 5
    %p80 = por %p78, %p79
    %p82 = scmp.ne.s32.totalorder %s67, %s81
    %p83 = scmp.eq.s32.totalorder %s22, 0
    %p84 = por %p82, %p83
    %s86 = sadd.s32 %s85, 1
    %p89 = scmp.eq.s32.totalorder %s16, 5
    %p90 = scmp.ne.s32.totalorder %s85, %s87
    %p91 = scmp.eq.s32.totalorder %s16, 0
    %p92 = por %p90, %p91
    %p93 = scmp.ne.s32.totalorder %s85, %s87
    %p94 = scmp.eq.s32.totalorder %s21, 5
    %p95 = por %p93, %p94
    %p96 = scmp.ne.s32.totalorder %s87, %s88
    %p97 = scmp.eq.s32.totalorder %s21, 0
    %p98 = por %p96, %p97
    %p99 = scmp.ne.s32.totalorder %s87, %s88
    %p100 = scmp.eq.s32.totalorder %s22, 5
    %p101 = por %p99, %p100
    %p103 = scmp.ne.s32.totalorder %s88, %s102
    %p104 = scmp.eq.s32.totalorder %s22, 0
    %p105 = por %p103, %p104
    %s107 = sadd.s32 %s106, 1
    %p110 = scmp.eq.s32.totalorder %s16, 5
    %p111 = scmp.ne.s32.totalorder %s106, %s108
    %p112 = scmp.eq.s32.totalorder %s16, 0
    %p113 = por %p111, %p112
    %p114 = scmp.ne.s32.totalorder %s106, %s108
    %p115 = scmp.eq.s32.totalorder %s21, 5
    %p116 = por %p114, %p115
    %p117 = scmp.ne.s32.totalorder %s108, %s109
    %p118 = scmp.eq.s32.totalorder %s21, 0
    %p119 = por %p117, %p118
    %p120 = scmp.ne.s32.totalorder %s108, %s109
    %p121 = scmp.eq.s32.totalorder %s22, 5
    %p122 = por %p120, %p121
    %p124 = scmp.ne.s32.totalorder %s109, %s123
    %p125 = scmp.eq.s32.totalorder %s22, 0
    %p126 = por %p124, %p125
    %s128 = sadd.s32 %s127, 1
    %p131 = scmp.eq.s32.totalorder %s16, 5
    %p132 = scmp.ne.s32.totalorder %s127, %s129
    %p133 = scmp.eq.s32.totalorder %s16, 0
    %p134 = por %p132, %p133
    %p135 = scmp.ne.s32.totalorder %s127, %s129
    %p136 = scmp.eq.s32.totalorder %s21, 5
    %p137 = por %p135, %p136
    %p138 = scmp.ne.s32.totalorder %s129, %s130
    %p139 = scmp.eq.s32.totalorder %s21, 0
    %p140 = por %p138, %p139
    %p141 = scmp.ne.s32.totalorder %s129, %s130
    %p142 = scmp.eq.s32.totalorder %s22, 5
    %p143 = por %p141, %p142
    %p145 = scmp.ne.s32.totalorder %s130, %s144
    %p146 = scmp.eq.s32.totalorder %s22, 0
    %p147 = por %p145, %p146
    %s149 = sadd.s32 %s148, 1
    %p152 = scmp.eq.s32.totalorder %s16, 5
    %p153 = scmp.ne.s32.totalorder %s148, %s150
    %p154 = scmp.eq.s32.totalorder %s16, 0
    %p155 = por %p153, %p154
    %p156 = scmp.ne.s32.totalorder %s148, %s150
    %p157 = scmp.eq.s32.totalorder %s21, 5
    %p158 = por %p156, %p157
    %p159 = scmp.ne.s32.totalorder %s150, %s151
    %p160 = scmp.eq.s32.totalorder %s21, 0
    %p161 = por %p159, %p160
    %p162 = scmp.ne.s32.totalorder %s150, %s151
    %p163 = scmp.eq.s32.totalorder %s22, 5
    %p164 = por %p162, %p163
    %p166 = scmp.ne.s32.totalorder %s151, %s165
    %p167 = scmp.eq.s32.totalorder %s22, 0
    %p168 = por %p166, %p167
    %s170 = sadd.s32 %s169, 1
    %p173 = scmp.eq.s32.totalorder %s16, 5
    %p174 = scmp.ne.s32.totalorder %s169, %s171
    %p175 = scmp.eq.s32.totalorder %s16, 0
    %p176 = por %p174, %p175
    %p177 = scmp.ne.s32.totalorder %s169, %s171
    %p178 = scmp.eq.s32.totalorder %s21, 5
    %p179 = por %p177, %p178
    %p180 = scmp.ne.s32.totalorder %s171, %s172
    %p181 = scmp.eq.s32.totalorder %s21, 0
    %p182 = por %p180, %p181
    %p183 = scmp.ne.s32.totalorder %s171, %s172
    %p184 = scmp.eq.s32.totalorder %s22, 5
    %p185 = por %p183, %p184
    %p187 = scmp.ne.s32.totalorder %s172, %s186
    %p188 = scmp.eq.s32.totalorder %s22, 0
    %p189 = por %p187, %p188
    %s191 = sadd.s32 %s190, 1
    %p194 = scmp.eq.s32.totalorder %s16, 5
    %p195 = scmp.ne.s32.totalorder %s190, %s192
    %p196 = scmp.eq.s32.totalorder %s16, 0
    %p197 = por %p195, %p196
    %p198 = scmp.ne.s32.totalorder %s190, %s192
    %p199 = scmp.eq.s32.totalorder %s21, 5
    %p200 = por %p198, %p199
    %p201 = scmp.ne.s32.totalorder %s192, %s193
    %p202 = scmp.eq.s32.totalorder %s21, 0
    %p203 = por %p201, %p202
    %p204 = scmp.ne.s32.totalorder %s192, %s193
    %p205 = scmp.eq.s32.totalorder %s22, 5
    %p206 = por %p204, %p205
    %p208 = scmp.ne.s32.totalorder %s193, %s207
    %p209 = scmp.eq.s32.totalorder %s22, 0
    %p210 = por %p208, %p209
    %s212 = sadd.s32 %s211, 1
    %p215 = scmp.eq.s32.totalorder %s16, 5
    %p216 = scmp.ne.s32.totalorder %s211, %s213
    %p217 = scmp.eq.s32.totalorder %s16, 0
    %p218 = por %p216, %p217
    %p219 = scmp.ne.s32.totalorder %s211, %s213
    %p220 = scmp.eq.s32.totalorder %s21, 5
    %p221 = por %p219, %p220
    %p222 = scmp.ne.s32.totalorder %s213, %s214
    %p223 = scmp.eq.s32.totalorder %s21, 0
    %p224 = por %p222, %p223
    %p225 = scmp.ne.s32.totalorder %s213, %s214
    %p226 = scmp.eq.s32.totalorder %s22, 5
    %p227 = por %p225, %p226
    %p229 = scmp.ne.s32.totalorder %s214, %s228
    %p230 = scmp.eq.s32.totalorder %s22, 0
    %p231 = por %p229, %p230
    %s233 = sadd.s32 %s232, 1
    %p236 = scmp.eq.s32.totalorder %s16, 5
    %p237 = scmp.ne.s32.totalorder %s232, %s234
    %p238 = scmp.eq.s32.totalorder %s16, 0
    %p239 = por %p237, %p238
    %p240 = scmp.ne.s32.totalorder %s232, %s234
    %p241 = scmp.eq.s32.totalorder %s21, 5
    %p242 = por %p240, %p241
    %p243 = scmp.ne.s32.totalorder %s234, %s235
    %p244 = scmp.eq.s32.totalorder %s21, 0
    %p245 = por %p243, %p244
    %p246 = scmp.ne.s32.totalorder %s234, %s235
    %p247 = scmp.eq.s32.totalorder %s22, 5
    %p248 = por %p246, %p247
    %p250 = scmp.ne.s32.totalorder %s235, %s249
    %p251 = scmp.eq.s32.totalorder %s22, 0
    %p252 = por %p250, %p251
    %s253 = ssub.s32 %s23, %s35
    %p254 = scmp.eq.s32.totalorder %s253, 0
    %s256 = sadd.s32 %s255, 1
    %s257 = scalar_select %p254, %s255, %s256
    %p260 = pneg %p254
    %p261 = scmp.eq.s32.totalorder %s16, 5
    %p262 = por %p260, %p261
    %p263 = scmp.ne.s32.totalorder %s255, %s258
    %p264 = scmp.eq.s32.totalorder %s16, 0
    %p265 = por %p263, %p264
    %p266 = scmp.ne.s32.totalorder %s255, %s258
    %p267 = scmp.eq.s32.totalorder %s21, 5
    %p268 = por %p266, %p267
    %p269 = scmp.ne.s32.totalorder %s258, %s259
    %p270 = scmp.eq.s32.totalorder %s21, 0
    %p271 = por %p269, %p270
    %p272 = scmp.ne.s32.totalorder %s258, %s259
    %p273 = scmp.eq.s32.totalorder %s22, 5
    %p274 = por %p272, %p273
    %p276 = scmp.ne.s32.totalorder %s259, %s275
    %p277 = scmp.eq.s32.totalorder %s22, 0
    %p278 = por %p276, %p277
    %p279 = scmp.le.s32.totalorder 1, %s16
    %p280 = scmp.lt.s32.totalorder %s16, 7
    %p281 = pnand %p279, %p280
    %p282 = pneg %p281
    // Predicated region
    $region9: #{pointnet_tokenizer_forward.2} parent=5 // pred_check
      _
    $region10: #{pointnet_tokenizer_forward.2} parent=5 // pred_check_branch
      %284 = sbr.rel (%p281) target = $region12
    $region11: #{pointnet_tokenizer_forward.2} parent=5 // pred_region
      %s285 = ssub.s32 %s16, 1
      // Predicated region
      $region13: #{pointnet_tokenizer_forward.2} parent=11 // pred_check
        %p286 = pneg %p77
      $region14: #{pointnet_tokenizer_forward.2} parent=11 // pred_check_branch
        %288 = sbr.rel (%p286) target = $region16
      $region15: #{pointnet_tokenizer_forward.2} parent=11 // pred_region
        _
      $region16: #{pointnet_tokenizer_forward.2} parent=11 // pred_fallthru
        _
      // Predicated region
      $region17: #{pointnet_tokenizer_forward.2} parent=11 // pred_check
        %p289 = pneg %p98
      $region18: #{pointnet_tokenizer_forward.2} parent=11 // pred_check_branch
        %291 = sbr.rel (%p289) target = $region20
      $region19: #{pointnet_tokenizer_forward.2} parent=11 // pred_region
        _
      $region20: #{pointnet_tokenizer_forward.2} parent=11 // pred_fallthru
        _
      // Predicated region
      $region21: #{pointnet_tokenizer_forward.2} parent=11 // pred_check
        %p292 = pneg %p119
      $region22: #{pointnet_tokenizer_forward.2} parent=11 // pred_check_branch
        %294 = sbr.rel (%p292) target = $region24
      $region23: #{pointnet_tokenizer_forward.2} parent=11 // pred_region
        _
      $region24: #{pointnet_tokenizer_forward.2} parent=11 // pred_fallthru
        _
      // Predicated region
      $region25: #{pointnet_tokenizer_forward.2} parent=11 // pred_check
        %p295 = pneg %p140
      $region26: #{pointnet_tokenizer_forward.2} parent=11 // pred_check_branch
        %297 = sbr.rel (%p295) target = $region28
      $region27: #{pointnet_tokenizer_forward.2} parent=11 // pred_region
        _
      $region28: #{pointnet_tokenizer_forward.2} parent=11 // pred_fallthru
        _
      // Predicated region
      $region29: #{pointnet_tokenizer_forward.2} parent=11 // pred_check
        %p298 = pneg %p161
      $region30: #{pointnet_tokenizer_forward.2} parent=11 // pred_check_branch
        %300 = sbr.rel (%p298) target = $region32
      $region31: #{pointnet_tokenizer_forward.2} parent=11 // pred_region
        _
      $region32: #{pointnet_tokenizer_forward.2} parent=11 // pred_fallthru
        _
      // Predicated region
      $region33: #{pointnet_tokenizer_forward.2} parent=11 // pred_check
        %p301 = pneg %p182
      $region34: #{pointnet_tokenizer_forward.2} parent=11 // pred_check_branch
        %303 = sbr.rel (%p301) target = $region36
      $region35: #{pointnet_tokenizer_forward.2} parent=11 // pred_region
        _
      $region36: #{pointnet_tokenizer_forward.2} parent=11 // pred_fallthru
        _
      // Predicated region
      $region37: #{pointnet_tokenizer_forward.2} parent=11 // pred_check
        %p304 = pneg %p203
      $region38: #{pointnet_tokenizer_forward.2} parent=11 // pred_check_branch
        %306 = sbr.rel (%p304) target = $region40
      $region39: #{pointnet_tokenizer_forward.2} parent=11 // pred_region
        _
      $region40: #{pointnet_tokenizer_forward.2} parent=11 // pred_fallthru
        _
      // Predicated region
      $region41: #{pointnet_tokenizer_forward.2} parent=11 // pred_check
        %p307 = pneg %p224
      $region42: #{pointnet_tokenizer_forward.2} parent=11 // pred_check_branch
        %309 = sbr.rel (%p307) target = $region44
      $region43: #{pointnet_tokenizer_forward.2} parent=11 // pred_region
        _
      $region44: #{pointnet_tokenizer_forward.2} parent=11 // pred_fallthru
        _
      // Predicated region
      $region45: #{pointnet_tokenizer_forward.2} parent=11 // pred_check
        %p310 = pneg %p245
      $region46: #{pointnet_tokenizer_forward.2} parent=11 // pred_check_branch
        %312 = sbr.rel (%p310) target = $region48
      $region47: #{pointnet_tokenizer_forward.2} parent=11 // pred_region
        _
      $region48: #{pointnet_tokenizer_forward.2} parent=11 // pred_fallthru
        _
    $region12: #{pointnet_tokenizer_forward.2} parent=5 // pred_fallthru
      _
    %p313 = scmp.lt.s32.totalorder %s16, 6
    // Predicated region
    $region49: #{pointnet_tokenizer_forward.2} parent=5 // pred_check
      %p314 = pneg %p313
    $region50: #{pointnet_tokenizer_forward.2} parent=5 // pred_check_branch
      %316 = sbr.rel (%p314) target = $region52
    $region51: #{pointnet_tokenizer_forward.2} parent=5 // pred_region
      // Predicated region
      $region53: #{pointnet_tokenizer_forward.2} parent=51 // pred_check
        %p317 = pneg %p50
      $region54: #{pointnet_tokenizer_forward.2} parent=51 // pred_check_branch
        %319 = sbr.rel (%p317) target = $region56
      $region55: #{pointnet_tokenizer_forward.2} parent=51 // pred_region
        %s320 = smul.u32 32, %s24
        %p321 = scmp.lt.s32.totalorder %s23, 1
        %s322 = scalar_select %p321, %s23, 1
        %p323 = scmp.lt.s32.totalorder %s320, 95
        %s324 = scalar_select %p323, %s320, 95
        %s325 = smul.addr %s322, 96
        %s326 = sadd.s32 %s324, %s325
        %s327 = smul.addr %s326, 4
        %s328 = scalar_lea.vmem %s0, %s327
        %s329 = smul.u32 32, %s24
      $region56: #{pointnet_tokenizer_forward.2} parent=51 // pred_fallthru
        _
    $region52: #{pointnet_tokenizer_forward.2} parent=5 // pred_fallthru
      _
    %p330 = scmp.le.s32.totalorder 1, %s16
    %p331 = scmp.lt.s32.totalorder %s16, 7
    %p332 = pnand %p330, %p331
    %p333 = pneg %p332
    // Predicated region
    $region57: #{pointnet_tokenizer_forward.2} parent=5 // pred_check
      _
    $region58: #{pointnet_tokenizer_forward.2} parent=5 // pred_check_branch
      %335 = sbr.rel (%p332) target = $region60
    $region59: #{pointnet_tokenizer_forward.2} parent=5 // pred_region
      %s336 = ssub.s32 %s16, 1
      %s337 = smul.u32 32, %s26
      %p338 = scmp.lt.s32.totalorder %s25, 1
      %s339 = scalar_select %p338, %s25, 1
      %p340 = scmp.lt.s32.totalorder %s337, 95
      %s341 = scalar_select %p340, %s337, 95
      %s342 = smul.addr %s339, 96
      %s343 = sadd.s32 %s341, %s342
      %s344 = smul.addr %s343, 4
      %s345 = scalar_lea.vmem %s0, %s344
      %p346 = pneg %p56
      %p347 = pneg %p53
      %p348 = pneg %p77
      %p349 = pneg %p74
      %p350 = pneg %p98
      %p351 = pneg %p95
      %p352 = pneg %p119
      %p353 = pneg %p116
      %p354 = pneg %p140
      %p355 = pneg %p137
      %p356 = pneg %p161
      %p357 = pneg %p158
      %p358 = pneg %p182
      %p359 = pneg %p179
      %p360 = pneg %p203
      %p361 = pneg %p200
      %p362 = pneg %p224
      %p363 = pneg %p221
      %p364 = pneg %p245
      %p365 = pneg %p242
      %p366 = pneg %p271
      %p367 = pneg %p268
      %p368 = scmp.lt.s32.totalorder %s25, 1
      %s369 = scalar_select %p368, %s25, 1
      %s370 = smul.addr %s369, 8
      %s371 = scalar_lea.vmem %s10, %s370
      %s372 = smul.u32 32, %s26
      %p373 = scmp.lt.s32.totalorder %s25, 1
      %s374 = scalar_select %p373, %s25, 1
      %p375 = scmp.lt.s32.totalorder %s372, 95
      %s376 = scalar_select %p375, %s372, 95
      %s377 = smul.addr %s374, 96
      %s378 = sadd.s32 %s376, %s377
      %s379 = smul.addr %s378, 4
      %s380 = scalar_lea.vmem %s0, %s379
      %s381 = smul.u32 32, %s26
      %p382 = scmp.lt.s32.totalorder %s25, 1
      %s383 = scalar_select %p382, %s25, 1
      %s384 = smul.addr %s383, 8
      %s385 = scalar_lea.vmem %s10, %s384
      %v387 = vld [vmem:[%s380] sm:$0xf]
      %v388 = vld [vmem:[%s380 + $0x4] sm:$0xf]
      %v389 = vld [vmem:[%s380 + $0x8] sm:$0xf]
      %v390 = vld [vmem:[%s380 + $0xc] sm:$0xf]
      %v391 = vld [vmem:[%s380 + $0x10] sm:$0xf]
      %v392 = vld [vmem:[%s380 + $0x14] sm:$0xf]
      %v393 = vld [vmem:[%s380 + $0x18] sm:$0xf]
      %v394 = vld [vmem:[%s380 + $0x1c] sm:$0xf]
      %v395 = vld [vmem:[%s380 + $0x20] sm:$0xf]
      %v396 = vld [vmem:[%s380 + $0x24] sm:$0xf]
      %v397 = vld [vmem:[%s380 + $0x28] sm:$0xf]
      %v398 = vld [vmem:[%s380 + $0x2c] sm:$0xf]
      %v399 = vld [vmem:[%s380 + $0x30] sm:$0xf]
      %v400 = vld [vmem:[%s380 + $0x34] sm:$0xf]
      %v401 = vld [vmem:[%s380 + $0x38] sm:$0xf]
      %v402 = vld [vmem:[%s380 + $0x3c] sm:$0xf]
      %v403 = vld [vmem:[%s380 + $0x40] sm:$0xf]
      %v404 = vld [vmem:[%s380 + $0x44] sm:$0xf]
      %v405 = vld [vmem:[%s380 + $0x48] sm:$0xf]
      %v406 = vld [vmem:[%s380 + $0x4c] sm:$0xf]
      %v407 = vld [vmem:[%s380 + $0x50] sm:$0xf]
      %v408 = vld [vmem:[%s380 + $0x54] sm:$0xf]
      %v409 = vld [vmem:[%s380 + $0x58] sm:$0xf]
      %v410 = vld [vmem:[%s380 + $0x5c] sm:$0xf]
      %v411 = vld [vmem:[%s380 + $0x60] sm:$0xf]
      %v412 = vld [vmem:[%s380 + $0x64] sm:$0xf]
      %v413 = vld [vmem:[%s380 + $0x68] sm:$0xf]
      %v414 = vld [vmem:[%s380 + $0x6c] sm:$0xf]
      %v415 = vld [vmem:[%s380 + $0x70] sm:$0xf]
      %v416 = vld [vmem:[%s380 + $0x74] sm:$0xf]
      %v417 = vld [vmem:[%s380 + $0x78] sm:$0xf]
      %v418 = vld [vmem:[%s380 + $0x7c] sm:$0xf]
      %v419 = vld [vmem:[%s1] sm:$0xf]
      %v420 = vld [vmem:[%s1 + $0x4] sm:$0xf]
      %v421 = vld [vmem:[%s1 + $0x8] sm:$0xf]
      %v422 = vld [vmem:[%s1 + $0xc] sm:$0xf]
      %v423 = vld [vmem:[%s1 + $0x10] sm:$0xf]
      %v424 = vld [vmem:[%s1 + $0x14] sm:$0xf]
      %v425 = vld [vmem:[%s1 + $0x18] sm:$0xf]
      %v426 = vld [vmem:[%s1 + $0x1c] sm:$0xf]
      %v427 = vld [vmem:[%s1 + $0x20] sm:$0xf]
      %v428 = vld [vmem:[%s1 + $0x24] sm:$0xf]
      %v429 = vld [vmem:[%s1 + $0x28] sm:$0xf]
      %v430 = vld [vmem:[%s1 + $0x2c] sm:$0xf]
      %v431 = vld [vmem:[%s1 + $0x30] sm:$0xf]
      %v432 = vld [vmem:[%s1 + $0x34] sm:$0xf]
      %v433 = vld [vmem:[%s1 + $0x38] sm:$0xf]
      %v434 = vld [vmem:[%s1 + $0x3c] sm:$0xf]
      %v467 = vunpack.c.l.b16 %v387
      %v468 = vunpack.c.l.b16 %v388
      %v469 = vunpack.c.l.b16 %v389
      %v470 = vunpack.c.l.b16 %v390
      %v471 = vunpack.c.l.b16 %v391
      %v472 = vunpack.c.l.b16 %v392
      %v473 = vunpack.c.l.b16 %v393
      %v474 = vunpack.c.l.b16 %v394
      %v475 = vunpack.c.l.b16 %v395
      %v476 = vunpack.c.l.b16 %v396
      %v477 = vunpack.c.l.b16 %v397
      %v478 = vunpack.c.l.b16 %v398
      %v479 = vunpack.c.l.b16 %v399
      %v480 = vunpack.c.l.b16 %v400
      %v481 = vunpack.c.l.b16 %v401
      %v482 = vunpack.c.l.b16 %v402
      %v483 = vunpack.c.l.b16 %v403
      %v484 = vunpack.c.l.b16 %v404
      %v485 = vunpack.c.l.b16 %v405
      %v486 = vunpack.c.l.b16 %v406
      %v487 = vunpack.c.l.b16 %v407
      %v488 = vunpack.c.l.b16 %v408
      %v489 = vunpack.c.l.b16 %v409
      %v490 = vunpack.c.l.b16 %v410
      %v491 = vunpack.c.l.b16 %v411
      %v492 = vunpack.c.l.b16 %v412
      %v493 = vunpack.c.l.b16 %v413
      %v494 = vunpack.c.l.b16 %v414
      %v495 = vunpack.c.l.b16 %v415
      %v496 = vunpack.c.l.b16 %v416
      %v497 = vunpack.c.l.b16 %v417
      %v498 = vunpack.c.l.b16 %v418
      %v499 = vpack.c.b16 %v468, %v467
      %v500 = vpack.c.b16 %v470, %v469
      %v501 = vpack.c.b16 %v472, %v471
      %v502 = vpack.c.b16 %v474, %v473
      %v503 = vpack.c.b16 %v476, %v475
      %v504 = vpack.c.b16 %v478, %v477
      %v505 = vpack.c.b16 %v480, %v479
      %v506 = vpack.c.b16 %v482, %v481
      %v507 = vpack.c.b16 %v484, %v483
      %v508 = vpack.c.b16 %v486, %v485
      %v509 = vpack.c.b16 %v488, %v487
      %v510 = vpack.c.b16 %v490, %v489
      %v511 = vpack.c.b16 %v492, %v491
      %v512 = vpack.c.b16 %v494, %v493
      %v513 = vpack.c.b16 %v496, %v495
      %v514 = vpack.c.b16 %v498, %v497
      %v547 = vunpack.c.l.b16 %v419
      %v548 = vunpack.c.l.b16 %v420
      %v549 = vunpack.c.l.b16 %v421
      %v550 = vunpack.c.l.b16 %v422
      %v551 = vunpack.c.l.b16 %v423
      %v552 = vunpack.c.l.b16 %v424
      %v553 = vunpack.c.l.b16 %v425
      %v554 = vunpack.c.l.b16 %v426
      %v555 = vunpack.c.l.b16 %v427
      %v556 = vunpack.c.l.b16 %v428
      %v557 = vunpack.c.l.b16 %v429
      %v558 = vunpack.c.l.b16 %v430
      %v559 = vunpack.c.l.b16 %v431
      %v560 = vunpack.c.l.b16 %v432
      %v561 = vunpack.c.l.b16 %v433
      %v562 = vunpack.c.l.b16 %v434
      %v563 = vpack.c.b16 %v548, %v547
      %v564 = vpack.c.b16 %v550, %v549
      %v565 = vpack.c.b16 %v552, %v551
      %v566 = vpack.c.b16 %v554, %v553
      %v567 = vpack.c.b16 %v556, %v555
      %v568 = vpack.c.b16 %v558, %v557
      %v569 = vpack.c.b16 %v560, %v559
      %v570 = vpack.c.b16 %v562, %v561
      %579 = vmatprep.subr.bf16.mxu0 0
      %580 = vmatpush1.bf16.msra.mxu0 %v563
      %581 = vmatprep.subr.bf16.mxu0 0
      %582 = vmatpush1.bf16.msra.mxu0 %v564
      %583 = vmatprep.subr.bf16.mxu0 0
      %584 = vmatpush1.bf16.msra.mxu0 %v565
      %585 = vmatprep.subr.bf16.mxu0 0
      %586 = vmatpush1.bf16.msra.mxu0 %v566
      %587 = vmatprep.subr.bf16.mxu0 0
      %588 = vmatpush1.bf16.msra.mxu0 %v567
      %589 = vmatprep.subr.bf16.mxu0 0
      %590 = vmatpush1.bf16.msra.mxu0 %v568
      %591 = vmatprep.subr.bf16.mxu0 0
      %592 = vmatpush1.bf16.msra.mxu0 %v569
      %593 = vmatprep.subr.bf16.mxu0 0
      %594 = vmatpush1.bf16.msra.mxu0 %v570
      %595 = vmatprep.subr.bf16.mxu0 0
      %596 = vmatpush1.bf16.msra.mxu0 0
      %597 = vmatprep.subr.bf16.mxu0 0
      %598 = vmatpush1.bf16.msra.mxu0 0
      %599 = vmatprep.subr.bf16.mxu0 0
      %600 = vmatpush1.bf16.msra.mxu0 0
      %601 = vmatprep.subr.bf16.mxu0 0
      %602 = vmatpush1.bf16.msra.mxu0 0
      %603 = vmatprep.subr.bf16.mxu0 0
      %604 = vmatpush1.bf16.msra.mxu0 0
      %605 = vmatprep.subr.bf16.mxu0 0
      %606 = vmatpush1.bf16.msra.mxu0 0
      %607 = vmatprep.subr.bf16.mxu0 0
      %608 = vmatpush1.bf16.msra.mxu0 0
      %609 = vmatprep.subr.bf16.mxu0 0
      %610 = vmatpush1.bf16.msra.mxu0 0
      %611 = vmatprep.mubr.bf16.mxu0 0
      %612 = vmatmul.mubr.bf16.gmra.mrb[0].mxu0 %v499
      %v613 = vpop.f32.mrb[0].mxu0
      %v614 = vadd.f32 0.0, %v613
      %v615 = vpop.f32.mrb[0].mxu0
      %v616 = vpop.f32.mrb[0].mxu0
      %v617 = vadd.f32 0.0, %v616
      %v618 = vpop.f32.mrb[0].mxu0
      %619 = vmatprep.mubr.bf16.mxu0 0
      %620 = vmatmul.mubr.bf16.gmra.mrb[0].mxu0 %v500
      %v621 = vpop.f32.mrb[0].mxu0
      %v622 = vadd.f32 0.0, %v621
      %v623 = vpop.f32.mrb[0].mxu0
      %v624 = vpop.f32.mrb[0].mxu0
      %v625 = vadd.f32 0.0, %v624
      %v626 = vpop.f32.mrb[0].mxu0
      %627 = vmatprep.mubr.bf16.mxu0 0
      %628 = vmatmul.mubr.bf16.gmra.mrb[0].mxu0 %v501
      %v629 = vpop.f32.mrb[0].mxu0
      %v630 = vadd.f32 0.0, %v629
      %v631 = vpop.f32.mrb[0].mxu0
      %v632 = vpop.f32.mrb[0].mxu0
      %v633 = vadd.f32 0.0, %v632
      %v634 = vpop.f32.mrb[0].mxu0
      %635 = vmatprep.mubr.bf16.mxu0 0
      %636 = vmatmul.mubr.bf16.gmra.mrb[0].mxu0 %v502
      %v637 = vpop.f32.mrb[0].mxu0
      %v638 = vadd.f32 0.0, %v637
      %v639 = vpop.f32.mrb[0].mxu0
      %v640 = vpop.f32.mrb[0].mxu0
      %v641 = vadd.f32 0.0, %v640
      %v642 = vpop.f32.mrb[0].mxu0
      %643 = vmatprep.mubr.bf16.mxu0 0
      %644 = vmatmul.mubr.bf16.gmra.mrb[0].mxu0 %v503
      %v645 = vpop.f32.mrb[0].mxu0
      %v646 = vadd.f32 0.0, %v645
      %v647 = vpop.f32.mrb[0].mxu0
      %v648 = vpop.f32.mrb[0].mxu0
      %v649 = vadd.f32 0.0, %v648
      %v650 = vpop.f32.mrb[0].mxu0
      %651 = vmatprep.mubr.bf16.mxu0 0
      %652 = vmatmul.mubr.bf16.gmra.mrb[0].mxu0 %v504
      %v653 = vpop.f32.mrb[0].mxu0
      %v654 = vadd.f32 0.0, %v653
      %v655 = vpop.f32.mrb[0].mxu0
      %v656 = vpop.f32.mrb[0].mxu0
      %v657 = vadd.f32 0.0, %v656
      %v658 = vpop.f32.mrb[0].mxu0
      %659 = vmatprep.mubr.bf16.mxu0 0
      %660 = vmatmul.mubr.bf16.gmra.mrb[0].mxu0 %v505
      %v661 = vpop.f32.mrb[0].mxu0
      %v662 = vadd.f32 0.0, %v661
      %v663 = vpop.f32.mrb[0].mxu0
      %v664 = vpop.f32.mrb[0].mxu0
      %v665 = vadd.f32 0.0, %v664
      %v666 = vpop.f32.mrb[0].mxu0
      %667 = vmatprep.mubr.bf16.mxu0 0
      %668 = vmatmul.mubr.bf16.gmra.mrb[0].mxu0 %v506
      %v669 = vpop.f32.mrb[0].mxu0
      %v670 = vadd.f32 0.0, %v669
      %v671 = vpop.f32.mrb[0].mxu0
      %v672 = vpop.f32.mrb[0].mxu0
      %v673 = vadd.f32 0.0, %v672
      %v674 = vpop.f32.mrb[0].mxu0
      %675 = vmatprep.mubr.bf16.mxu0 0
      %676 = vmatmul.mubr.bf16.gmra.mrb[0].mxu0 %v507
      %v677 = vpop.f32.mrb[0].mxu0
      %v678 = vadd.f32 0.0, %v677
      %v679 = vpop.f32.mrb[0].mxu0
      %v680 = vpop.f32.mrb[0].mxu0
      %v681 = vadd.f32 0.0, %v680
      %v682 = vpop.f32.mrb[0].mxu0
      %683 = vmatprep.mubr.bf16.mxu0 0
      %684 = vmatmul.mubr.bf16.gmra.mrb[0].mxu0 %v508
      %v685 = vpop.f32.mrb[0].mxu0
      %v686 = vadd.f32 0.0, %v685
      %v687 = vpop.f32.mrb[0].mxu0
      %v688 = vpop.f32.mrb[0].mxu0
      %v689 = vadd.f32 0.0, %v688
      %v690 = vpop.f32.mrb[0].mxu0
      %691 = vmatprep.mubr.bf16.mxu0 0
      %692 = vmatmul.mubr.bf16.gmra.mrb[0].mxu0 %v509
      %v693 = vpop.f32.mrb[0].mxu0
      %v694 = vadd.f32 0.0, %v693
      %v695 = vpop.f32.mrb[0].mxu0
      %v696 = vpop.f32.mrb[0].mxu0
      %v697 = vadd.f32 0.0, %v696
      %v698 = vpop.f32.mrb[0].mxu0
      %699 = vmatprep.mubr.bf16.mxu0 0
      %700 = vmatmul.mubr.bf16.gmra.mrb[0].mxu0 %v510
      %v701 = vpop.f32.mrb[0].mxu0
      %v702 = vadd.f32 0.0, %v701
      %v703 = vpop.f32.mrb[0].mxu0
      %v704 = vpop.f32.mrb[0].mxu0
      %v705 = vadd.f32 0.0, %v704
      %v706 = vpop.f32.mrb[0].mxu0
      %707 = vmatprep.mubr.bf16.mxu0 0
      %708 = vmatmul.mubr.bf16.gmra.mrb[0].mxu0 %v511
      %v709 = vpop.f32.mrb[0].mxu0
      %v710 = vadd.f32 0.0, %v709
      %v711 = vpop.f32.mrb[0].mxu0
      %v712 = vpop.f32.mrb[0].mxu0
      %v713 = vadd.f32 0.0, %v712
      %v714 = vpop.f32.mrb[0].mxu0
      %715 = vmatprep.mubr.bf16.mxu0 0
      %716 = vmatmul.mubr.bf16.gmra.mrb[0].mxu0 %v512
      %v717 = vpop.f32.mrb[0].mxu0
      %v718 = vadd.f32 0.0, %v717
      %v719 = vpop.f32.mrb[0].mxu0
      %v720 = vpop.f32.mrb[0].mxu0
      %v721 = vadd.f32 0.0, %v720
      %v722 = vpop.f32.mrb[0].mxu0
      %723 = vmatprep.mubr.bf16.mxu0 0
      %724 = vmatmul.mubr.bf16.gmra.mrb[0].mxu0 %v513
      %v725 = vpop.f32.mrb[0].mxu0
      %v726 = vadd.f32 0.0, %v725
      %v727 = vpop.f32.mrb[0].mxu0
      %v728 = vpop.f32.mrb[0].mxu0
      %v729 = vadd.f32 0.0, %v728
      %v730 = vpop.f32.mrb[0].mxu0
      %731 = vmatprep.mubr.bf16.mxu0 0
      %732 = vmatmul.mubr.bf16.gmra.mrb[0].mxu0 %v514
      %v733 = vpop.f32.mrb[0].mxu0
      %v734 = vadd.f32 0.0, %v733
      %v735 = vpop.f32.mrb[0].mxu0
      %v736 = vpop.f32.mrb[0].mxu0
      %v737 = vadd.f32 0.0, %v736
      %v738 = vpop.f32.mrb[0].mxu0
      %739 = vdwg.mxu0
      %v740 = vld [vmem:[%s2] sm:$0x1]
      %v742 = vlaneseq
      %v743 = vshrl.u32 %v742, 7
      %v744 = vsub.s32 0, %v743
      %v745 = vrot.slane %v740, %v744
      %v747 = vmul.f32 %v614, %v745
      %v748 = vmul.f32 %v617, %v745
      %v749 = vmul.f32 %v622, %v745
      %v750 = vmul.f32 %v625, %v745
      %v751 = vmul.f32 %v630, %v745
      %v752 = vmul.f32 %v633, %v745
      %v753 = vmul.f32 %v638, %v745
      %v754 = vmul.f32 %v641, %v745
      %v755 = vmul.f32 %v646, %v745
      %v756 = vmul.f32 %v649, %v745
      %v757 = vmul.f32 %v654, %v745
      %v758 = vmul.f32 %v657, %v745
      %v759 = vmul.f32 %v662, %v745
      %v760 = vmul.f32 %v665, %v745
      %v761 = vmul.f32 %v670, %v745
      %v762 = vmul.f32 %v673, %v745
      %v763 = vmul.f32 %v678, %v745
      %v764 = vmul.f32 %v681, %v745
      %v765 = vmul.f32 %v686, %v745
      %v766 = vmul.f32 %v689, %v745
      %v767 = vmul.f32 %v694, %v745
      %v768 = vmul.f32 %v697, %v745
      %v769 = vmul.f32 %v702, %v745
      %v770 = vmul.f32 %v705, %v745
      %v771 = vmul.f32 %v710, %v745
      %v772 = vmul.f32 %v713, %v745
      %v773 = vmul.f32 %v718, %v745
      %v774 = vmul.f32 %v721, %v745
      %v775 = vmul.f32 %v726, %v745
      %v776 = vmul.f32 %v729, %v745
      %v777 = vmul.f32 %v734, %v745
      %v778 = vmul.f32 %v737, %v745
      %v779 = vld [vmem:[%s3] sm:$0x1]
      %v781 = vlaneseq
      %v782 = vshrl.u32 %v781, 7
      %v783 = vsub.s32 0, %v782
      %v784 = vrot.slane %v779, %v783
      %v786 = vadd.f32 %v747, %v784
      %v787 = vadd.f32 %v748, %v784
      %v788 = vadd.f32 %v749, %v784
      %v789 = vadd.f32 %v750, %v784
      %v790 = vadd.f32 %v751, %v784
      %v791 = vadd.f32 %v752, %v784
      %v792 = vadd.f32 %v753, %v784
      %v793 = vadd.f32 %v754, %v784
      %v794 = vadd.f32 %v755, %v784
      %v795 = vadd.f32 %v756, %v784
      %v796 = vadd.f32 %v757, %v784
      %v797 = vadd.f32 %v758, %v784
      %v798 = vadd.f32 %v759, %v784
      %v799 = vadd.f32 %v760, %v784
      %v800 = vadd.f32 %v761, %v784
      %v801 = vadd.f32 %v762, %v784
      %v802 = vadd.f32 %v763, %v784
      %v803 = vadd.f32 %v764, %v784
      %v804 = vadd.f32 %v765, %v784
      %v805 = vadd.f32 %v766, %v784
      %v806 = vadd.f32 %v767, %v784
      %v807 = vadd.f32 %v768, %v784
      %v808 = vadd.f32 %v769, %v784
      %v809 = vadd.f32 %v770, %v784
      %v810 = vadd.f32 %v771, %v784
      %v811 = vadd.f32 %v772, %v784
      %v812 = vadd.f32 %v773, %v784
      %v813 = vadd.f32 %v774, %v784
      %v814 = vadd.f32 %v775, %v784
      %v815 = vadd.f32 %v776, %v784
      %v816 = vadd.f32 %v777, %v784
      %v817 = vadd.f32 %v778, %v784
      %v818 = vmax.f32 %v786, 0.0
      %v819 = vmax.f32 %v787, 0.0
      %v820 = vmax.f32 %v788, 0.0
      %v821 = vmax.f32 %v789, 0.0
      %v822 = vmax.f32 %v790, 0.0
      %v823 = vmax.f32 %v791, 0.0
      %v824 = vmax.f32 %v792, 0.0
      %v825 = vmax.f32 %v793, 0.0
      %v826 = vmax.f32 %v794, 0.0
      %v827 = vmax.f32 %v795, 0.0
      %v828 = vmax.f32 %v796, 0.0
      %v829 = vmax.f32 %v797, 0.0
      %v830 = vmax.f32 %v798, 0.0
      %v831 = vmax.f32 %v799, 0.0
      %v832 = vmax.f32 %v800, 0.0
      %v833 = vmax.f32 %v801, 0.0
      %v834 = vmax.f32 %v802, 0.0
      %v835 = vmax.f32 %v803, 0.0
      %v836 = vmax.f32 %v804, 0.0
      %v837 = vmax.f32 %v805, 0.0
      %v838 = vmax.f32 %v806, 0.0
      %v839 = vmax.f32 %v807, 0.0
      %v840 = vmax.f32 %v808, 0.0
      %v841 = vmax.f32 %v809, 0.0
      %v842 = vmax.f32 %v810, 0.0
      %v843 = vmax.f32 %v811, 0.0
      %v844 = vmax.f32 %v812, 0.0
      %v845 = vmax.f32 %v813, 0.0
      %v846 = vmax.f32 %v814, 0.0
      %v847 = vmax.f32 %v815, 0.0
      %v848 = vmax.f32 %v816, 0.0
      %v849 = vmax.f32 %v817, 0.0
      %v850 = vpack.c.bf16 %v819, %v818
      %v851 = vpack.c.bf16 %v821, %v820
      %v852 = vpack.c.bf16 %v823, %v822
      %v853 = vpack.c.bf16 %v825, %v824
      %v854 = vpack.c.bf16 %v827, %v826
      %v855 = vpack.c.bf16 %v829, %v828
      %v856 = vpack.c.bf16 %v831, %v830
      %v857 = vpack.c.bf16 %v833, %v832
      %v858 = vpack.c.bf16 %v835, %v834
      %v859 = vpack.c.bf16 %v837, %v836
      %v860 = vpack.c.bf16 %v839, %v838
      %v861 = vpack.c.bf16 %v841, %v840
      %v862 = vpack.c.bf16 %v843, %v842
      %v863 = vpack.c.bf16 %v845, %v844
      %v864 = vpack.c.bf16 %v847, %v846
      %v865 = vpack.c.bf16 %v849, %v848
      %v866 = vld [vmem:[%s4] sm:$0xf]
      %v867 = vld [vmem:[%s4 + $0x4] sm:$0xf]
      %v868 = vld [vmem:[%s4 + $0x8] sm:$0xf]
      %v869 = vld [vmem:[%s4 + $0xc] sm:$0xf]
      %v870 = vld [vmem:[%s4 + $0x10] sm:$0xf]
      %v871 = vld [vmem:[%s4 + $0x14] sm:$0xf]
      %v872 = vld [vmem:[%s4 + $0x18] sm:$0xf]
      %v873 = vld [vmem:[%s4 + $0x1c] sm:$0xf]
      %v874 = vld [vmem:[%s4 + $0x20] sm:$0xf]
      %v875 = vld [vmem:[%s4 + $0x24] sm:$0xf]
      %v876 = vld [vmem:[%s4 + $0x28] sm:$0xf]
      %v877 = vld [vmem:[%s4 + $0x2c] sm:$0xf]
      %v878 = vld [vmem:[%s4 + $0x30] sm:$0xf]
      %v879 = vld [vmem:[%s4 + $0x34] sm:$0xf]
      %v880 = vld [vmem:[%s4 + $0x38] sm:$0xf]
      %v881 = vld [vmem:[%s4 + $0x3c] sm:$0xf]
      %v898 = vunpack.c.l.b16 %v866
      %v899 = vunpack.c.l.b16 %v867
      %v900 = vunpack.c.l.b16 %v868
      %v901 = vunpack.c.l.b16 %v869
      %v902 = vunpack.c.l.b16 %v870
      %v903 = vunpack.c.l.b16 %v871
      %v904 = vunpack.c.l.b16 %v872
      %v905 = vunpack.c.l.b16 %v873
      %v906 = vunpack.c.l.b16 %v874
      %v907 = vunpack.c.l.b16 %v875
      %v908 = vunpack.c.l.b16 %v876
      %v909 = vunpack.c.l.b16 %v877
      %v910 = vunpack.c.l.b16 %v878
      %v911 = vunpack.c.l.b16 %v879
      %v912 = vunpack.c.l.b16 %v880
      %v913 = vunpack.c.l.b16 %v881
      %v914 = vpack.c.b16 %v899, %v898
      %v915 = vpack.c.b16 %v901, %v900
      %v916 = vpack.c.b16 %v903, %v902
      %v917 = vpack.c.b16 %v905, %v904
      %v918 = vpack.c.b16 %v907, %v906
      %v919 = vpack.c.b16 %v909, %v908
      %v920 = vpack.c.b16 %v911, %v910
      %v921 = vpack.c.b16 %v913, %v912
      %930 = vmatprep.subr.bf16.mxu0 0
      %931 = vmatpush1.bf16.msra.mxu0 %v914
      %932 = vmatprep.subr.bf16.mxu0 0
      %933 = vmatpush1.bf16.msra.mxu0 %v915
      %934 = vmatprep.subr.bf16.mxu0 0
      %935 = vmatpush1.bf16.msra.mxu0 %v916
      %936 = vmatprep.subr.bf16.mxu0 0
      %937 = vmatpush1.bf16.msra.mxu0 %v917
      %938 = vmatprep.subr.bf16.mxu0 0
      %939 = vmatpush1.bf16.msra.mxu0 %v918
      %940 = vmatprep.subr.bf16.mxu0 0
      %941 = vmatpush1.bf16.msra.mxu0 %v919
      %942 = vmatprep.subr.bf16.mxu0 0
      %943 = vmatpush1.bf16.msra.mxu0 %v920
      %944 = vmatprep.subr.bf16.mxu0 0
      %945 = vmatpush1.bf16.msra.mxu0 %v921
      %946 = vmatprep.subr.bf16.mxu0 0
      %947 = vmatpush1.bf16.msra.mxu0 0
      %948 = vmatprep.subr.bf16.mxu0 0
      %949 = vmatpush1.bf16.msra.mxu0 0
      %950 = vmatprep.subr.bf16.mxu0 0
      %951 = vmatpush1.bf16.msra.mxu0 0
      %952 = vmatprep.subr.bf16.mxu0 0
      %953 = vmatpush1.bf16.msra.mxu0 0
      %954 = vmatprep.subr.bf16.mxu0 0
      %955 = vmatpush1.bf16.msra.mxu0 0
      %956 = vmatprep.subr.bf16.mxu0 0
      %957 = vmatpush1.bf16.msra.mxu0 0
      %958 = vmatprep.subr.bf16.mxu0 0
      %959 = vmatpush1.bf16.msra.mxu0 0
      %960 = vmatprep.subr.bf16.mxu0 0
      %961 = vmatpush1.bf16.msra.mxu0 0
      %962 = vmatprep.mubr.bf16.mxu0 0
      %963 = vmatmul.mubr.bf16.gmra.mrb[0].mxu0 %v850
      %v964 = vpop.f32.mrb[0].mxu0
      %v965 = vadd.f32 0.0, %v964
      %v966 = vpop.f32.mrb[0].mxu0
      %v967 = vpop.f32.mrb[0].mxu0
      %v968 = vadd.f32 0.0, %v967
      %v969 = vpop.f32.mrb[0].mxu0
      %970 = vmatprep.mubr.bf16.mxu0 0
      %971 = vmatmul.mubr.bf16.gmra.mrb[0].mxu0 %v851
      %v972 = vpop.f32.mrb[0].mxu0
      %v973 = vadd.f32 0.0, %v972
      %v974 = vpop.f32.mrb[0].mxu0
      %v975 = vpop.f32.mrb[0].mxu0
      %v976 = vadd.f32 0.0, %v975
      %v977 = vpop.f32.mrb[0].mxu0
      %978 = vmatprep.mubr.bf16.mxu0 0
      %979 = vmatmul.mubr.bf16.gmra.mrb[0].mxu0 %v852
      %v980 = vpop.f32.mrb[0].mxu0
      %v981 = vadd.f32 0.0, %v980
      %v982 = vpop.f32.mrb[0].mxu0
      %v983 = vpop.f32.mrb[0].mxu0
      %v984 = vadd.f32 0.0, %v983
      %v985 = vpop.f32.mrb[0].mxu0
      %986 = vmatprep.mubr.bf16.mxu0 0
      %987 = vmatmul.mubr.bf16.gmra.mrb[0].mxu0 %v853
      %v988 = vpop.f32.mrb[0].mxu0
      %v989 = vadd.f32 0.0, %v988
      %v990 = vpop.f32.mrb[0].mxu0
      %v991 = vpop.f32.mrb[0].mxu0
      %v992 = vadd.f32 0.0, %v991
      %v993 = vpop.f32.mrb[0].mxu0
      %994 = vmatprep.mubr.bf16.mxu0 0
      %995 = vmatmul.mubr.bf16.gmra.mrb[0].mxu0 %v854
      %v996 = vpop.f32.mrb[0].mxu0
      %v997 = vadd.f32 0.0, %v996
      %v998 = vpop.f32.mrb[0].mxu0
      %v999 = vpop.f32.mrb[0].mxu0
      %v1000 = vadd.f32 0.0, %v999
      %v1001 = vpop.f32.mrb[0].mxu0
      %1002 = vmatprep.mubr.bf16.mxu0 0
      %1003 = vmatmul.mubr.bf16.gmra.mrb[0].mxu0 %v855
      %v1004 = vpop.f32.mrb[0].mxu0
      %v1005 = vadd.f32 0.0, %v1004
      %v1006 = vpop.f32.mrb[0].mxu0
      %v1007 = vpop.f32.mrb[0].mxu0
      %v1008 = vadd.f32 0.0, %v1007
      %v1009 = vpop.f32.mrb[0].mxu0
      %1010 = vmatprep.mubr.bf16.mxu0 0
      %1011 = vmatmul.mubr.bf16.gmra.mrb[0].mxu0 %v856
      %v1012 = vpop.f32.mrb[0].mxu0
      %v1013 = vadd.f32 0.0, %v1012
      %v1014 = vpop.f32.mrb[0].mxu0
      %v1015 = vpop.f32.mrb[0].mxu0
      %v1016 = vadd.f32 0.0, %v1015
      %v1017 = vpop.f32.mrb[0].mxu0
      %1018 = vmatprep.mubr.bf16.mxu0 0
      %1019 = vmatmul.mubr.bf16.gmra.mrb[0].mxu0 %v857
      %v1020 = vpop.f32.mrb[0].mxu0
      %v1021 = vadd.f32 0.0, %v1020
      %v1022 = vpop.f32.mrb[0].mxu0
      %v1023 = vpop.f32.mrb[0].mxu0
      %v1024 = vadd.f32 0.0, %v1023
      %v1025 = vpop.f32.mrb[0].mxu0
      %1026 = vmatprep.mubr.bf16.mxu0 0
      %1027 = vmatmul.mubr.bf16.gmra.mrb[0].mxu0 %v858
      %v1028 = vpop.f32.mrb[0].mxu0
      %v1029 = vadd.f32 0.0, %v1028
      %v1030 = vpop.f32.mrb[0].mxu0
      %v1031 = vpop.f32.mrb[0].mxu0
      %v1032 = vadd.f32 0.0, %v1031
      %v1033 = vpop.f32.mrb[0].mxu0
      %1034 = vmatprep.mubr.bf16.mxu0 0
      %1035 = vmatmul.mubr.bf16.gmra.mrb[0].mxu0 %v859
      %v1036 = vpop.f32.mrb[0].mxu0
      %v1037 = vadd.f32 0.0, %v1036
      %v1038 = vpop.f32.mrb[0].mxu0
      %v1039 = vpop.f32.mrb[0].mxu0
      %v1040 = vadd.f32 0.0, %v1039
      %v1041 = vpop.f32.mrb[0].mxu0
      %1042 = vmatprep.mubr.bf16.mxu0 0
      %1043 = vmatmul.mubr.bf16.gmra.mrb[0].mxu0 %v860
      %v1044 = vpop.f32.mrb[0].mxu0
      %v1045 = vadd.f32 0.0, %v1044
      %v1046 = vpop.f32.mrb[0].mxu0
      %v1047 = vpop.f32.mrb[0].mxu0
      %v1048 = vadd.f32 0.0, %v1047
      %v1049 = vpop.f32.mrb[0].mxu0
      %1050 = vmatprep.mubr.bf16.mxu0 0
      %1051 = vmatmul.mubr.bf16.gmra.mrb[0].mxu0 %v861
      %v1052 = vpop.f32.mrb[0].mxu0
      %v1053 = vadd.f32 0.0, %v1052
      %v1054 = vpop.f32.mrb[0].mxu0
      %v1055 = vpop.f32.mrb[0].mxu0
      %v1056 = vadd.f32 0.0, %v1055
      %v1057 = vpop.f32.mrb[0].mxu0
      %1058 = vmatprep.mubr.bf16.mxu0 0
      %1059 = vmatmul.mubr.bf16.gmra.mrb[0].mxu0 %v862
      %v1060 = vpop.f32.mrb[0].mxu0
      %v1061 = vadd.f32 0.0, %v1060
      %v1062 = vpop.f32.mrb[0].mxu0
      %v1063 = vpop.f32.mrb[0].mxu0
      %v1064 = vadd.f32 0.0, %v1063
      %v1065 = vpop.f32.mrb[0].mxu0
      %1066 = vmatprep.mubr.bf16.mxu0 0
      %1067 = vmatmul.mubr.bf16.gmra.mrb[0].mxu0 %v863
      %v1068 = vpop.f32.mrb[0].mxu0
      %v1069 = vadd.f32 0.0, %v1068
      %v1070 = vpop.f32.mrb[0].mxu0
      %v1071 = vpop.f32.mrb[0].mxu0
      %v1072 = vadd.f32 0.0, %v1071
      %v1073 = vpop.f32.mrb[0].mxu0
      %1074 = vmatprep.mubr.bf16.mxu0 0
      %1075 = vmatmul.mubr.bf16.gmra.mrb[0].mxu0 %v864
      %v1076 = vpop.f32.mrb[0].mxu0
      %v1077 = vadd.f32 0.0, %v1076
      %v1078 = vpop.f32.mrb[0].mxu0
      %v1079 = vpop.f32.mrb[0].mxu0
      %v1080 = vadd.f32 0.0, %v1079
      %v1081 = vpop.f32.mrb[0].mxu0
      %1082 = vmatprep.mubr.bf16.mxu0 0
      %1083 = vmatmul.mubr.bf16.gmra.mrb[0].mxu0 %v865
      %v1084 = vpop.f32.mrb[0].mxu0
      %v1085 = vadd.f32 0.0, %v1084
      %v1086 = vpop.f32.mrb[0].mxu0
      %v1087 = vpop.f32.mrb[0].mxu0
      %v1088 = vadd.f32 0.0, %v1087
      %v1089 = vpop.f32.mrb[0].mxu0
      %1090 = vdwg.mxu0
      %v1091 = vld [vmem:[%s5] sm:$0x1]
      %v1093 = vlaneseq
      %v1094 = vshrl.u32 %v1093, 7
      %v1095 = vsub.s32 0, %v1094
      %v1096 = vrot.slane %v1091, %v1095
      %v1098 = vmul.f32 %v965, %v1096
      %v1099 = vmul.f32 %v968, %v1096
      %v1100 = vmul.f32 %v973, %v1096
      %v1101 = vmul.f32 %v976, %v1096
      %v1102 = vmul.f32 %v981, %v1096
      %v1103 = vmul.f32 %v984, %v1096
      %v1104 = vmul.f32 %v989, %v1096
      %v1105 = vmul.f32 %v992, %v1096
      %v1106 = vmul.f32 %v997, %v1096
      %v1107 = vmul.f32 %v1000, %v1096
      %v1108 = vmul.f32 %v1005, %v1096
      %v1109 = vmul.f32 %v1008, %v1096
      %v1110 = vmul.f32 %v1013, %v1096
      %v1111 = vmul.f32 %v1016, %v1096
      %v1112 = vmul.f32 %v1021, %v1096
      %v1113 = vmul.f32 %v1024, %v1096
      %v1114 = vmul.f32 %v1029, %v1096
      %v1115 = vmul.f32 %v1032, %v1096
      %v1116 = vmul.f32 %v1037, %v1096
      %v1117 = vmul.f32 %v1040, %v1096
      %v1118 = vmul.f32 %v1045, %v1096
      %v1119 = vmul.f32 %v1048, %v1096
      %v1120 = vmul.f32 %v1053, %v1096
      %v1121 = vmul.f32 %v1056, %v1096
      %v1122 = vmul.f32 %v1061, %v1096
      %v1123 = vmul.f32 %v1064, %v1096
      %v1124 = vmul.f32 %v1069, %v1096
      %v1125 = vmul.f32 %v1072, %v1096
      %v1126 = vmul.f32 %v1077, %v1096
      %v1127 = vmul.f32 %v1080, %v1096
      %v1128 = vmul.f32 %v1085, %v1096
      %v1129 = vmul.f32 %v1088, %v1096
      %v1130 = vld [vmem:[%s6] sm:$0x1]
      %v1132 = vlaneseq
      %v1133 = vshrl.u32 %v1132, 7
      %v1134 = vsub.s32 0, %v1133
      %v1135 = vrot.slane %v1130, %v1134
      %v1137 = vadd.f32 %v1098, %v1135
      %v1138 = vadd.f32 %v1099, %v1135
      %v1139 = vadd.f32 %v1100, %v1135
      %v1140 = vadd.f32 %v1101, %v1135
      %v1141 = vadd.f32 %v1102, %v1135
      %v1142 = vadd.f32 %v1103, %v1135
      %v1143 = vadd.f32 %v1104, %v1135
      %v1144 = vadd.f32 %v1105, %v1135
      %v1145 = vadd.f32 %v1106, %v1135
      %v1146 = vadd.f32 %v1107, %v1135
      %v1147 = vadd.f32 %v1108, %v1135
      %v1148 = vadd.f32 %v1109, %v1135
      %v1149 = vadd.f32 %v1110, %v1135
      %v1150 = vadd.f32 %v1111, %v1135
      %v1151 = vadd.f32 %v1112, %v1135
      %v1152 = vadd.f32 %v1113, %v1135
      %v1153 = vadd.f32 %v1114, %v1135
      %v1154 = vadd.f32 %v1115, %v1135
      %v1155 = vadd.f32 %v1116, %v1135
      %v1156 = vadd.f32 %v1117, %v1135
      %v1157 = vadd.f32 %v1118, %v1135
      %v1158 = vadd.f32 %v1119, %v1135
      %v1159 = vadd.f32 %v1120, %v1135
      %v1160 = vadd.f32 %v1121, %v1135
      %v1161 = vadd.f32 %v1122, %v1135
      %v1162 = vadd.f32 %v1123, %v1135
      %v1163 = vadd.f32 %v1124, %v1135
      %v1164 = vadd.f32 %v1125, %v1135
      %v1165 = vadd.f32 %v1126, %v1135
      %v1166 = vadd.f32 %v1127, %v1135
      %v1167 = vadd.f32 %v1128, %v1135
      %v1168 = vadd.f32 %v1129, %v1135
      %v1169 = vmax.f32 %v1137, 0.0
      %v1170 = vmax.f32 %v1138, 0.0
      %v1171 = vmax.f32 %v1139, 0.0
      %v1172 = vmax.f32 %v1140, 0.0
      %v1173 = vmax.f32 %v1141, 0.0
      %v1174 = vmax.f32 %v1142, 0.0
      %v1175 = vmax.f32 %v1143, 0.0
      %v1176 = vmax.f32 %v1144, 0.0
      %v1177 = vmax.f32 %v1145, 0.0
      %v1178 = vmax.f32 %v1146, 0.0
      %v1179 = vmax.f32 %v1147, 0.0
      %v1180 = vmax.f32 %v1148, 0.0
      %v1181 = vmax.f32 %v1149, 0.0
      %v1182 = vmax.f32 %v1150, 0.0
      %v1183 = vmax.f32 %v1151, 0.0
      %v1184 = vmax.f32 %v1152, 0.0
      %v1185 = vmax.f32 %v1153, 0.0
      %v1186 = vmax.f32 %v1154, 0.0
      %v1187 = vmax.f32 %v1155, 0.0
      %v1188 = vmax.f32 %v1156, 0.0
      %v1189 = vmax.f32 %v1157, 0.0
      %v1190 = vmax.f32 %v1158, 0.0
      %v1191 = vmax.f32 %v1159, 0.0
      %v1192 = vmax.f32 %v1160, 0.0
      %v1193 = vmax.f32 %v1161, 0.0
      %v1194 = vmax.f32 %v1162, 0.0
      %v1195 = vmax.f32 %v1163, 0.0
      %v1196 = vmax.f32 %v1164, 0.0
      %v1197 = vmax.f32 %v1165, 0.0
      %v1198 = vmax.f32 %v1166, 0.0
      %v1199 = vmax.f32 %v1167, 0.0
      %v1200 = vmax.f32 %v1168, 0.0
      %v1201 = vpack.c.bf16 %v1170, %v1169
      %v1202 = vpack.c.bf16 %v1172, %v1171
      %v1203 = vpack.c.bf16 %v1174, %v1173
      %v1204 = vpack.c.bf16 %v1176, %v1175
      %v1205 = vpack.c.bf16 %v1178, %v1177
      %v1206 = vpack.c.bf16 %v1180, %v1179
      %v1207 = vpack.c.bf16 %v1182, %v1181
      %v1208 = vpack.c.bf16 %v1184, %v1183
      %v1209 = vpack.c.bf16 %v1186, %v1185
      %v1210 = vpack.c.bf16 %v1188, %v1187
      %v1211 = vpack.c.bf16 %v1190, %v1189
      %v1212 = vpack.c.bf16 %v1192, %v1191
      %v1213 = vpack.c.bf16 %v1194, %v1193
      %v1214 = vpack.c.bf16 %v1196, %v1195
      %v1215 = vpack.c.bf16 %v1198, %v1197
      %v1216 = vpack.c.bf16 %v1200, %v1199
      %v1217 = vld [vmem:[%s7] sm:$0xff]
      %v1218 = vld [vmem:[%s7 + $0x8] sm:$0xff]
      %v1219 = vld [vmem:[%s7 + $0x10] sm:$0xff]
      %v1220 = vld [vmem:[%s7 + $0x18] sm:$0xff]
      %v1221 = vld [vmem:[%s7 + $0x20] sm:$0xff]
      %v1222 = vld [vmem:[%s7 + $0x28] sm:$0xff]
      %v1223 = vld [vmem:[%s7 + $0x30] sm:$0xff]
      %v1224 = vld [vmem:[%s7 + $0x38] sm:$0xff]
      %v1225 = vld [vmem:[%s7 + $0x40] sm:$0xff]
      %v1226 = vld [vmem:[%s7 + $0x48] sm:$0xff]
      %v1227 = vld [vmem:[%s7 + $0x50] sm:$0xff]
      %v1228 = vld [vmem:[%s7 + $0x58] sm:$0xff]
      %v1229 = vld [vmem:[%s7 + $0x60] sm:$0xff]
      %v1230 = vld [vmem:[%s7 + $0x68] sm:$0xff]
      %v1231 = vld [vmem:[%s7 + $0x70] sm:$0xff]
      %v1232 = vld [vmem:[%s7 + $0x78] sm:$0xff]
      %v1233 = vld [vmem:[%s7 + $0x80] sm:$0xff]
      %v1234 = vld [vmem:[%s7 + $0x88] sm:$0xff]
      %v1235 = vld [vmem:[%s7 + $0x90] sm:$0xff]
      %v1236 = vld [vmem:[%s7 + $0x98] sm:$0xff]
      %v1237 = vld [vmem:[%s7 + $0xa0] sm:$0xff]
      %v1238 = vld [vmem:[%s7 + $0xa8] sm:$0xff]
      %v1239 = vld [vmem:[%s7 + $0xb0] sm:$0xff]
      %v1240 = vld [vmem:[%s7 + $0xb8] sm:$0xff]
      %v1241 = vld [vmem:[%s7 + $0xc0] sm:$0xff]
      %v1242 = vld [vmem:[%s7 + $0xc8] sm:$0xff]
      %v1243 = vld [vmem:[%s7 + $0xd0] sm:$0xff]
      %v1244 = vld [vmem:[%s7 + $0xd8] sm:$0xff]
      %v1245 = vld [vmem:[%s7 + $0xe0] sm:$0xff]
      %v1246 = vld [vmem:[%s7 + $0xe8] sm:$0xff]
      %v1247 = vld [vmem:[%s7 + $0xf0] sm:$0xff]
      %v1248 = vld [vmem:[%s7 + $0xf8] sm:$0xff]
      %v1249 = vld [vmem:[%s7 + $0x100] sm:$0xff]
      %v1250 = vld [vmem:[%s7 + $0x108] sm:$0xff]
      %v1251 = vld [vmem:[%s7 + $0x110] sm:$0xff]
      %v1252 = vld [vmem:[%s7 + $0x118] sm:$0xff]
      %v1253 = vld [vmem:[%s7 + $0x120] sm:$0xff]
      %v1254 = vld [vmem:[%s7 + $0x128] sm:$0xff]
      %v1255 = vld [vmem:[%s7 + $0x130] sm:$0xff]
      %v1256 = vld [vmem:[%s7 + $0x138] sm:$0xff]
      %v1257 = vld [vmem:[%s7 + $0x140] sm:$0xff]
      %v1258 = vld [vmem:[%s7 + $0x148] sm:$0xff]
      %v1259 = vld [vmem:[%s7 + $0x150] sm:$0xff]
      %v1260 = vld [vmem:[%s7 + $0x158] sm:$0xff]
      %v1261 = vld [vmem:[%s7 + $0x160] sm:$0xff]
      %v1262 = vld [vmem:[%s7 + $0x168] sm:$0xff]
      %v1263 = vld [vmem:[%s7 + $0x170] sm:$0xff]
      %v1264 = vld [vmem:[%s7 + $0x178] sm:$0xff]
      %v1265 = vld [vmem:[%s7 + $0x180] sm:$0xff]
      %v1266 = vld [vmem:[%s7 + $0x188] sm:$0xff]
      %v1267 = vld [vmem:[%s7 + $0x190] sm:$0xff]
      %v1268 = vld [vmem:[%s7 + $0x198] sm:$0xff]
      %v1269 = vld [vmem:[%s7 + $0x1a0] sm:$0xff]
      %v1270 = vld [vmem:[%s7 + $0x1a8] sm:$0xff]
      %v1271 = vld [vmem:[%s7 + $0x1b0] sm:$0xff]
      %v1272 = vld [vmem:[%s7 + $0x1b8] sm:$0xff]
      %v1273 = vld [vmem:[%s7 + $0x1c0] sm:$0xff]
      %v1274 = vld [vmem:[%s7 + $0x1c8] sm:$0xff]
      %v1275 = vld [vmem:[%s7 + $0x1d0] sm:$0xff]
      %v1276 = vld [vmem:[%s7 + $0x1d8] sm:$0xff]
      %v1277 = vld [vmem:[%s7 + $0x1e0] sm:$0xff]
      %v1278 = vld [vmem:[%s7 + $0x1e8] sm:$0xff]
      %v1279 = vld [vmem:[%s7 + $0x1f0] sm:$0xff]
      %v1280 = vld [vmem:[%s7 + $0x1f8] sm:$0xff]
      %v1345 = vunpack.c.l.b16 %v1217
      %v1346 = vunpack.c.h.b16 %v1217
      %v1347 = vunpack.c.l.b16 %v1218
      %v1348 = vunpack.c.h.b16 %v1218
      %v1349 = vunpack.c.l.b16 %v1219
      %v1350 = vunpack.c.h.b16 %v1219
      %v1351 = vunpack.c.l.b16 %v1220
      %v1352 = vunpack.c.h.b16 %v1220
      %v1353 = vunpack.c.l.b16 %v1221
      %v1354 = vunpack.c.h.b16 %v1221
      %v1355 = vunpack.c.l.b16 %v1222
      %v1356 = vunpack.c.h.b16 %v1222
      %v1357 = vunpack.c.l.b16 %v1223
      %v1358 = vunpack.c.h.b16 %v1223
      %v1359 = vunpack.c.l.b16 %v1224
      %v1360 = vunpack.c.h.b16 %v1224
      %v1361 = vunpack.c.l.b16 %v1225
      %v1362 = vunpack.c.h.b16 %v1225
      %v1363 = vunpack.c.l.b16 %v1226
      %v1364 = vunpack.c.h.b16 %v1226
      %v1365 = vunpack.c.l.b16 %v1227
      %v1366 = vunpack.c.h.b16 %v1227
      %v1367 = vunpack.c.l.b16 %v1228
      %v1368 = vunpack.c.h.b16 %v1228
      %v1369 = vunpack.c.l.b16 %v1229
      %v1370 = vunpack.c.h.b16 %v1229
      %v1371 = vunpack.c.l.b16 %v1230
      %v1372 = vunpack.c.h.b16 %v1230
      %v1373 = vunpack.c.l.b16 %v1231
      %v1374 = vunpack.c.h.b16 %v1231
      %v1375 = vunpack.c.l.b16 %v1232
      %v1376 = vunpack.c.h.b16 %v1232
      %v1377 = vunpack.c.l.b16 %v1233
      %v1378 = vunpack.c.h.b16 %v1233
      %v1379 = vunpack.c.l.b16 %v1234
      %v1380 = vunpack.c.h.b16 %v1234
      %v1381 = vunpack.c.l.b16 %v1235
      %v1382 = vunpack.c.h.b16 %v1235
      %v1383 = vunpack.c.l.b16 %v1236
      %v1384 = vunpack.c.h.b16 %v1236
      %v1385 = vunpack.c.l.b16 %v1237
      %v1386 = vunpack.c.h.b16 %v1237
      %v1387 = vunpack.c.l.b16 %v1238
      %v1388 = vunpack.c.h.b16 %v1238
      %v1389 = vunpack.c.l.b16 %v1239
      %v1390 = vunpack.c.h.b16 %v1239
      %v1391 = vunpack.c.l.b16 %v1240
      %v1392 = vunpack.c.h.b16 %v1240
      %v1393 = vunpack.c.l.b16 %v1241
      %v1394 = vunpack.c.h.b16 %v1241
      %v1395 = vunpack.c.l.b16 %v1242
      %v1396 = vunpack.c.h.b16 %v1242
      %v1397 = vunpack.c.l.b16 %v1243
      %v1398 = vunpack.c.h.b16 %v1243
      %v1399 = vunpack.c.l.b16 %v1244
      %v1400 = vunpack.c.h.b16 %v1244
      %v1401 = vunpack.c.l.b16 %v1245
      %v1402 = vunpack.c.h.b16 %v1245
      %v1403 = vunpack.c.l.b16 %v1246
      %v1404 = vunpack.c.h.b16 %v1246
      %v1405 = vunpack.c.l.b16 %v1247
      %v1406 = vunpack.c.h.b16 %v1247
      %v1407 = vunpack.c.l.b16 %v1248
      %v1408 = vunpack.c.h.b16 %v1248
      %v1409 = vunpack.c.l.b16 %v1249
      %v1410 = vunpack.c.h.b16 %v1249
      %v1411 = vunpack.c.l.b16 %v1250
      %v1412 = vunpack.c.h.b16 %v1250
      %v1413 = vunpack.c.l.b16 %v1251
      %v1414 = vunpack.c.h.b16 %v1251
      %v1415 = vunpack.c.l.b16 %v1252
      %v1416 = vunpack.c.h.b16 %v1252
      %v1417 = vunpack.c.l.b16 %v1253
      %v1418 = vunpack.c.h.b16 %v1253
      %v1419 = vunpack.c.l.b16 %v1254
      %v1420 = vunpack.c.h.b16 %v1254
      %v1421 = vunpack.c.l.b16 %v1255
      %v1422 = vunpack.c.h.b16 %v1255
      %v1423 = vunpack.c.l.b16 %v1256
      %v1424 = vunpack.c.h.b16 %v1256
      %v1425 = vunpack.c.l.b16 %v1257
      %v1426 = vunpack.c.h.b16 %v1257
      %v1427 = vunpack.c.l.b16 %v1258
      %v1428 = vunpack.c.h.b16 %v1258
      %v1429 = vunpack.c.l.b16 %v1259
      %v1430 = vunpack.c.h.b16 %v1259
      %v1431 = vunpack.c.l.b16 %v1260
      %v1432 = vunpack.c.h.b16 %v1260
      %v1433 = vunpack.c.l.b16 %v1261
      %v1434 = vunpack.c.h.b16 %v1261
      %v1435 = vunpack.c.l.b16 %v1262
      %v1436 = vunpack.c.h.b16 %v1262
      %v1437 = vunpack.c.l.b16 %v1263
      %v1438 = vunpack.c.h.b16 %v1263
      %v1439 = vunpack.c.l.b16 %v1264
      %v1440 = vunpack.c.h.b16 %v1264
      %v1441 = vunpack.c.l.b16 %v1265
      %v1442 = vunpack.c.h.b16 %v1265
      %v1443 = vunpack.c.l.b16 %v1266
      %v1444 = vunpack.c.h.b16 %v1266
      %v1445 = vunpack.c.l.b16 %v1267
      %v1446 = vunpack.c.h.b16 %v1267
      %v1447 = vunpack.c.l.b16 %v1268
      %v1448 = vunpack.c.h.b16 %v1268
      %v1449 = vunpack.c.l.b16 %v1269
      %v1450 = vunpack.c.h.b16 %v1269
      %v1451 = vunpack.c.l.b16 %v1270
      %v1452 = vunpack.c.h.b16 %v1270
      %v1453 = vunpack.c.l.b16 %v1271
      %v1454 = vunpack.c.h.b16 %v1271
      %v1455 = vunpack.c.l.b16 %v1272
      %v1456 = vunpack.c.h.b16 %v1272
      %v1457 = vunpack.c.l.b16 %v1273
      %v1458 = vunpack.c.h.b16 %v1273
      %v1459 = vunpack.c.l.b16 %v1274
      %v1460 = vunpack.c.h.b16 %v1274
      %v1461 = vunpack.c.l.b16 %v1275
      %v1462 = vunpack.c.h.b16 %v1275
      %v1463 = vunpack.c.l.b16 %v1276
      %v1464 = vunpack.c.h.b16 %v1276
      %v1465 = vunpack.c.l.b16 %v1277
      %v1466 = vunpack.c.h.b16 %v1277
      %v1467 = vunpack.c.l.b16 %v1278
      %v1468 = vunpack.c.h.b16 %v1278
      %v1469 = vunpack.c.l.b16 %v1279
      %v1470 = vunpack.c.h.b16 %v1279
      %v1471 = vunpack.c.l.b16 %v1280
      %v1472 = vunpack.c.h.b16 %v1280
      %v1473 = vpack.c.b16 %v1353, %v1345
      %v1474 = vpack.c.b16 %v1354, %v1346
      %v1475 = vpack.c.b16 %v1355, %v1347
      %v1476 = vpack.c.b16 %v1356, %v1348
      %v1477 = vpack.c.b16 %v1357, %v1349
      %v1478 = vpack.c.b16 %v1358, %v1350
      %v1479 = vpack.c.b16 %v1359, %v1351
      %v1480 = vpack.c.b16 %v1360, %v1352
      %v1481 = vpack.c.b16 %v1369, %v1361
      %v1482 = vpack.c.b16 %v1370, %v1362
      %v1483 = vpack.c.b16 %v1371, %v1363
      %v1484 = vpack.c.b16 %v1372, %v1364
      %v1485 = vpack.c.b16 %v1373, %v1365
      %v1486 = vpack.c.b16 %v1374, %v1366
      %v1487 = vpack.c.b16 %v1375, %v1367
      %v1488 = vpack.c.b16 %v1376, %v1368
      %v1489 = vpack.c.b16 %v1385, %v1377
      %v1490 = vpack.c.b16 %v1386, %v1378
      %v1491 = vpack.c.b16 %v1387, %v1379
      %v1492 = vpack.c.b16 %v1388, %v1380
      %v1493 = vpack.c.b16 %v1389, %v1381
      %v1494 = vpack.c.b16 %v1390, %v1382
      %v1495 = vpack.c.b16 %v1391, %v1383
      %v1496 = vpack.c.b16 %v1392, %v1384
      %v1497 = vpack.c.b16 %v1401, %v1393
      %v1498 = vpack.c.b16 %v1402, %v1394
      %v1499 = vpack.c.b16 %v1403, %v1395
      %v1500 = vpack.c.b16 %v1404, %v1396
      %v1501 = vpack.c.b16 %v1405, %v1397
      %v1502 = vpack.c.b16 %v1406, %v1398
      %v1503 = vpack.c.b16 %v1407, %v1399
      %v1504 = vpack.c.b16 %v1408, %v1400
      %v1505 = vpack.c.b16 %v1417, %v1409
      %v1506 = vpack.c.b16 %v1418, %v1410
      %v1507 = vpack.c.b16 %v1419, %v1411
      %v1508 = vpack.c.b16 %v1420, %v1412
      %v1509 = vpack.c.b16 %v1421, %v1413
      %v1510 = vpack.c.b16 %v1422, %v1414
      %v1511 = vpack.c.b16 %v1423, %v1415
      %v1512 = vpack.c.b16 %v1424, %v1416
      %v1513 = vpack.c.b16 %v1433, %v1425
      %v1514 = vpack.c.b16 %v1434, %v1426
      %v1515 = vpack.c.b16 %v1435, %v1427
      %v1516 = vpack.c.b16 %v1436, %v1428
      %v1517 = vpack.c.b16 %v1437, %v1429
      %v1518 = vpack.c.b16 %v1438, %v1430
      %v1519 = vpack.c.b16 %v1439, %v1431
      %v1520 = vpack.c.b16 %v1440, %v1432
      %v1521 = vpack.c.b16 %v1449, %v1441
      %v1522 = vpack.c.b16 %v1450, %v1442
      %v1523 = vpack.c.b16 %v1451, %v1443
      %v1524 = vpack.c.b16 %v1452, %v1444
      %v1525 = vpack.c.b16 %v1453, %v1445
      %v1526 = vpack.c.b16 %v1454, %v1446
      %v1527 = vpack.c.b16 %v1455, %v1447
      %v1528 = vpack.c.b16 %v1456, %v1448
      %v1529 = vpack.c.b16 %v1465, %v1457
      %v1530 = vpack.c.b16 %v1466, %v1458
      %v1531 = vpack.c.b16 %v1467, %v1459
      %v1532 = vpack.c.b16 %v1468, %v1460
      %v1533 = vpack.c.b16 %v1469, %v1461
      %v1534 = vpack.c.b16 %v1470, %v1462
      %v1535 = vpack.c.b16 %v1471, %v1463
      %v1536 = vpack.c.b16 %v1472, %v1464
      %1601 = vmatprep.subr.bf16.mxu0 %v1474
      %1602 = vmatpush1.bf16.msra.mxu0 %v1473
      %1603 = vmatprep.subr.bf16.mxu0 %v1482
      %1604 = vmatpush1.bf16.msra.mxu0 %v1481
      %1605 = vmatprep.subr.bf16.mxu0 %v1490
      %1606 = vmatpush1.bf16.msra.mxu0 %v1489
      %1607 = vmatprep.subr.bf16.mxu0 %v1498
      %1608 = vmatpush1.bf16.msra.mxu0 %v1497
      %1609 = vmatprep.subr.bf16.mxu0 %v1506
      %1610 = vmatpush1.bf16.msra.mxu0 %v1505
      %1611 = vmatprep.subr.bf16.mxu0 %v1514
      %1612 = vmatpush1.bf16.msra.mxu0 %v1513
      %1613 = vmatprep.subr.bf16.mxu0 %v1522
      %1614 = vmatpush1.bf16.msra.mxu0 %v1521
      %1615 = vmatprep.subr.bf16.mxu0 %v1530
      %1616 = vmatpush1.bf16.msra.mxu0 %v1529
      %1617 = vmatprep.subr.bf16.mxu0 0
      %1618 = vmatpush1.bf16.msra.mxu0 0
      %1619 = vmatprep.subr.bf16.mxu0 0
      %1620 = vmatpush1.bf16.msra.mxu0 0
      %1621 = vmatprep.subr.bf16.mxu0 0
      %1622 = vmatpush1.bf16.msra.mxu0 0
      %1623 = vmatprep.subr.bf16.mxu0 0
      %1624 = vmatpush1.bf16.msra.mxu0 0
      %1625 = vmatprep.subr.bf16.mxu0 0
      %1626 = vmatpush1.bf16.msra.mxu0 0
      %1627 = vmatprep.subr.bf16.mxu0 0
      %1628 = vmatpush1.bf16.msra.mxu0 0
      %1629 = vmatprep.subr.bf16.mxu0 0
      %1630 = vmatpush1.bf16.msra.mxu0 0
      %1631 = vmatprep.subr.bf16.mxu0 0
      %1632 = vmatpush1.bf16.msra.mxu0 0
      %1633 = vmatprep.mubr.bf16.mxu0 0
      %1634 = vmatmul.mubr.bf16.gmra.mrb[0].mxu0 %v1201
      %v1635 = vpop.f32.mrb[0].mxu0
      %v1636 = vadd.f32 0.0, %v1635
      %v1637 = vpop.f32.mrb[0].mxu0
      %v1638 = vadd.f32 0.0, %v1637
      %v1639 = vpop.f32.mrb[0].mxu0
      %v1640 = vadd.f32 0.0, %v1639
      %v1641 = vpop.f32.mrb[0].mxu0
      %v1642 = vadd.f32 0.0, %v1641
      %1643 = vmatprep.mubr.bf16.mxu0 0
      %1644 = vmatmul.mubr.bf16.gmra.mrb[0].mxu0 %v1202
      %v1645 = vpop.f32.mrb[0].mxu0
      %v1646 = vadd.f32 0.0, %v1645
      %v1647 = vpop.f32.mrb[0].mxu0
      %v1648 = vadd.f32 0.0, %v1647
      %v1649 = vpop.f32.mrb[0].mxu0
      %v1650 = vadd.f32 0.0, %v1649
      %v1651 = vpop.f32.mrb[0].mxu0
      %v1652 = vadd.f32 0.0, %v1651
      %1653 = vmatprep.mubr.bf16.mxu0 0
      %1654 = vmatmul.mubr.bf16.gmra.mrb[0].mxu0 %v1203
      %v1655 = vpop.f32.mrb[0].mxu0
      %v1656 = vadd.f32 0.0, %v1655
      %v1657 = vpop.f32.mrb[0].mxu0
      %v1658 = vadd.f32 0.0, %v1657
      %v1659 = vpop.f32.mrb[0].mxu0
      %v1660 = vadd.f32 0.0, %v1659
      %v1661 = vpop.f32.mrb[0].mxu0
      %v1662 = vadd.f32 0.0, %v1661
      %1663 = vmatprep.mubr.bf16.mxu0 0
      %1664 = vmatmul.mubr.bf16.gmra.mrb[0].mxu0 %v1204
      %v1665 = vpop.f32.mrb[0].mxu0
      %v1666 = vadd.f32 0.0, %v1665
      %v1667 = vpop.f32.mrb[0].mxu0
      %v1668 = vadd.f32 0.0, %v1667
      %v1669 = vpop.f32.mrb[0].mxu0
      %v1670 = vadd.f32 0.0, %v1669
      %v1671 = vpop.f32.mrb[0].mxu0
      %v1672 = vadd.f32 0.0, %v1671
      %1673 = vmatprep.mubr.bf16.mxu0 0
      %1674 = vmatmul.mubr.bf16.gmra.mrb[0].mxu0 %v1205
      %v1675 = vpop.f32.mrb[0].mxu0
      %v1676 = vadd.f32 0.0, %v1675
      %v1677 = vpop.f32.mrb[0].mxu0
      %v1678 = vadd.f32 0.0, %v1677
      %v1679 = vpop.f32.mrb[0].mxu0
      %v1680 = vadd.f32 0.0, %v1679
      %v1681 = vpop.f32.mrb[0].mxu0
      %v1682 = vadd.f32 0.0, %v1681
      %1683 = vmatprep.mubr.bf16.mxu0 0
      %1684 = vmatmul.mubr.bf16.gmra.mrb[0].mxu0 %v1206
      %v1685 = vpop.f32.mrb[0].mxu0
      %v1686 = vadd.f32 0.0, %v1685
      %v1687 = vpop.f32.mrb[0].mxu0
      %v1688 = vadd.f32 0.0, %v1687
      %v1689 = vpop.f32.mrb[0].mxu0
      %v1690 = vadd.f32 0.0, %v1689
      %v1691 = vpop.f32.mrb[0].mxu0
      %v1692 = vadd.f32 0.0, %v1691
      %1693 = vmatprep.mubr.bf16.mxu0 0
      %1694 = vmatmul.mubr.bf16.gmra.mrb[0].mxu0 %v1207
      %v1695 = vpop.f32.mrb[0].mxu0
      %v1696 = vadd.f32 0.0, %v1695
      %v1697 = vpop.f32.mrb[0].mxu0
      %v1698 = vadd.f32 0.0, %v1697
      %v1699 = vpop.f32.mrb[0].mxu0
      %v1700 = vadd.f32 0.0, %v1699
      %v1701 = vpop.f32.mrb[0].mxu0
      %v1702 = vadd.f32 0.0, %v1701
      %1703 = vmatprep.mubr.bf16.mxu0 0
      %1704 = vmatmul.mubr.bf16.gmra.mrb[0].mxu0 %v1208
      %v1705 = vpop.f32.mrb[0].mxu0
      %v1706 = vadd.f32 0.0, %v1705
      %v1707 = vpop.f32.mrb[0].mxu0
      %v1708 = vadd.f32 0.0, %v1707
      %v1709 = vpop.f32.mrb[0].mxu0
      %v1710 = vadd.f32 0.0, %v1709
      %v1711 = vpop.f32.mrb[0].mxu0
      %v1712 = vadd.f32 0.0, %v1711
      %1713 = vmatprep.mubr.bf16.mxu0 0
      %1714 = vmatmul.mubr.bf16.gmra.mrb[0].mxu0 %v1209
      %v1715 = vpop.f32.mrb[0].mxu0
      %v1716 = vadd.f32 0.0, %v1715
      %v1717 = vpop.f32.mrb[0].mxu0
      %v1718 = vadd.f32 0.0, %v1717
      %v1719 = vpop.f32.mrb[0].mxu0
      %v1720 = vadd.f32 0.0, %v1719
      %v1721 = vpop.f32.mrb[0].mxu0
      %v1722 = vadd.f32 0.0, %v1721
      %1723 = vmatprep.mubr.bf16.mxu0 0
      %1724 = vmatmul.mubr.bf16.gmra.mrb[0].mxu0 %v1210
      %v1725 = vpop.f32.mrb[0].mxu0
      %v1726 = vadd.f32 0.0, %v1725
      %v1727 = vpop.f32.mrb[0].mxu0
      %v1728 = vadd.f32 0.0, %v1727
      %v1729 = vpop.f32.mrb[0].mxu0
      %v1730 = vadd.f32 0.0, %v1729
      %v1731 = vpop.f32.mrb[0].mxu0
      %v1732 = vadd.f32 0.0, %v1731
      %1733 = vmatprep.mubr.bf16.mxu0 0
      %1734 = vmatmul.mubr.bf16.gmra.mrb[0].mxu0 %v1211
      %v1735 = vpop.f32.mrb[0].mxu0
      %v1736 = vadd.f32 0.0, %v1735
      %v1737 = vpop.f32.mrb[0].mxu0
      %v1738 = vadd.f32 0.0, %v1737
      %v1739 = vpop.f32.mrb[0].mxu0
      %v1740 = vadd.f32 0.0, %v1739
      %v1741 = vpop.f32.mrb[0].mxu0
      %v1742 = vadd.f32 0.0, %v1741
      %1743 = vmatprep.mubr.bf16.mxu0 0
      %1744 = vmatmul.mubr.bf16.gmra.mrb[0].mxu0 %v1212
      %v1745 = vpop.f32.mrb[0].mxu0
      %v1746 = vadd.f32 0.0, %v1745
      %v1747 = vpop.f32.mrb[0].mxu0
      %v1748 = vadd.f32 0.0, %v1747
      %v1749 = vpop.f32.mrb[0].mxu0
      %v1750 = vadd.f32 0.0, %v1749
      %v1751 = vpop.f32.mrb[0].mxu0
      %v1752 = vadd.f32 0.0, %v1751
      %1753 = vmatprep.mubr.bf16.mxu0 0
      %1754 = vmatmul.mubr.bf16.gmra.mrb[0].mxu0 %v1213
      %v1755 = vpop.f32.mrb[0].mxu0
      %v1756 = vadd.f32 0.0, %v1755
      %v1757 = vpop.f32.mrb[0].mxu0
      %v1758 = vadd.f32 0.0, %v1757
      %v1759 = vpop.f32.mrb[0].mxu0
      %v1760 = vadd.f32 0.0, %v1759
      %v1761 = vpop.f32.mrb[0].mxu0
      %v1762 = vadd.f32 0.0, %v1761
      %1763 = vmatprep.mubr.bf16.mxu0 0
      %1764 = vmatmul.mubr.bf16.gmra.mrb[0].mxu0 %v1214
      %v1765 = vpop.f32.mrb[0].mxu0
      %v1766 = vadd.f32 0.0, %v1765
      %v1767 = vpop.f32.mrb[0].mxu0
      %v1768 = vadd.f32 0.0, %v1767
      %v1769 = vpop.f32.mrb[0].mxu0
      %v1770 = vadd.f32 0.0, %v1769
      %v1771 = vpop.f32.mrb[0].mxu0
      %v1772 = vadd.f32 0.0, %v1771
      %1773 = vmatprep.mubr.bf16.mxu0 0
      %1774 = vmatmul.mubr.bf16.gmra.mrb[0].mxu0 %v1215
      %v1775 = vpop.f32.mrb[0].mxu0
      %v1776 = vadd.f32 0.0, %v1775
      %v1777 = vpop.f32.mrb[0].mxu0
      %v1778 = vadd.f32 0.0, %v1777
      %v1779 = vpop.f32.mrb[0].mxu0
      %v1780 = vadd.f32 0.0, %v1779
      %v1781 = vpop.f32.mrb[0].mxu0
      %v1782 = vadd.f32 0.0, %v1781
      %1783 = vmatprep.mubr.bf16.mxu0 0
      %1784 = vmatmul.mubr.bf16.gmra.mrb[0].mxu0 %v1216
      %v1785 = vpop.f32.mrb[0].mxu0
      %v1786 = vadd.f32 0.0, %v1785
      %v1787 = vpop.f32.mrb[0].mxu0
      %v1788 = vadd.f32 0.0, %v1787
      %v1789 = vpop.f32.mrb[0].mxu0
      %v1790 = vadd.f32 0.0, %v1789
      %v1791 = vpop.f32.mrb[0].mxu0
      %v1792 = vadd.f32 0.0, %v1791
      %1793 = vdwg.mxu0
      %1794 = vmatprep.subr.bf16.mxu0 %v1476
      %1795 = vmatpush1.bf16.msra.mxu0 %v1475
      %1796 = vmatprep.subr.bf16.mxu0 %v1484
      %1797 = vmatpush1.bf16.msra.mxu0 %v1483
      %1798 = vmatprep.subr.bf16.mxu0 %v1492
      %1799 = vmatpush1.bf16.msra.mxu0 %v1491
      %1800 = vmatprep.subr.bf16.mxu0 %v1500
      %1801 = vmatpush1.bf16.msra.mxu0 %v1499
      %1802 = vmatprep.subr.bf16.mxu0 %v1508
      %1803 = vmatpush1.bf16.msra.mxu0 %v1507
      %1804 = vmatprep.subr.bf16.mxu0 %v1516
      %1805 = vmatpush1.bf16.msra.mxu0 %v1515
      %1806 = vmatprep.subr.bf16.mxu0 %v1524
      %1807 = vmatpush1.bf16.msra.mxu0 %v1523
      %1808 = vmatprep.subr.bf16.mxu0 %v1532
      %1809 = vmatpush1.bf16.msra.mxu0 %v1531
      %1810 = vmatprep.subr.bf16.mxu0 0
      %1811 = vmatpush1.bf16.msra.mxu0 0
      %1812 = vmatprep.subr.bf16.mxu0 0
      %1813 = vmatpush1.bf16.msra.mxu0 0
      %1814 = vmatprep.subr.bf16.mxu0 0
      %1815 = vmatpush1.bf16.msra.mxu0 0
      %1816 = vmatprep.subr.bf16.mxu0 0
      %1817 = vmatpush1.bf16.msra.mxu0 0
      %1818 = vmatprep.subr.bf16.mxu0 0
      %1819 = vmatpush1.bf16.msra.mxu0 0
      %1820 = vmatprep.subr.bf16.mxu0 0
      %1821 = vmatpush1.bf16.msra.mxu0 0
      %1822 = vmatprep.subr.bf16.mxu0 0
      %1823 = vmatpush1.bf16.msra.mxu0 0
      %1824 = vmatprep.subr.bf16.mxu0 0
      %1825 = vmatpush1.bf16.msra.mxu0 0
      %1826 = vmatprep.mubr.bf16.mxu0 0
      %1827 = vmatmul.mubr.bf16.gmra.mrb[0].mxu0 %v1201
      %v1828 = vpop.f32.mrb[0].mxu0
      %v1829 = vadd.f32 0.0, %v1828
      %v1830 = vpop.f32.mrb[0].mxu0
      %v1831 = vadd.f32 0.0, %v1830
      %v1832 = vpop.f32.mrb[0].mxu0
      %v1833 = vadd.f32 0.0, %v1832
      %v1834 = vpop.f32.mrb[0].mxu0
      %v1835 = vadd.f32 0.0, %v1834
      %1836 = vmatprep.mubr.bf16.mxu0 0
      %1837 = vmatmul.mubr.bf16.gmra.mrb[0].mxu0 %v1202
      %v1838 = vpop.f32.mrb[0].mxu0
      %v1839 = vadd.f32 0.0, %v1838
      %v1840 = vpop.f32.mrb[0].mxu0
      %v1841 = vadd.f32 0.0, %v1840
      %v1842 = vpop.f32.mrb[0].mxu0
      %v1843 = vadd.f32 0.0, %v1842
      %v1844 = vpop.f32.mrb[0].mxu0
      %v1845 = vadd.f32 0.0, %v1844
      %1846 = vmatprep.mubr.bf16.mxu0 0
      %1847 = vmatmul.mubr.bf16.gmra.mrb[0].mxu0 %v1203
      %v1848 = vpop.f32.mrb[0].mxu0
      %v1849 = vadd.f32 0.0, %v1848
      %v1850 = vpop.f32.mrb[0].mxu0
      %v1851 = vadd.f32 0.0, %v1850
      %v1852 = vpop.f32.mrb[0].mxu0
      %v1853 = vadd.f32 0.0, %v1852
      %v1854 = vpop.f32.mrb[0].mxu0
      %v1855 = vadd.f32 0.0, %v1854
      %1856 = vmatprep.mubr.bf16.mxu0 0
      %1857 = vmatmul.mubr.bf16.gmra.mrb[0].mxu0 %v1204
      %v1858 = vpop.f32.mrb[0].mxu0
      %v1859 = vadd.f32 0.0, %v1858
      %v1860 = vpop.f32.mrb[0].mxu0
      %v1861 = vadd.f32 0.0, %v1860
      %v1862 = vpop.f32.mrb[0].mxu0
      %v1863 = vadd.f32 0.0, %v1862
      %v1864 = vpop.f32.mrb[0].mxu0
      %v1865 = vadd.f32 0.0, %v1864
      %1866 = vmatprep.mubr.bf16.mxu0 0
      %1867 = vmatmul.mubr.bf16.gmra.mrb[0].mxu0 %v1205
      %v1868 = vpop.f32.mrb[0].mxu0
      %v1869 = vadd.f32 0.0, %v1868
      %v1870 = vpop.f32.mrb[0].mxu0
      %v1871 = vadd.f32 0.0, %v1870
      %v1872 = vpop.f32.mrb[0].mxu0
      %v1873 = vadd.f32 0.0, %v1872
      %v1874 = vpop.f32.mrb[0].mxu0
      %v1875 = vadd.f32 0.0, %v1874
      %1876 = vmatprep.mubr.bf16.mxu0 0
      %1877 = vmatmul.mubr.bf16.gmra.mrb[0].mxu0 %v1206
      %v1878 = vpop.f32.mrb[0].mxu0
      %v1879 = vadd.f32 0.0, %v1878
      %v1880 = vpop.f32.mrb[0].mxu0
      %v1881 = vadd.f32 0.0, %v1880
      %v1882 = vpop.f32.mrb[0].mxu0
      %v1883 = vadd.f32 0.0, %v1882
      %v1884 = vpop.f32.mrb[0].mxu0
      %v1885 = vadd.f32 0.0, %v1884
      %1886 = vmatprep.mubr.bf16.mxu0 0
      %1887 = vmatmul.mubr.bf16.gmra.mrb[0].mxu0 %v1207
      %v1888 = vpop.f32.mrb[0].mxu0
      %v1889 = vadd.f32 0.0, %v1888
      %v1890 = vpop.f32.mrb[0].mxu0
      %v1891 = vadd.f32 0.0, %v1890
      %v1892 = vpop.f32.mrb[0].mxu0
      %v1893 = vadd.f32 0.0, %v1892
      %v1894 = vpop.f32.mrb[0].mxu0
      %v1895 = vadd.f32 0.0, %v1894
      %1896 = vmatprep.mubr.bf16.mxu0 0
      %1897 = vmatmul.mubr.bf16.gmra.mrb[0].mxu0 %v1208
      %v1898 = vpop.f32.mrb[0].mxu0
      %v1899 = vadd.f32 0.0, %v1898
      %v1900 = vpop.f32.mrb[0].mxu0
      %v1901 = vadd.f32 0.0, %v1900
      %v1902 = vpop.f32.mrb[0].mxu0
      %v1903 = vadd.f32 0.0, %v1902
      %v1904 = vpop.f32.mrb[0].mxu0
      %v1905 = vadd.f32 0.0, %v1904
      %1906 = vmatprep.mubr.bf16.mxu0 0
      %1907 = vmatmul.mubr.bf16.gmra.mrb[0].mxu0 %v1209
      %v1908 = vpop.f32.mrb[0].mxu0
      %v1909 = vadd.f32 0.0, %v1908
      %v1910 = vpop.f32.mrb[0].mxu0
      %v1911 = vadd.f32 0.0, %v1910
      %v1912 = vpop.f32.mrb[0].mxu0
      %v1913 = vadd.f32 0.0, %v1912
      %v1914 = vpop.f32.mrb[0].mxu0
      %v1915 = vadd.f32 0.0, %v1914
      %1916 = vmatprep.mubr.bf16.mxu0 0
      %1917 = vmatmul.mubr.bf16.gmra.mrb[0].mxu0 %v1210
      %v1918 = vpop.f32.mrb[0].mxu0
      %v1919 = vadd.f32 0.0, %v1918
      %v1920 = vpop.f32.mrb[0].mxu0
      %v1921 = vadd.f32 0.0, %v1920
      %v1922 = vpop.f32.mrb[0].mxu0
      %v1923 = vadd.f32 0.0, %v1922
      %v1924 = vpop.f32.mrb[0].mxu0
      %v1925 = vadd.f32 0.0, %v1924
      %1926 = vmatprep.mubr.bf16.mxu0 0
      %1927 = vmatmul.mubr.bf16.gmra.mrb[0].mxu0 %v1211
      %v1928 = vpop.f32.mrb[0].mxu0
      %v1929 = vadd.f32 0.0, %v1928
      %v1930 = vpop.f32.mrb[0].mxu0
      %v1931 = vadd.f32 0.0, %v1930
      %v1932 = vpop.f32.mrb[0].mxu0
      %v1933 = vadd.f32 0.0, %v1932
      %v1934 = vpop.f32.mrb[0].mxu0
      %v1935 = vadd.f32 0.0, %v1934
      %1936 = vmatprep.mubr.bf16.mxu0 0
      %1937 = vmatmul.mubr.bf16.gmra.mrb[0].mxu0 %v1212
      %v1938 = vpop.f32.mrb[0].mxu0
      %v1939 = vadd.f32 0.0, %v1938
      %v1940 = vpop.f32.mrb[0].mxu0
      %v1941 = vadd.f32 0.0, %v1940
      %v1942 = vpop.f32.mrb[0].mxu0
      %v1943 = vadd.f32 0.0, %v1942
      %v1944 = vpop.f32.mrb[0].mxu0
      %v1945 = vadd.f32 0.0, %v1944
      %1946 = vmatprep.mubr.bf16.mxu0 0
      %1947 = vmatmul.mubr.bf16.gmra.mrb[0].mxu0 %v1213
      %v1948 = vpop.f32.mrb[0].mxu0
      %v1949 = vadd.f32 0.0, %v1948
      %v1950 = vpop.f32.mrb[0].mxu0
      %v1951 = vadd.f32 0.0, %v1950
      %v1952 = vpop.f32.mrb[0].mxu0
      %v1953 = vadd.f32 0.0, %v1952
      %v1954 = vpop.f32.mrb[0].mxu0
      %v1955 = vadd.f32 0.0, %v1954
      %1956 = vmatprep.mubr.bf16.mxu0 0
      %1957 = vmatmul.mubr.bf16.gmra.mrb[0].mxu0 %v1214
      %v1958 = vpop.f32.mrb[0].mxu0
      %v1959 = vadd.f32 0.0, %v1958
      %v1960 = vpop.f32.mrb[0].mxu0
      %v1961 = vadd.f32 0.0, %v1960
      %v1962 = vpop.f32.mrb[0].mxu0
      %v1963 = vadd.f32 0.0, %v1962
      %v1964 = vpop.f32.mrb[0].mxu0
      %v1965 = vadd.f32 0.0, %v1964
      %1966 = vmatprep.mubr.bf16.mxu0 0
      %1967 = vmatmul.mubr.bf16.gmra.mrb[0].mxu0 %v1215
      %v1968 = vpop.f32.mrb[0].mxu0
      %v1969 = vadd.f32 0.0, %v1968
      %v1970 = vpop.f32.mrb[0].mxu0
      %v1971 = vadd.f32 0.0, %v1970
      %v1972 = vpop.f32.mrb[0].mxu0
      %v1973 = vadd.f32 0.0, %v1972
      %v1974 = vpop.f32.mrb[0].mxu0
      %v1975 = vadd.f32 0.0, %v1974
      %1976 = vmatprep.mubr.bf16.mxu0 0
      %1977 = vmatmul.mubr.bf16.gmra.mrb[0].mxu0 %v1216
      %v1978 = vpop.f32.mrb[0].mxu0
      %v1979 = vadd.f32 0.0, %v1978
      %v1980 = vpop.f32.mrb[0].mxu0
      %v1981 = vadd.f32 0.0, %v1980
      %v1982 = vpop.f32.mrb[0].mxu0
      %v1983 = vadd.f32 0.0, %v1982
      %v1984 = vpop.f32.mrb[0].mxu0
      %v1985 = vadd.f32 0.0, %v1984
      %1986 = vdwg.mxu0
      %1987 = vmatprep.subr.bf16.mxu0 %v1478
      %1988 = vmatpush1.bf16.msra.mxu0 %v1477
      %1989 = vmatprep.subr.bf16.mxu0 %v1486
      %1990 = vmatpush1.bf16.msra.mxu0 %v1485
      %1991 = vmatprep.subr.bf16.mxu0 %v1494
      %1992 = vmatpush1.bf16.msra.mxu0 %v1493
      %1993 = vmatprep.subr.bf16.mxu0 %v1502
      %1994 = vmatpush1.bf16.msra.mxu0 %v1501
      %1995 = vmatprep.subr.bf16.mxu0 %v1510
      %1996 = vmatpush1.bf16.msra.mxu0 %v1509
      %1997 = vmatprep.subr.bf16.mxu0 %v1518
      %1998 = vmatpush1.bf16.msra.mxu0 %v1517
      %1999 = vmatprep.subr.bf16.mxu0 %v1526
      %2000 = vmatpush1.bf16.msra.mxu0 %v1525
      %2001 = vmatprep.subr.bf16.mxu0 %v1534
      %2002 = vmatpush1.bf16.msra.mxu0 %v1533
      %2003 = vmatprep.subr.bf16.mxu0 0
      %2004 = vmatpush1.bf16.msra.mxu0 0
      %2005 = vmatprep.subr.bf16.mxu0 0
      %2006 = vmatpush1.bf16.msra.mxu0 0
      %2007 = vmatprep.subr.bf16.mxu0 0
      %2008 = vmatpush1.bf16.msra.mxu0 0
      %2009 = vmatprep.subr.bf16.mxu0 0
      %2010 = vmatpush1.bf16.msra.mxu0 0
      %2011 = vmatprep.subr.bf16.mxu0 0
      %2012 = vmatpush1.bf16.msra.mxu0 0
      %2013 = vmatprep.subr.bf16.mxu0 0
      %2014 = vmatpush1.bf16.msra.mxu0 0
      %2015 = vmatprep.subr.bf16.mxu0 0
      %2016 = vmatpush1.bf16.msra.mxu0 0
      %2017 = vmatprep.subr.bf16.mxu0 0
      %2018 = vmatpush1.bf16.msra.mxu0 0
      %2019 = vmatprep.mubr.bf16.mxu0 0
      %2020 = vmatmul.mubr.bf16.gmra.mrb[0].mxu0 %v1201
      %v2021 = vpop.f32.mrb[0].mxu0
      %v2022 = vadd.f32 0.0, %v2021
      %v2023 = vpop.f32.mrb[0].mxu0
      %v2024 = vadd.f32 0.0, %v2023
      %v2025 = vpop.f32.mrb[0].mxu0
      %v2026 = vadd.f32 0.0, %v2025
      %v2027 = vpop.f32.mrb[0].mxu0
      %v2028 = vadd.f32 0.0, %v2027
      %2029 = vmatprep.mubr.bf16.mxu0 0
      %2030 = vmatmul.mubr.bf16.gmra.mrb[0].mxu0 %v1202
      %v2031 = vpop.f32.mrb[0].mxu0
      %v2032 = vadd.f32 0.0, %v2031
      %v2033 = vpop.f32.mrb[0].mxu0
      %v2034 = vadd.f32 0.0, %v2033
      %v2035 = vpop.f32.mrb[0].mxu0
      %v2036 = vadd.f32 0.0, %v2035
      %v2037 = vpop.f32.mrb[0].mxu0
      %v2038 = vadd.f32 0.0, %v2037
      %2039 = vmatprep.mubr.bf16.mxu0 0
      %2040 = vmatmul.mubr.bf16.gmra.mrb[0].mxu0 %v1203
      %v2041 = vpop.f32.mrb[0].mxu0
      %v2042 = vadd.f32 0.0, %v2041
      %v2043 = vpop.f32.mrb[0].mxu0
      %v2044 = vadd.f32 0.0, %v2043
      %v2045 = vpop.f32.mrb[0].mxu0
      %v2046 = vadd.f32 0.0, %v2045
      %v2047 = vpop.f32.mrb[0].mxu0
      %v2048 = vadd.f32 0.0, %v2047
      %2049 = vmatprep.mubr.bf16.mxu0 0
      %2050 = vmatmul.mubr.bf16.gmra.mrb[0].mxu0 %v1204
      %v2051 = vpop.f32.mrb[0].mxu0
      %v2052 = vadd.f32 0.0, %v2051
      %v2053 = vpop.f32.mrb[0].mxu0
      %v2054 = vadd.f32 0.0, %v2053
      %v2055 = vpop.f32.mrb[0].mxu0
      %v2056 = vadd.f32 0.0, %v2055
      %v2057 = vpop.f32.mrb[0].mxu0
      %v2058 = vadd.f32 0.0, %v2057
      %2059 = vmatprep.mubr.bf16.mxu0 0
      %2060 = vmatmul.mubr.bf16.gmra.mrb[0].mxu0 %v1205
      %v2061 = vpop.f32.mrb[0].mxu0
      %v2062 = vadd.f32 0.0, %v2061
      %v2063 = vpop.f32.mrb[0].mxu0
      %v2064 = vadd.f32 0.0, %v2063
      %v2065 = vpop.f32.mrb[0].mxu0
      %v2066 = vadd.f32 0.0, %v2065
      %v2067 = vpop.f32.mrb[0].mxu0
      %v2068 = vadd.f32 0.0, %v2067
      %2069 = vmatprep.mubr.bf16.mxu0 0
      %2070 = vmatmul.mubr.bf16.gmra.mrb[0].mxu0 %v1206
      %v2071 = vpop.f32.mrb[0].mxu0
      %v2072 = vadd.f32 0.0, %v2071
      %v2073 = vpop.f32.mrb[0].mxu0
      %v2074 = vadd.f32 0.0, %v2073
      %v2075 = vpop.f32.mrb[0].mxu0
      %v2076 = vadd.f32 0.0, %v2075
      %v2077 = vpop.f32.mrb[0].mxu0
      %v2078 = vadd.f32 0.0, %v2077
      %2079 = vmatprep.mubr.bf16.mxu0 0
      %2080 = vmatmul.mubr.bf16.gmra.mrb[0].mxu0 %v1207
      %v2081 = vpop.f32.mrb[0].mxu0
      %v2082 = vadd.f32 0.0, %v2081
      %v2083 = vpop.f32.mrb[0].mxu0
      %v2084 = vadd.f32 0.0, %v2083
      %v2085 = vpop.f32.mrb[0].mxu0
      %v2086 = vadd.f32 0.0, %v2085
      %v2087 = vpop.f32.mrb[0].mxu0
      %v2088 = vadd.f32 0.0, %v2087
      %2089 = vmatprep.mubr.bf16.mxu0 0
      %2090 = vmatmul.mubr.bf16.gmra.mrb[0].mxu0 %v1208
      %v2091 = vpop.f32.mrb[0].mxu0
      %v2092 = vadd.f32 0.0, %v2091
      %v2093 = vpop.f32.mrb[0].mxu0
      %v2094 = vadd.f32 0.0, %v2093
      %v2095 = vpop.f32.mrb[0].mxu0
      %v2096 = vadd.f32 0.0, %v2095
      %v2097 = vpop.f32.mrb[0].mxu0
      %v2098 = vadd.f32 0.0, %v2097
      %2099 = vmatprep.mubr.bf16.mxu0 0
      %2100 = vmatmul.mubr.bf16.gmra.mrb[0].mxu0 %v1209
      %v2101 = vpop.f32.mrb[0].mxu0
      %v2102 = vadd.f32 0.0, %v2101
      %v2103 = vpop.f32.mrb[0].mxu0
      %v2104 = vadd.f32 0.0, %v2103
      %v2105 = vpop.f32.mrb[0].mxu0
      %v2106 = vadd.f32 0.0, %v2105
      %v2107 = vpop.f32.mrb[0].mxu0
      %v2108 = vadd.f32 0.0, %v2107
      %2109 = vmatprep.mubr.bf16.mxu0 0
      %2110 = vmatmul.mubr.bf16.gmra.mrb[0].mxu0 %v1210
      %v2111 = vpop.f32.mrb[0].mxu0
      %v2112 = vadd.f32 0.0, %v2111
      %v2113 = vpop.f32.mrb[0].mxu0
      %v2114 = vadd.f32 0.0, %v2113
      %v2115 = vpop.f32.mrb[0].mxu0
      %v2116 = vadd.f32 0.0, %v2115
      %v2117 = vpop.f32.mrb[0].mxu0
      %v2118 = vadd.f32 0.0, %v2117
      %2119 = vmatprep.mubr.bf16.mxu0 0
      %2120 = vmatmul.mubr.bf16.gmra.mrb[0].mxu0 %v1211
      %v2121 = vpop.f32.mrb[0].mxu0
      %v2122 = vadd.f32 0.0, %v2121
      %v2123 = vpop.f32.mrb[0].mxu0
      %v2124 = vadd.f32 0.0, %v2123
      %v2125 = vpop.f32.mrb[0].mxu0
      %v2126 = vadd.f32 0.0, %v2125
      %v2127 = vpop.f32.mrb[0].mxu0
      %v2128 = vadd.f32 0.0, %v2127
      %2129 = vmatprep.mubr.bf16.mxu0 0
      %2130 = vmatmul.mubr.bf16.gmra.mrb[0].mxu0 %v1212
      %v2131 = vpop.f32.mrb[0].mxu0
      %v2132 = vadd.f32 0.0, %v2131
      %v2133 = vpop.f32.mrb[0].mxu0
      %v2134 = vadd.f32 0.0, %v2133
      %v2135 = vpop.f32.mrb[0].mxu0
      %v2136 = vadd.f32 0.0, %v2135
      %v2137 = vpop.f32.mrb[0].mxu0
      %v2138 = vadd.f32 0.0, %v2137
      %2139 = vmatprep.mubr.bf16.mxu0 0
      %2140 = vmatmul.mubr.bf16.gmra.mrb[0].mxu0 %v1213
      %v2141 = vpop.f32.mrb[0].mxu0
      %v2142 = vadd.f32 0.0, %v2141
      %v2143 = vpop.f32.mrb[0].mxu0
      %v2144 = vadd.f32 0.0, %v2143
      %v2145 = vpop.f32.mrb[0].mxu0
      %v2146 = vadd.f32 0.0, %v2145
      %v2147 = vpop.f32.mrb[0].mxu0
      %v2148 = vadd.f32 0.0, %v2147
      %2149 = vmatprep.mubr.bf16.mxu0 0
      %2150 = vmatmul.mubr.bf16.gmra.mrb[0].mxu0 %v1214
      %v2151 = vpop.f32.mrb[0].mxu0
      %v2152 = vadd.f32 0.0, %v2151
      %v2153 = vpop.f32.mrb[0].mxu0
      %v2154 = vadd.f32 0.0, %v2153
      %v2155 = vpop.f32.mrb[0].mxu0
      %v2156 = vadd.f32 0.0, %v2155
      %v2157 = vpop.f32.mrb[0].mxu0
      %v2158 = vadd.f32 0.0, %v2157
      %2159 = vmatprep.mubr.bf16.mxu0 0
      %2160 = vmatmul.mubr.bf16.gmra.mrb[0].mxu0 %v1215
      %v2161 = vpop.f32.mrb[0].mxu0
      %v2162 = vadd.f32 0.0, %v2161
      %v2163 = vpop.f32.mrb[0].mxu0
      %v2164 = vadd.f32 0.0, %v2163
      %v2165 = vpop.f32.mrb[0].mxu0
      %v2166 = vadd.f32 0.0, %v2165
      %v2167 = vpop.f32.mrb[0].mxu0
      %v2168 = vadd.f32 0.0, %v2167
      %2169 = vmatprep.mubr.bf16.mxu0 0
      %2170 = vmatmul.mubr.bf16.gmra.mrb[0].mxu0 %v1216
      %v2171 = vpop.f32.mrb[0].mxu0
      %v2172 = vadd.f32 0.0, %v2171
      %v2173 = vpop.f32.mrb[0].mxu0
      %v2174 = vadd.f32 0.0, %v2173
      %v2175 = vpop.f32.mrb[0].mxu0
      %v2176 = vadd.f32 0.0, %v2175
      %v2177 = vpop.f32.mrb[0].mxu0
      %v2178 = vadd.f32 0.0, %v2177
      %2179 = vdwg.mxu0
      %2180 = vmatprep.subr.bf16.mxu0 %v1480
      %2181 = vmatpush1.bf16.msra.mxu0 %v1479
      %2182 = vmatprep.subr.bf16.mxu0 %v1488
      %2183 = vmatpush1.bf16.msra.mxu0 %v1487
      %2184 = vmatprep.subr.bf16.mxu0 %v1496
      %2185 = vmatpush1.bf16.msra.mxu0 %v1495
      %2186 = vmatprep.subr.bf16.mxu0 %v1504
      %2187 = vmatpush1.bf16.msra.mxu0 %v1503
      %2188 = vmatprep.subr.bf16.mxu0 %v1512
      %2189 = vmatpush1.bf16.msra.mxu0 %v1511
      %2190 = vmatprep.subr.bf16.mxu0 %v1520
      %2191 = vmatpush1.bf16.msra.mxu0 %v1519
      %2192 = vmatprep.subr.bf16.mxu0 %v1528
      %2193 = vmatpush1.bf16.msra.mxu0 %v1527
      %2194 = vmatprep.subr.bf16.mxu0 %v1536
      %2195 = vmatpush1.bf16.msra.mxu0 %v1535
      %2196 = vmatprep.subr.bf16.mxu0 0
      %2197 = vmatpush1.bf16.msra.mxu0 0
      %2198 = vmatprep.subr.bf16.mxu0 0
      %2199 = vmatpush1.bf16.msra.mxu0 0
      %2200 = vmatprep.subr.bf16.mxu0 0
      %2201 = vmatpush1.bf16.msra.mxu0 0
      %2202 = vmatprep.subr.bf16.mxu0 0
      %2203 = vmatpush1.bf16.msra.mxu0 0
      %2204 = vmatprep.subr.bf16.mxu0 0
      %2205 = vmatpush1.bf16.msra.mxu0 0
      %2206 = vmatprep.subr.bf16.mxu0 0
      %2207 = vmatpush1.bf16.msra.mxu0 0
      %2208 = vmatprep.subr.bf16.mxu0 0
      %2209 = vmatpush1.bf16.msra.mxu0 0
      %2210 = vmatprep.subr.bf16.mxu0 0
      %2211 = vmatpush1.bf16.msra.mxu0 0
      %2212 = vmatprep.mubr.bf16.mxu0 0
      %2213 = vmatmul.mubr.bf16.gmra.mrb[0].mxu0 %v1201
      %v2214 = vpop.f32.mrb[0].mxu0
      %v2215 = vadd.f32 0.0, %v2214
      %v2216 = vpop.f32.mrb[0].mxu0
      %v2217 = vadd.f32 0.0, %v2216
      %v2218 = vpop.f32.mrb[0].mxu0
      %v2219 = vadd.f32 0.0, %v2218
      %v2220 = vpop.f32.mrb[0].mxu0
      %v2221 = vadd.f32 0.0, %v2220
      %2222 = vmatprep.mubr.bf16.mxu0 0
      %2223 = vmatmul.mubr.bf16.gmra.mrb[0].mxu0 %v1202
      %v2224 = vpop.f32.mrb[0].mxu0
      %v2225 = vadd.f32 0.0, %v2224
      %v2226 = vpop.f32.mrb[0].mxu0
      %v2227 = vadd.f32 0.0, %v2226
      %v2228 = vpop.f32.mrb[0].mxu0
      %v2229 = vadd.f32 0.0, %v2228
      %v2230 = vpop.f32.mrb[0].mxu0
      %v2231 = vadd.f32 0.0, %v2230
      %2232 = vmatprep.mubr.bf16.mxu0 0
      %2233 = vmatmul.mubr.bf16.gmra.mrb[0].mxu0 %v1203
      %v2234 = vpop.f32.mrb[0].mxu0
      %v2235 = vadd.f32 0.0, %v2234
      %v2236 = vpop.f32.mrb[0].mxu0
      %v2237 = vadd.f32 0.0, %v2236
      %v2238 = vpop.f32.mrb[0].mxu0
      %v2239 = vadd.f32 0.0, %v2238
      %v2240 = vpop.f32.mrb[0].mxu0
      %v2241 = vadd.f32 0.0, %v2240
      %2242 = vmatprep.mubr.bf16.mxu0 0
      %2243 = vmatmul.mubr.bf16.gmra.mrb[0].mxu0 %v1204
      %v2244 = vpop.f32.mrb[0].mxu0
      %v2245 = vadd.f32 0.0, %v2244
      %v2246 = vpop.f32.mrb[0].mxu0
      %v2247 = vadd.f32 0.0, %v2246
      %v2248 = vpop.f32.mrb[0].mxu0
      %v2249 = vadd.f32 0.0, %v2248
      %v2250 = vpop.f32.mrb[0].mxu0
      %v2251 = vadd.f32 0.0, %v2250
      %2252 = vmatprep.mubr.bf16.mxu0 0
      %2253 = vmatmul.mubr.bf16.gmra.mrb[0].mxu0 %v1205
      %v2254 = vpop.f32.mrb[0].mxu0
      %v2255 = vadd.f32 0.0, %v2254
      %v2256 = vpop.f32.mrb[0].mxu0
      %v2257 = vadd.f32 0.0, %v2256
      %v2258 = vpop.f32.mrb[0].mxu0
      %v2259 = vadd.f32 0.0, %v2258
      %v2260 = vpop.f32.mrb[0].mxu0
      %v2261 = vadd.f32 0.0, %v2260
      %2262 = vmatprep.mubr.bf16.mxu0 0
      %2263 = vmatmul.mubr.bf16.gmra.mrb[0].mxu0 %v1206
      %v2264 = vpop.f32.mrb[0].mxu0
      %v2265 = vadd.f32 0.0, %v2264
      %v2266 = vpop.f32.mrb[0].mxu0
      %v2267 = vadd.f32 0.0, %v2266
      %v2268 = vpop.f32.mrb[0].mxu0
      %v2269 = vadd.f32 0.0, %v2268
      %v2270 = vpop.f32.mrb[0].mxu0
      %v2271 = vadd.f32 0.0, %v2270
      %2272 = vmatprep.mubr.bf16.mxu0 0
      %2273 = vmatmul.mubr.bf16.gmra.mrb[0].mxu0 %v1207
      %v2274 = vpop.f32.mrb[0].mxu0
      %v2275 = vadd.f32 0.0, %v2274
      %v2276 = vpop.f32.mrb[0].mxu0
      %v2277 = vadd.f32 0.0, %v2276
      %v2278 = vpop.f32.mrb[0].mxu0
      %v2279 = vadd.f32 0.0, %v2278
      %v2280 = vpop.f32.mrb[0].mxu0
      %v2281 = vadd.f32 0.0, %v2280
      %2282 = vmatprep.mubr.bf16.mxu0 0
      %2283 = vmatmul.mubr.bf16.gmra.mrb[0].mxu0 %v1208
      %v2284 = vpop.f32.mrb[0].mxu0
      %v2285 = vadd.f32 0.0, %v2284
      %v2286 = vpop.f32.mrb[0].mxu0
      %v2287 = vadd.f32 0.0, %v2286
      %v2288 = vpop.f32.mrb[0].mxu0
      %v2289 = vadd.f32 0.0, %v2288
      %v2290 = vpop.f32.mrb[0].mxu0
      %v2291 = vadd.f32 0.0, %v2290
      %2292 = vmatprep.mubr.bf16.mxu0 0
      %2293 = vmatmul.mubr.bf16.gmra.mrb[0].mxu0 %v1209
      %v2294 = vpop.f32.mrb[0].mxu0
      %v2295 = vadd.f32 0.0, %v2294
      %v2296 = vpop.f32.mrb[0].mxu0
      %v2297 = vadd.f32 0.0, %v2296
      %v2298 = vpop.f32.mrb[0].mxu0
      %v2299 = vadd.f32 0.0, %v2298
      %v2300 = vpop.f32.mrb[0].mxu0
      %v2301 = vadd.f32 0.0, %v2300
      %2302 = vmatprep.mubr.bf16.mxu0 0
      %2303 = vmatmul.mubr.bf16.gmra.mrb[0].mxu0 %v1210
      %v2304 = vpop.f32.mrb[0].mxu0
      %v2305 = vadd.f32 0.0, %v2304
      %v2306 = vpop.f32.mrb[0].mxu0
      %v2307 = vadd.f32 0.0, %v2306
      %v2308 = vpop.f32.mrb[0].mxu0
      %v2309 = vadd.f32 0.0, %v2308
      %v2310 = vpop.f32.mrb[0].mxu0
      %v2311 = vadd.f32 0.0, %v2310
      %2312 = vmatprep.mubr.bf16.mxu0 0
      %2313 = vmatmul.mubr.bf16.gmra.mrb[0].mxu0 %v1211
      %v2314 = vpop.f32.mrb[0].mxu0
      %v2315 = vadd.f32 0.0, %v2314
      %v2316 = vpop.f32.mrb[0].mxu0
      %v2317 = vadd.f32 0.0, %v2316
      %v2318 = vpop.f32.mrb[0].mxu0
      %v2319 = vadd.f32 0.0, %v2318
      %v2320 = vpop.f32.mrb[0].mxu0
      %v2321 = vadd.f32 0.0, %v2320
      %2322 = vmatprep.mubr.bf16.mxu0 0
      %2323 = vmatmul.mubr.bf16.gmra.mrb[0].mxu0 %v1212
      %v2324 = vpop.f32.mrb[0].mxu0
      %v2325 = vadd.f32 0.0, %v2324
      %v2326 = vpop.f32.mrb[0].mxu0
      %v2327 = vadd.f32 0.0, %v2326
      %v2328 = vpop.f32.mrb[0].mxu0
      %v2329 = vadd.f32 0.0, %v2328
      %v2330 = vpop.f32.mrb[0].mxu0
      %v2331 = vadd.f32 0.0, %v2330
      %2332 = vmatprep.mubr.bf16.mxu0 0
      %2333 = vmatmul.mubr.bf16.gmra.mrb[0].mxu0 %v1213
      %v2334 = vpop.f32.mrb[0].mxu0
      %v2335 = vadd.f32 0.0, %v2334
      %v2336 = vpop.f32.mrb[0].mxu0
      %v2337 = vadd.f32 0.0, %v2336
      %v2338 = vpop.f32.mrb[0].mxu0
      %v2339 = vadd.f32 0.0, %v2338
      %v2340 = vpop.f32.mrb[0].mxu0
      %v2341 = vadd.f32 0.0, %v2340
      %2342 = vmatprep.mubr.bf16.mxu0 0
      %2343 = vmatmul.mubr.bf16.gmra.mrb[0].mxu0 %v1214
      %v2344 = vpop.f32.mrb[0].mxu0
      %v2345 = vadd.f32 0.0, %v2344
      %v2346 = vpop.f32.mrb[0].mxu0
      %v2347 = vadd.f32 0.0, %v2346
      %v2348 = vpop.f32.mrb[0].mxu0
      %v2349 = vadd.f32 0.0, %v2348
      %v2350 = vpop.f32.mrb[0].mxu0
      %v2351 = vadd.f32 0.0, %v2350
      %2352 = vmatprep.mubr.bf16.mxu0 0
      %2353 = vmatmul.mubr.bf16.gmra.mrb[0].mxu0 %v1215
      %v2354 = vpop.f32.mrb[0].mxu0
      %v2355 = vadd.f32 0.0, %v2354
      %v2356 = vpop.f32.mrb[0].mxu0
      %v2357 = vadd.f32 0.0, %v2356
      %v2358 = vpop.f32.mrb[0].mxu0
      %v2359 = vadd.f32 0.0, %v2358
      %v2360 = vpop.f32.mrb[0].mxu0
      %v2361 = vadd.f32 0.0, %v2360
      %2362 = vmatprep.mubr.bf16.mxu0 0
      %2363 = vmatmul.mubr.bf16.gmra.mrb[0].mxu0 %v1216
      %v2364 = vpop.f32.mrb[0].mxu0
      %v2365 = vadd.f32 0.0, %v2364
      %v2366 = vpop.f32.mrb[0].mxu0
      %v2367 = vadd.f32 0.0, %v2366
      %v2368 = vpop.f32.mrb[0].mxu0
      %v2369 = vadd.f32 0.0, %v2368
      %v2370 = vpop.f32.mrb[0].mxu0
      %v2371 = vadd.f32 0.0, %v2370
      %2372 = vdwg.mxu0
      %v2373 = vld [vmem:[%s8] sm:$0xff]
      %v2375 = vlaneseq
      %v2376 = vshrl.u32 %v2375, 7
      %v2377 = vsub.s32 0, %v2376
      %v2378 = vrot.slane %v2373, %v2377
      %v2379 = vlaneseq
      %v2380 = vshrl.u32 %v2379, 7
      %v2381 = vsub.s32 1, %v2380
      %v2382 = vrot.slane %v2373, %v2381
      %v2383 = vlaneseq
      %v2384 = vshrl.u32 %v2383, 7
      %v2385 = vsub.s32 2, %v2384
      %v2386 = vrot.slane %v2373, %v2385
      %v2387 = vlaneseq
      %v2388 = vshrl.u32 %v2387, 7
      %v2389 = vsub.s32 3, %v2388
      %v2390 = vrot.slane %v2373, %v2389
      %v2391 = vlaneseq
      %v2392 = vshrl.u32 %v2391, 7
      %v2393 = vsub.s32 4, %v2392
      %v2394 = vrot.slane %v2373, %v2393
      %v2395 = vlaneseq
      %v2396 = vshrl.u32 %v2395, 7
      %v2397 = vsub.s32 5, %v2396
      %v2398 = vrot.slane %v2373, %v2397
      %v2399 = vlaneseq
      %v2400 = vshrl.u32 %v2399, 7
      %v2401 = vsub.s32 6, %v2400
      %v2402 = vrot.slane %v2373, %v2401
      %v2403 = vlaneseq
      %v2404 = vshrl.u32 %v2403, 7
      %v2405 = vsub.s32 7, %v2404
      %v2406 = vrot.slane %v2373, %v2405
      %v2415 = vmul.f32 %v1636, %v2378
      %v2416 = vmul.f32 %v1638, %v2382
      %v2417 = vmul.f32 %v1829, %v2386
      %v2418 = vmul.f32 %v1831, %v2390
      %v2419 = vmul.f32 %v2022, %v2394
      %v2420 = vmul.f32 %v2024, %v2398
      %v2421 = vmul.f32 %v2215, %v2402
      %v2422 = vmul.f32 %v2217, %v2406
      %v2423 = vmul.f32 %v1640, %v2378
      %v2424 = vmul.f32 %v1642, %v2382
      %v2425 = vmul.f32 %v1833, %v2386
      %v2426 = vmul.f32 %v1835, %v2390
      %v2427 = vmul.f32 %v2026, %v2394
      %v2428 = vmul.f32 %v2028, %v2398
      %v2429 = vmul.f32 %v2219, %v2402
      %v2430 = vmul.f32 %v2221, %v2406
      %v2431 = vmul.f32 %v1646, %v2378
      %v2432 = vmul.f32 %v1648, %v2382
      %v2433 = vmul.f32 %v1839, %v2386
      %v2434 = vmul.f32 %v1841, %v2390
      %v2435 = vmul.f32 %v2032, %v2394
      %v2436 = vmul.f32 %v2034, %v2398
      %v2437 = vmul.f32 %v2225, %v2402
      %v2438 = vmul.f32 %v2227, %v2406
      %v2439 = vmul.f32 %v1650, %v2378
      %v2440 = vmul.f32 %v1652, %v2382
      %v2441 = vmul.f32 %v1843, %v2386
      %v2442 = vmul.f32 %v1845, %v2390
      %v2443 = vmul.f32 %v2036, %v2394
      %v2444 = vmul.f32 %v2038, %v2398
      %v2445 = vmul.f32 %v2229, %v2402
      %v2446 = vmul.f32 %v2231, %v2406
      %v2447 = vmul.f32 %v1656, %v2378
      %v2448 = vmul.f32 %v1658, %v2382
      %v2449 = vmul.f32 %v1849, %v2386
      %v2450 = vmul.f32 %v1851, %v2390
      %v2451 = vmul.f32 %v2042, %v2394
      %v2452 = vmul.f32 %v2044, %v2398
      %v2453 = vmul.f32 %v2235, %v2402
      %v2454 = vmul.f32 %v2237, %v2406
      %v2455 = vmul.f32 %v1660, %v2378
      %v2456 = vmul.f32 %v1662, %v2382
      %v2457 = vmul.f32 %v1853, %v2386
      %v2458 = vmul.f32 %v1855, %v2390
      %v2459 = vmul.f32 %v2046, %v2394
      %v2460 = vmul.f32 %v2048, %v2398
      %v2461 = vmul.f32 %v2239, %v2402
      %v2462 = vmul.f32 %v2241, %v2406
      %v2463 = vmul.f32 %v1666, %v2378
      %v2464 = vmul.f32 %v1668, %v2382
      %v2465 = vmul.f32 %v1859, %v2386
      %v2466 = vmul.f32 %v1861, %v2390
      %v2467 = vmul.f32 %v2052, %v2394
      %v2468 = vmul.f32 %v2054, %v2398
      %v2469 = vmul.f32 %v2245, %v2402
      %v2470 = vmul.f32 %v2247, %v2406
      %v2471 = vmul.f32 %v1670, %v2378
      %v2472 = vmul.f32 %v1672, %v2382
      %v2473 = vmul.f32 %v1863, %v2386
      %v2474 = vmul.f32 %v1865, %v2390
      %v2475 = vmul.f32 %v2056, %v2394
      %v2476 = vmul.f32 %v2058, %v2398
      %v2477 = vmul.f32 %v2249, %v2402
      %v2478 = vmul.f32 %v2251, %v2406
      %v2479 = vmul.f32 %v1676, %v2378
      %v2480 = vmul.f32 %v1678, %v2382
      %v2481 = vmul.f32 %v1869, %v2386
      %v2482 = vmul.f32 %v1871, %v2390
      %v2483 = vmul.f32 %v2062, %v2394
      %v2484 = vmul.f32 %v2064, %v2398
      %v2485 = vmul.f32 %v2255, %v2402
      %v2486 = vmul.f32 %v2257, %v2406
      %v2487 = vmul.f32 %v1680, %v2378
      %v2488 = vmul.f32 %v1682, %v2382
      %v2489 = vmul.f32 %v1873, %v2386
      %v2490 = vmul.f32 %v1875, %v2390
      %v2491 = vmul.f32 %v2066, %v2394
      %v2492 = vmul.f32 %v2068, %v2398
      %v2493 = vmul.f32 %v2259, %v2402
      %v2494 = vmul.f32 %v2261, %v2406
      %v2495 = vmul.f32 %v1686, %v2378
      %v2496 = vmul.f32 %v1688, %v2382
      %v2497 = vmul.f32 %v1879, %v2386
      %v2498 = vmul.f32 %v1881, %v2390
      %v2499 = vmul.f32 %v2072, %v2394
      %v2500 = vmul.f32 %v2074, %v2398
      %v2501 = vmul.f32 %v2265, %v2402
      %v2502 = vmul.f32 %v2267, %v2406
      %v2503 = vmul.f32 %v1690, %v2378
      %v2504 = vmul.f32 %v1692, %v2382
      %v2505 = vmul.f32 %v1883, %v2386
      %v2506 = vmul.f32 %v1885, %v2390
      %v2507 = vmul.f32 %v2076, %v2394
      %v2508 = vmul.f32 %v2078, %v2398
      %v2509 = vmul.f32 %v2269, %v2402
      %v2510 = vmul.f32 %v2271, %v2406
      %v2511 = vmul.f32 %v1696, %v2378
      %v2512 = vmul.f32 %v1698, %v2382
      %v2513 = vmul.f32 %v1889, %v2386
      %v2514 = vmul.f32 %v1891, %v2390
      %v2515 = vmul.f32 %v2082, %v2394
      %v2516 = vmul.f32 %v2084, %v2398
      %v2517 = vmul.f32 %v2275, %v2402
      %v2518 = vmul.f32 %v2277, %v2406
      %v2519 = vmul.f32 %v1700, %v2378
      %v2520 = vmul.f32 %v1702, %v2382
      %v2521 = vmul.f32 %v1893, %v2386
      %v2522 = vmul.f32 %v1895, %v2390
      %v2523 = vmul.f32 %v2086, %v2394
      %v2524 = vmul.f32 %v2088, %v2398
      %v2525 = vmul.f32 %v2279, %v2402
      %v2526 = vmul.f32 %v2281, %v2406
      %v2527 = vmul.f32 %v1706, %v2378
      %v2528 = vmul.f32 %v1708, %v2382
      %v2529 = vmul.f32 %v1899, %v2386
      %v2530 = vmul.f32 %v1901, %v2390
      %v2531 = vmul.f32 %v2092, %v2394
      %v2532 = vmul.f32 %v2094, %v2398
      %v2533 = vmul.f32 %v2285, %v2402
      %v2534 = vmul.f32 %v2287, %v2406
      %v2535 = vmul.f32 %v1710, %v2378
      %v2536 = vmul.f32 %v1712, %v2382
      %v2537 = vmul.f32 %v1903, %v2386
      %v2538 = vmul.f32 %v1905, %v2390
      %v2539 = vmul.f32 %v2096, %v2394
      %v2540 = vmul.f32 %v2098, %v2398
      %v2541 = vmul.f32 %v2289, %v2402
      %v2542 = vmul.f32 %v2291, %v2406
      %v2543 = vmul.f32 %v1716, %v2378
      %v2544 = vmul.f32 %v1718, %v2382
      %v2545 = vmul.f32 %v1909, %v2386
      %v2546 = vmul.f32 %v1911, %v2390
      %v2547 = vmul.f32 %v2102, %v2394
      %v2548 = vmul.f32 %v2104, %v2398
      %v2549 = vmul.f32 %v2295, %v2402
      %v2550 = vmul.f32 %v2297, %v2406
      %v2551 = vmul.f32 %v1720, %v2378
      %v2552 = vmul.f32 %v1722, %v2382
      %v2553 = vmul.f32 %v1913, %v2386
      %v2554 = vmul.f32 %v1915, %v2390
      %v2555 = vmul.f32 %v2106, %v2394
      %v2556 = vmul.f32 %v2108, %v2398
      %v2557 = vmul.f32 %v2299, %v2402
      %v2558 = vmul.f32 %v2301, %v2406
      %v2559 = vmul.f32 %v1726, %v2378
      %v2560 = vmul.f32 %v1728, %v2382
      %v2561 = vmul.f32 %v1919, %v2386
      %v2562 = vmul.f32 %v1921, %v2390
      %v2563 = vmul.f32 %v2112, %v2394
      %v2564 = vmul.f32 %v2114, %v2398
      %v2565 = vmul.f32 %v2305, %v2402
      %v2566 = vmul.f32 %v2307, %v2406
      %v2567 = vmul.f32 %v1730, %v2378
      %v2568 = vmul.f32 %v1732, %v2382
      %v2569 = vmul.f32 %v1923, %v2386
      %v2570 = vmul.f32 %v1925, %v2390
      %v2571 = vmul.f32 %v2116, %v2394
      %v2572 = vmul.f32 %v2118, %v2398
      %v2573 = vmul.f32 %v2309, %v2402
      %v2574 = vmul.f32 %v2311, %v2406
      %v2575 = vmul.f32 %v1736, %v2378
      %v2576 = vmul.f32 %v1738, %v2382
      %v2577 = vmul.f32 %v1929, %v2386
      %v2578 = vmul.f32 %v1931, %v2390
      %v2579 = vmul.f32 %v2122, %v2394
      %v2580 = vmul.f32 %v2124, %v2398
      %v2581 = vmul.f32 %v2315, %v2402
      %v2582 = vmul.f32 %v2317, %v2406
      %v2583 = vmul.f32 %v1740, %v2378
      %v2584 = vmul.f32 %v1742, %v2382
      %v2585 = vmul.f32 %v1933, %v2386
      %v2586 = vmul.f32 %v1935, %v2390
      %v2587 = vmul.f32 %v2126, %v2394
      %v2588 = vmul.f32 %v2128, %v2398
      %v2589 = vmul.f32 %v2319, %v2402
      %v2590 = vmul.f32 %v2321, %v2406
      %v2591 = vmul.f32 %v1746, %v2378
      %v2592 = vmul.f32 %v1748, %v2382
      %v2593 = vmul.f32 %v1939, %v2386
      %v2594 = vmul.f32 %v1941, %v2390
      %v2595 = vmul.f32 %v2132, %v2394
      %v2596 = vmul.f32 %v2134, %v2398
      %v2597 = vmul.f32 %v2325, %v2402
      %v2598 = vmul.f32 %v2327, %v2406
      %v2599 = vmul.f32 %v1750, %v2378
      %v2600 = vmul.f32 %v1752, %v2382
      %v2601 = vmul.f32 %v1943, %v2386
      %v2602 = vmul.f32 %v1945, %v2390
      %v2603 = vmul.f32 %v2136, %v2394
      %v2604 = vmul.f32 %v2138, %v2398
      %v2605 = vmul.f32 %v2329, %v2402
      %v2606 = vmul.f32 %v2331, %v2406
      %v2607 = vmul.f32 %v1756, %v2378
      %v2608 = vmul.f32 %v1758, %v2382
      %v2609 = vmul.f32 %v1949, %v2386
      %v2610 = vmul.f32 %v1951, %v2390
      %v2611 = vmul.f32 %v2142, %v2394
      %v2612 = vmul.f32 %v2144, %v2398
      %v2613 = vmul.f32 %v2335, %v2402
      %v2614 = vmul.f32 %v2337, %v2406
      %v2615 = vmul.f32 %v1760, %v2378
      %v2616 = vmul.f32 %v1762, %v2382
      %v2617 = vmul.f32 %v1953, %v2386
      %v2618 = vmul.f32 %v1955, %v2390
      %v2619 = vmul.f32 %v2146, %v2394
      %v2620 = vmul.f32 %v2148, %v2398
      %v2621 = vmul.f32 %v2339, %v2402
      %v2622 = vmul.f32 %v2341, %v2406
      %v2623 = vmul.f32 %v1766, %v2378
      %v2624 = vmul.f32 %v1768, %v2382
      %v2625 = vmul.f32 %v1959, %v2386
      %v2626 = vmul.f32 %v1961, %v2390
      %v2627 = vmul.f32 %v2152, %v2394
      %v2628 = vmul.f32 %v2154, %v2398
      %v2629 = vmul.f32 %v2345, %v2402
      %v2630 = vmul.f32 %v2347, %v2406
      %v2631 = vmul.f32 %v1770, %v2378
      %v2632 = vmul.f32 %v1772, %v2382
      %v2633 = vmul.f32 %v1963, %v2386
      %v2634 = vmul.f32 %v1965, %v2390
      %v2635 = vmul.f32 %v2156, %v2394
      %v2636 = vmul.f32 %v2158, %v2398
      %v2637 = vmul.f32 %v2349, %v2402
      %v2638 = vmul.f32 %v2351, %v2406
      %v2639 = vmul.f32 %v1776, %v2378
      %v2640 = vmul.f32 %v1778, %v2382
      %v2641 = vmul.f32 %v1969, %v2386
      %v2642 = vmul.f32 %v1971, %v2390
      %v2643 = vmul.f32 %v2162, %v2394
      %v2644 = vmul.f32 %v2164, %v2398
      %v2645 = vmul.f32 %v2355, %v2402
      %v2646 = vmul.f32 %v2357, %v2406
      %v2647 = vmul.f32 %v1780, %v2378
      %v2648 = vmul.f32 %v1782, %v2382
      %v2649 = vmul.f32 %v1973, %v2386
      %v2650 = vmul.f32 %v1975, %v2390
      %v2651 = vmul.f32 %v2166, %v2394
      %v2652 = vmul.f32 %v2168, %v2398
      %v2653 = vmul.f32 %v2359, %v2402
      %v2654 = vmul.f32 %v2361, %v2406
      %v2655 = vmul.f32 %v1786, %v2378
      %v2656 = vmul.f32 %v1788, %v2382
      %v2657 = vmul.f32 %v1979, %v2386
      %v2658 = vmul.f32 %v1981, %v2390
      %v2659 = vmul.f32 %v2172, %v2394
      %v2660 = vmul.f32 %v2174, %v2398
      %v2661 = vmul.f32 %v2365, %v2402
      %v2662 = vmul.f32 %v2367, %v2406
      %v2663 = vmul.f32 %v1790, %v2378
      %v2664 = vmul.f32 %v1792, %v2382
      %v2665 = vmul.f32 %v1983, %v2386
      %v2666 = vmul.f32 %v1985, %v2390
      %v2667 = vmul.f32 %v2176, %v2394
      %v2668 = vmul.f32 %v2178, %v2398
      %v2669 = vmul.f32 %v2369, %v2402
      %v2670 = vmul.f32 %v2371, %v2406
      %v2671 = vld [vmem:[%s9] sm:$0xff]
      %v2673 = vlaneseq
      %v2674 = vshrl.u32 %v2673, 7
      %v2675 = vsub.s32 0, %v2674
      %v2676 = vrot.slane %v2671, %v2675
      %v2677 = vlaneseq
      %v2678 = vshrl.u32 %v2677, 7
      %v2679 = vsub.s32 1, %v2678
      %v2680 = vrot.slane %v2671, %v2679
      %v2681 = vlaneseq
      %v2682 = vshrl.u32 %v2681, 7
      %v2683 = vsub.s32 2, %v2682
      %v2684 = vrot.slane %v2671, %v2683
      %v2685 = vlaneseq
      %v2686 = vshrl.u32 %v2685, 7
      %v2687 = vsub.s32 3, %v2686
      %v2688 = vrot.slane %v2671, %v2687
      %v2689 = vlaneseq
      %v2690 = vshrl.u32 %v2689, 7
      %v2691 = vsub.s32 4, %v2690
      %v2692 = vrot.slane %v2671, %v2691
      %v2693 = vlaneseq
      %v2694 = vshrl.u32 %v2693, 7
      %v2695 = vsub.s32 5, %v2694
      %v2696 = vrot.slane %v2671, %v2695
      %v2697 = vlaneseq
      %v2698 = vshrl.u32 %v2697, 7
      %v2699 = vsub.s32 6, %v2698
      %v2700 = vrot.slane %v2671, %v2699
      %v2701 = vlaneseq
      %v2702 = vshrl.u32 %v2701, 7
      %v2703 = vsub.s32 7, %v2702
      %v2704 = vrot.slane %v2671, %v2703
      %v2713 = vadd.f32 %v2415, %v2676
      %v2714 = vadd.f32 %v2416, %v2680
      %v2715 = vadd.f32 %v2417, %v2684
      %v2716 = vadd.f32 %v2418, %v2688
      %v2717 = vadd.f32 %v2419, %v2692
      %v2718 = vadd.f32 %v2420, %v2696
      %v2719 = vadd.f32 %v2421, %v2700
      %v2720 = vadd.f32 %v2422, %v2704
      %v2721 = vadd.f32 %v2423, %v2676
      %v2722 = vadd.f32 %v2424, %v2680
      %v2723 = vadd.f32 %v2425, %v2684
      %v2724 = vadd.f32 %v2426, %v2688
      %v2725 = vadd.f32 %v2427, %v2692
      %v2726 = vadd.f32 %v2428, %v2696
      %v2727 = vadd.f32 %v2429, %v2700
      %v2728 = vadd.f32 %v2430, %v2704
      %v2729 = vadd.f32 %v2431, %v2676
      %v2730 = vadd.f32 %v2432, %v2680
      %v2731 = vadd.f32 %v2433, %v2684
      %v2732 = vadd.f32 %v2434, %v2688
      %v2733 = vadd.f32 %v2435, %v2692
      %v2734 = vadd.f32 %v2436, %v2696
      %v2735 = vadd.f32 %v2437, %v2700
      %v2736 = vadd.f32 %v2438, %v2704
      %v2737 = vadd.f32 %v2439, %v2676
      %v2738 = vadd.f32 %v2440, %v2680
      %v2739 = vadd.f32 %v2441, %v2684
      %v2740 = vadd.f32 %v2442, %v2688
      %v2741 = vadd.f32 %v2443, %v2692
      %v2742 = vadd.f32 %v2444, %v2696
      %v2743 = vadd.f32 %v2445, %v2700
      %v2744 = vadd.f32 %v2446, %v2704
      %v2745 = vadd.f32 %v2447, %v2676
      %v2746 = vadd.f32 %v2448, %v2680
      %v2747 = vadd.f32 %v2449, %v2684
      %v2748 = vadd.f32 %v2450, %v2688
      %v2749 = vadd.f32 %v2451, %v2692
      %v2750 = vadd.f32 %v2452, %v2696
      %v2751 = vadd.f32 %v2453, %v2700
      %v2752 = vadd.f32 %v2454, %v2704
      %v2753 = vadd.f32 %v2455, %v2676
      %v2754 = vadd.f32 %v2456, %v2680
      %v2755 = vadd.f32 %v2457, %v2684
      %v2756 = vadd.f32 %v2458, %v2688
      %v2757 = vadd.f32 %v2459, %v2692
      %v2758 = vadd.f32 %v2460, %v2696
      %v2759 = vadd.f32 %v2461, %v2700
      %v2760 = vadd.f32 %v2462, %v2704
      %v2761 = vadd.f32 %v2463, %v2676
      %v2762 = vadd.f32 %v2464, %v2680
      %v2763 = vadd.f32 %v2465, %v2684
      %v2764 = vadd.f32 %v2466, %v2688
      %v2765 = vadd.f32 %v2467, %v2692
      %v2766 = vadd.f32 %v2468, %v2696
      %v2767 = vadd.f32 %v2469, %v2700
      %v2768 = vadd.f32 %v2470, %v2704
      %v2769 = vadd.f32 %v2471, %v2676
      %v2770 = vadd.f32 %v2472, %v2680
      %v2771 = vadd.f32 %v2473, %v2684
      %v2772 = vadd.f32 %v2474, %v2688
      %v2773 = vadd.f32 %v2475, %v2692
      %v2774 = vadd.f32 %v2476, %v2696
      %v2775 = vadd.f32 %v2477, %v2700
      %v2776 = vadd.f32 %v2478, %v2704
      %v2777 = vadd.f32 %v2479, %v2676
      %v2778 = vadd.f32 %v2480, %v2680
      %v2779 = vadd.f32 %v2481, %v2684
      %v2780 = vadd.f32 %v2482, %v2688
      %v2781 = vadd.f32 %v2483, %v2692
      %v2782 = vadd.f32 %v2484, %v2696
      %v2783 = vadd.f32 %v2485, %v2700
      %v2784 = vadd.f32 %v2486, %v2704
      %v2785 = vadd.f32 %v2487, %v2676
      %v2786 = vadd.f32 %v2488, %v2680
      %v2787 = vadd.f32 %v2489, %v2684
      %v2788 = vadd.f32 %v2490, %v2688
      %v2789 = vadd.f32 %v2491, %v2692
      %v2790 = vadd.f32 %v2492, %v2696
      %v2791 = vadd.f32 %v2493, %v2700
      %v2792 = vadd.f32 %v2494, %v2704
      %v2793 = vadd.f32 %v2495, %v2676
      %v2794 = vadd.f32 %v2496, %v2680
      %v2795 = vadd.f32 %v2497, %v2684
      %v2796 = vadd.f32 %v2498, %v2688
      %v2797 = vadd.f32 %v2499, %v2692
      %v2798 = vadd.f32 %v2500, %v2696
      %v2799 = vadd.f32 %v2501, %v2700
      %v2800 = vadd.f32 %v2502, %v2704
      %v2801 = vadd.f32 %v2503, %v2676
      %v2802 = vadd.f32 %v2504, %v2680
      %v2803 = vadd.f32 %v2505, %v2684
      %v2804 = vadd.f32 %v2506, %v2688
      %v2805 = vadd.f32 %v2507, %v2692
      %v2806 = vadd.f32 %v2508, %v2696
      %v2807 = vadd.f32 %v2509, %v2700
      %v2808 = vadd.f32 %v2510, %v2704
      %v2809 = vadd.f32 %v2511, %v2676
      %v2810 = vadd.f32 %v2512, %v2680
      %v2811 = vadd.f32 %v2513, %v2684
      %v2812 = vadd.f32 %v2514, %v2688
      %v2813 = vadd.f32 %v2515, %v2692
      %v2814 = vadd.f32 %v2516, %v2696
      %v2815 = vadd.f32 %v2517, %v2700
      %v2816 = vadd.f32 %v2518, %v2704
      %v2817 = vadd.f32 %v2519, %v2676
      %v2818 = vadd.f32 %v2520, %v2680
      %v2819 = vadd.f32 %v2521, %v2684
      %v2820 = vadd.f32 %v2522, %v2688
      %v2821 = vadd.f32 %v2523, %v2692
      %v2822 = vadd.f32 %v2524, %v2696
      %v2823 = vadd.f32 %v2525, %v2700
      %v2824 = vadd.f32 %v2526, %v2704
      %v2825 = vadd.f32 %v2527, %v2676
      %v2826 = vadd.f32 %v2528, %v2680
      %v2827 = vadd.f32 %v2529, %v2684
      %v2828 = vadd.f32 %v2530, %v2688
      %v2829 = vadd.f32 %v2531, %v2692
      %v2830 = vadd.f32 %v2532, %v2696
      %v2831 = vadd.f32 %v2533, %v2700
      %v2832 = vadd.f32 %v2534, %v2704
      %v2833 = vadd.f32 %v2535, %v2676
      %v2834 = vadd.f32 %v2536, %v2680
      %v2835 = vadd.f32 %v2537, %v2684
      %v2836 = vadd.f32 %v2538, %v2688
      %v2837 = vadd.f32 %v2539, %v2692
      %v2838 = vadd.f32 %v2540, %v2696
      %v2839 = vadd.f32 %v2541, %v2700
      %v2840 = vadd.f32 %v2542, %v2704
      %v2841 = vadd.f32 %v2543, %v2676
      %v2842 = vadd.f32 %v2544, %v2680
      %v2843 = vadd.f32 %v2545, %v2684
      %v2844 = vadd.f32 %v2546, %v2688
      %v2845 = vadd.f32 %v2547, %v2692
      %v2846 = vadd.f32 %v2548, %v2696
      %v2847 = vadd.f32 %v2549, %v2700
      %v2848 = vadd.f32 %v2550, %v2704
      %v2849 = vadd.f32 %v2551, %v2676
      %v2850 = vadd.f32 %v2552, %v2680
      %v2851 = vadd.f32 %v2553, %v2684
      %v2852 = vadd.f32 %v2554, %v2688
      %v2853 = vadd.f32 %v2555, %v2692
      %v2854 = vadd.f32 %v2556, %v2696
      %v2855 = vadd.f32 %v2557, %v2700
      %v2856 = vadd.f32 %v2558, %v2704
      %v2857 = vadd.f32 %v2559, %v2676
      %v2858 = vadd.f32 %v2560, %v2680
      %v2859 = vadd.f32 %v2561, %v2684
      %v2860 = vadd.f32 %v2562, %v2688
      %v2861 = vadd.f32 %v2563, %v2692
      %v2862 = vadd.f32 %v2564, %v2696
      %v2863 = vadd.f32 %v2565, %v2700
      %v2864 = vadd.f32 %v2566, %v2704
      %v2865 = vadd.f32 %v2567, %v2676
      %v2866 = vadd.f32 %v2568, %v2680
      %v2867 = vadd.f32 %v2569, %v2684
      %v2868 = vadd.f32 %v2570, %v2688
      %v2869 = vadd.f32 %v2571, %v2692
      %v2870 = vadd.f32 %v2572, %v2696
      %v2871 = vadd.f32 %v2573, %v2700
      %v2872 = vadd.f32 %v2574, %v2704
      %v2873 = vadd.f32 %v2575, %v2676
      %v2874 = vadd.f32 %v2576, %v2680
      %v2875 = vadd.f32 %v2577, %v2684
      %v2876 = vadd.f32 %v2578, %v2688
      %v2877 = vadd.f32 %v2579, %v2692
      %v2878 = vadd.f32 %v2580, %v2696
      %v2879 = vadd.f32 %v2581, %v2700
      %v2880 = vadd.f32 %v2582, %v2704
      %v2881 = vadd.f32 %v2583, %v2676
      %v2882 = vadd.f32 %v2584, %v2680
      %v2883 = vadd.f32 %v2585, %v2684
      %v2884 = vadd.f32 %v2586, %v2688
      %v2885 = vadd.f32 %v2587, %v2692
      %v2886 = vadd.f32 %v2588, %v2696
      %v2887 = vadd.f32 %v2589, %v2700
      %v2888 = vadd.f32 %v2590, %v2704
      %v2889 = vadd.f32 %v2591, %v2676
      %v2890 = vadd.f32 %v2592, %v2680
      %v2891 = vadd.f32 %v2593, %v2684
      %v2892 = vadd.f32 %v2594, %v2688
      %v2893 = vadd.f32 %v2595, %v2692
      %v2894 = vadd.f32 %v2596, %v2696
      %v2895 = vadd.f32 %v2597, %v2700
      %v2896 = vadd.f32 %v2598, %v2704
      %v2897 = vadd.f32 %v2599, %v2676
      %v2898 = vadd.f32 %v2600, %v2680
      %v2899 = vadd.f32 %v2601, %v2684
      %v2900 = vadd.f32 %v2602, %v2688
      %v2901 = vadd.f32 %v2603, %v2692
      %v2902 = vadd.f32 %v2604, %v2696
      %v2903 = vadd.f32 %v2605, %v2700
      %v2904 = vadd.f32 %v2606, %v2704
      %v2905 = vadd.f32 %v2607, %v2676
      %v2906 = vadd.f32 %v2608, %v2680
      %v2907 = vadd.f32 %v2609, %v2684
      %v2908 = vadd.f32 %v2610, %v2688
      %v2909 = vadd.f32 %v2611, %v2692
      %v2910 = vadd.f32 %v2612, %v2696
      %v2911 = vadd.f32 %v2613, %v2700
      %v2912 = vadd.f32 %v2614, %v2704
      %v2913 = vadd.f32 %v2615, %v2676
      %v2914 = vadd.f32 %v2616, %v2680
      %v2915 = vadd.f32 %v2617, %v2684
      %v2916 = vadd.f32 %v2618, %v2688
      %v2917 = vadd.f32 %v2619, %v2692
      %v2918 = vadd.f32 %v2620, %v2696
      %v2919 = vadd.f32 %v2621, %v2700
      %v2920 = vadd.f32 %v2622, %v2704
      %v2921 = vadd.f32 %v2623, %v2676
      %v2922 = vadd.f32 %v2624, %v2680
      %v2923 = vadd.f32 %v2625, %v2684
      %v2924 = vadd.f32 %v2626, %v2688
      %v2925 = vadd.f32 %v2627, %v2692
      %v2926 = vadd.f32 %v2628, %v2696
      %v2927 = vadd.f32 %v2629, %v2700
      %v2928 = vadd.f32 %v2630, %v2704
      %v2929 = vadd.f32 %v2631, %v2676
      %v2930 = vadd.f32 %v2632, %v2680
      %v2931 = vadd.f32 %v2633, %v2684
      %v2932 = vadd.f32 %v2634, %v2688
      %v2933 = vadd.f32 %v2635, %v2692
      %v2934 = vadd.f32 %v2636, %v2696
      %v2935 = vadd.f32 %v2637, %v2700
      %v2936 = vadd.f32 %v2638, %v2704
      %v2937 = vadd.f32 %v2639, %v2676
      %v2938 = vadd.f32 %v2640, %v2680
      %v2939 = vadd.f32 %v2641, %v2684
      %v2940 = vadd.f32 %v2642, %v2688
      %v2941 = vadd.f32 %v2643, %v2692
      %v2942 = vadd.f32 %v2644, %v2696
      %v2943 = vadd.f32 %v2645, %v2700
      %v2944 = vadd.f32 %v2646, %v2704
      %v2945 = vadd.f32 %v2647, %v2676
      %v2946 = vadd.f32 %v2648, %v2680
      %v2947 = vadd.f32 %v2649, %v2684
      %v2948 = vadd.f32 %v2650, %v2688
      %v2949 = vadd.f32 %v2651, %v2692
      %v2950 = vadd.f32 %v2652, %v2696
      %v2951 = vadd.f32 %v2653, %v2700
      %v2952 = vadd.f32 %v2654, %v2704
      %v2953 = vadd.f32 %v2655, %v2676
      %v2954 = vadd.f32 %v2656, %v2680
      %v2955 = vadd.f32 %v2657, %v2684
      %v2956 = vadd.f32 %v2658, %v2688
      %v2957 = vadd.f32 %v2659, %v2692
      %v2958 = vadd.f32 %v2660, %v2696
      %v2959 = vadd.f32 %v2661, %v2700
      %v2960 = vadd.f32 %v2662, %v2704
      %v2961 = vadd.f32 %v2663, %v2676
      %v2962 = vadd.f32 %v2664, %v2680
      %v2963 = vadd.f32 %v2665, %v2684
      %v2964 = vadd.f32 %v2666, %v2688
      %v2965 = vadd.f32 %v2667, %v2692
      %v2966 = vadd.f32 %v2668, %v2696
      %v2967 = vadd.f32 %v2669, %v2700
      %v2968 = vadd.f32 %v2670, %v2704
      %s2969 = smul.u32 %s26, 256
      %v2970 = vlaneseq
      %v2971 = vshrl.u32 %v2970, 7
      %v2972 = vadd.s32 %v2971, 8
      %v2973 = vadd.s32 %v2971, 16
      %v2974 = vadd.s32 %v2971, 24
      %v2975 = vadd.s32 %v2971, 32
      %v2976 = vadd.s32 %v2971, 40
      %v2977 = vadd.s32 %v2971, 48
      %v2978 = vadd.s32 %v2971, 56
      %v2979 = vadd.s32 %v2971, 64
      %v2980 = vadd.s32 %v2971, 72
      %v2981 = vadd.s32 %v2971, 80
      %v2982 = vadd.s32 %v2971, 88
      %v2983 = vadd.s32 %v2971, 96
      %v2984 = vadd.s32 %v2971, 104
      %v2985 = vadd.s32 %v2971, 112
      %v2986 = vadd.s32 %v2971, 120
      %v2987 = vadd.s32 %v2971, 128
      %v2988 = vadd.s32 %v2971, 136
      %v2989 = vadd.s32 %v2971, 144
      %v2990 = vadd.s32 %v2971, 152
      %v2991 = vadd.s32 %v2971, 160
      %v2992 = vadd.s32 %v2971, 168
      %v2993 = vadd.s32 %v2971, 176
      %v2994 = vadd.s32 %v2971, 184
      %v2995 = vadd.s32 %v2971, 192
      %v2996 = vadd.s32 %v2971, 200
      %v2997 = vadd.s32 %v2971, 208
      %v2998 = vadd.s32 %v2971, 216
      %v2999 = vadd.s32 %v2971, 224
      %v3000 = vadd.s32 %v2971, 232
      %v3001 = vadd.s32 %v2971, 240
      %v3002 = vadd.s32 %v2971, 248
      %v3003 = vstv %s2969
      %v3004 = vadd.s32 %v3003, %v2971
      %v3005 = vadd.s32 %v3003, %v2972
      %v3006 = vadd.s32 %v3003, %v2973
      %v3007 = vadd.s32 %v3003, %v2974
      %v3008 = vadd.s32 %v3003, %v2975
      %v3009 = vadd.s32 %v3003, %v2976
      %v3010 = vadd.s32 %v3003, %v2977
      %v3011 = vadd.s32 %v3003, %v2978
      %v3012 = vadd.s32 %v3003, %v2979
      %v3013 = vadd.s32 %v3003, %v2980
      %v3014 = vadd.s32 %v3003, %v2981
      %v3015 = vadd.s32 %v3003, %v2982
      %v3016 = vadd.s32 %v3003, %v2983
      %v3017 = vadd.s32 %v3003, %v2984
      %v3018 = vadd.s32 %v3003, %v2985
      %v3019 = vadd.s32 %v3003, %v2986
      %v3020 = vadd.s32 %v3003, %v2987
      %v3021 = vadd.s32 %v3003, %v2988
      %v3022 = vadd.s32 %v3003, %v2989
      %v3023 = vadd.s32 %v3003, %v2990
      %v3024 = vadd.s32 %v3003, %v2991
      %v3025 = vadd.s32 %v3003, %v2992
      %v3026 = vadd.s32 %v3003, %v2993
      %v3027 = vadd.s32 %v3003, %v2994
      %v3028 = vadd.s32 %v3003, %v2995
      %v3029 = vadd.s32 %v3003, %v2996
      %v3030 = vadd.s32 %v3003, %v2997
      %v3031 = vadd.s32 %v3003, %v2998
      %v3032 = vadd.s32 %v3003, %v2999
      %v3033 = vadd.s32 %v3003, %v3000
      %v3034 = vadd.s32 %v3003, %v3001
      %v3035 = vadd.s32 %v3003, %v3002
      %vm3036 = vcmp.lt.s32.totalorder %v3004, 720
      %vm3037 = vcmp.lt.s32.totalorder %v3005, 720
      %vm3038 = vcmp.lt.s32.totalorder %v3006, 720
      %vm3039 = vcmp.lt.s32.totalorder %v3007, 720
      %vm3040 = vcmp.lt.s32.totalorder %v3008, 720
      %vm3041 = vcmp.lt.s32.totalorder %v3009, 720
      %vm3042 = vcmp.lt.s32.totalorder %v3010, 720
      %vm3043 = vcmp.lt.s32.totalorder %v3011, 720
      %vm3044 = vcmp.lt.s32.totalorder %v3012, 720
      %vm3045 = vcmp.lt.s32.totalorder %v3013, 720
      %vm3046 = vcmp.lt.s32.totalorder %v3014, 720
      %vm3047 = vcmp.lt.s32.totalorder %v3015, 720
      %vm3048 = vcmp.lt.s32.totalorder %v3016, 720
      %vm3049 = vcmp.lt.s32.totalorder %v3017, 720
      %vm3050 = vcmp.lt.s32.totalorder %v3018, 720
      %vm3051 = vcmp.lt.s32.totalorder %v3019, 720
      %vm3052 = vcmp.lt.s32.totalorder %v3020, 720
      %vm3053 = vcmp.lt.s32.totalorder %v3021, 720
      %vm3054 = vcmp.lt.s32.totalorder %v3022, 720
      %vm3055 = vcmp.lt.s32.totalorder %v3023, 720
      %vm3056 = vcmp.lt.s32.totalorder %v3024, 720
      %vm3057 = vcmp.lt.s32.totalorder %v3025, 720
      %vm3058 = vcmp.lt.s32.totalorder %v3026, 720
      %vm3059 = vcmp.lt.s32.totalorder %v3027, 720
      %vm3060 = vcmp.lt.s32.totalorder %v3028, 720
      %vm3061 = vcmp.lt.s32.totalorder %v3029, 720
      %vm3062 = vcmp.lt.s32.totalorder %v3030, 720
      %vm3063 = vcmp.lt.s32.totalorder %v3031, 720
      %vm3064 = vcmp.lt.s32.totalorder %v3032, 720
      %vm3065 = vcmp.lt.s32.totalorder %v3033, 720
      %vm3066 = vcmp.lt.s32.totalorder %v3034, 720
      %vm3067 = vcmp.lt.s32.totalorder %v3035, 720
      %v3068 = vsel %vm3036, 1, 0
      %v3069 = vsel %vm3037, 1, 0
      %v3070 = vsel %vm3038, 1, 0
      %v3071 = vsel %vm3039, 1, 0
      %v3072 = vsel %vm3040, 1, 0
      %v3073 = vsel %vm3041, 1, 0
      %v3074 = vsel %vm3042, 1, 0
      %v3075 = vsel %vm3043, 1, 0
      %v3076 = vsel %vm3044, 1, 0
      %v3077 = vsel %vm3045, 1, 0
      %v3078 = vsel %vm3046, 1, 0
      %v3079 = vsel %vm3047, 1, 0
      %v3080 = vsel %vm3048, 1, 0
      %v3081 = vsel %vm3049, 1, 0
      %v3082 = vsel %vm3050, 1, 0
      %v3083 = vsel %vm3051, 1, 0
      %v3084 = vsel %vm3052, 1, 0
      %v3085 = vsel %vm3053, 1, 0
      %v3086 = vsel %vm3054, 1, 0
      %v3087 = vsel %vm3055, 1, 0
      %v3088 = vsel %vm3056, 1, 0
      %v3089 = vsel %vm3057, 1, 0
      %v3090 = vsel %vm3058, 1, 0
      %v3091 = vsel %vm3059, 1, 0
      %v3092 = vsel %vm3060, 1, 0
      %v3093 = vsel %vm3061, 1, 0
      %v3094 = vsel %vm3062, 1, 0
      %v3095 = vsel %vm3063, 1, 0
      %v3096 = vsel %vm3064, 1, 0
      %v3097 = vsel %vm3065, 1, 0
      %v3098 = vsel %vm3066, 1, 0
      %v3099 = vsel %vm3067, 1, 0
      %vm3100 = vcmp.eq.s32.totalorder %v3068, 1
      %vm3101 = vcmp.eq.s32.totalorder %v3069, 1
      %vm3102 = vcmp.eq.s32.totalorder %v3070, 1
      %vm3103 = vcmp.eq.s32.totalorder %v3071, 1
      %vm3104 = vcmp.eq.s32.totalorder %v3072, 1
      %vm3105 = vcmp.eq.s32.totalorder %v3073, 1
      %vm3106 = vcmp.eq.s32.totalorder %v3074, 1
      %vm3107 = vcmp.eq.s32.totalorder %v3075, 1
      %vm3108 = vcmp.eq.s32.totalorder %v3076, 1
      %vm3109 = vcmp.eq.s32.totalorder %v3077, 1
      %vm3110 = vcmp.eq.s32.totalorder %v3078, 1
      %vm3111 = vcmp.eq.s32.totalorder %v3079, 1
      %vm3112 = vcmp.eq.s32.totalorder %v3080, 1
      %vm3113 = vcmp.eq.s32.totalorder %v3081, 1
      %vm3114 = vcmp.eq.s32.totalorder %v3082, 1
      %vm3115 = vcmp.eq.s32.totalorder %v3083, 1
      %vm3116 = vcmp.eq.s32.totalorder %v3084, 1
      %vm3117 = vcmp.eq.s32.totalorder %v3085, 1
      %vm3118 = vcmp.eq.s32.totalorder %v3086, 1
      %vm3119 = vcmp.eq.s32.totalorder %v3087, 1
      %vm3120 = vcmp.eq.s32.totalorder %v3088, 1
      %vm3121 = vcmp.eq.s32.totalorder %v3089, 1
      %vm3122 = vcmp.eq.s32.totalorder %v3090, 1
      %vm3123 = vcmp.eq.s32.totalorder %v3091, 1
      %vm3124 = vcmp.eq.s32.totalorder %v3092, 1
      %vm3125 = vcmp.eq.s32.totalorder %v3093, 1
      %vm3126 = vcmp.eq.s32.totalorder %v3094, 1
      %vm3127 = vcmp.eq.s32.totalorder %v3095, 1
      %vm3128 = vcmp.eq.s32.totalorder %v3096, 1
      %vm3129 = vcmp.eq.s32.totalorder %v3097, 1
      %vm3130 = vcmp.eq.s32.totalorder %v3098, 1
      %vm3131 = vcmp.eq.s32.totalorder %v3099, 1
      %v3132 = vsel %vm3100, %v2713, -3e+38
      %v3133 = vsel %vm3100, %v2714, -3e+38
      %v3134 = vsel %vm3100, %v2715, -3e+38
      %v3135 = vsel %vm3100, %v2716, -3e+38
      %v3136 = vsel %vm3100, %v2717, -3e+38
      %v3137 = vsel %vm3100, %v2718, -3e+38
      %v3138 = vsel %vm3100, %v2719, -3e+38
      %v3139 = vsel %vm3100, %v2720, -3e+38
      %v3140 = vsel %vm3101, %v2721, -3e+38
      %v3141 = vsel %vm3101, %v2722, -3e+38
      %v3142 = vsel %vm3101, %v2723, -3e+38
      %v3143 = vsel %vm3101, %v2724, -3e+38
      %v3144 = vsel %vm3101, %v2725, -3e+38
      %v3145 = vsel %vm3101, %v2726, -3e+38
      %v3146 = vsel %vm3101, %v2727, -3e+38
      %v3147 = vsel %vm3101, %v2728, -3e+38
      %v3148 = vsel %vm3102, %v2729, -3e+38
      %v3149 = vsel %vm3102, %v2730, -3e+38
      %v3150 = vsel %vm3102, %v2731, -3e+38
      %v3151 = vsel %vm3102, %v2732, -3e+38
      %v3152 = vsel %vm3102, %v2733, -3e+38
      %v3153 = vsel %vm3102, %v2734, -3e+38
      %v3154 = vsel %vm3102, %v2735, -3e+38
      %v3155 = vsel %vm3102, %v2736, -3e+38
      %v3156 = vsel %vm3103, %v2737, -3e+38
      %v3157 = vsel %vm3103, %v2738, -3e+38
      %v3158 = vsel %vm3103, %v2739, -3e+38
      %v3159 = vsel %vm3103, %v2740, -3e+38
      %v3160 = vsel %vm3103, %v2741, -3e+38
      %v3161 = vsel %vm3103, %v2742, -3e+38
      %v3162 = vsel %vm3103, %v2743, -3e+38
      %v3163 = vsel %vm3103, %v2744, -3e+38
      %v3164 = vsel %vm3104, %v2745, -3e+38
      %v3165 = vsel %vm3104, %v2746, -3e+38
      %v3166 = vsel %vm3104, %v2747, -3e+38
      %v3167 = vsel %vm3104, %v2748, -3e+38
      %v3168 = vsel %vm3104, %v2749, -3e+38
      %v3169 = vsel %vm3104, %v2750, -3e+38
      %v3170 = vsel %vm3104, %v2751, -3e+38
      %v3171 = vsel %vm3104, %v2752, -3e+38
      %v3172 = vsel %vm3105, %v2753, -3e+38
      %v3173 = vsel %vm3105, %v2754, -3e+38
      %v3174 = vsel %vm3105, %v2755, -3e+38
      %v3175 = vsel %vm3105, %v2756, -3e+38
      %v3176 = vsel %vm3105, %v2757, -3e+38
      %v3177 = vsel %vm3105, %v2758, -3e+38
      %v3178 = vsel %vm3105, %v2759, -3e+38
      %v3179 = vsel %vm3105, %v2760, -3e+38
      %v3180 = vsel %vm3106, %v2761, -3e+38
      %v3181 = vsel %vm3106, %v2762, -3e+38
      %v3182 = vsel %vm3106, %v2763, -3e+38
      %v3183 = vsel %vm3106, %v2764, -3e+38
      %v3184 = vsel %vm3106, %v2765, -3e+38
      %v3185 = vsel %vm3106, %v2766, -3e+38
      %v3186 = vsel %vm3106, %v2767, -3e+38
      %v3187 = vsel %vm3106, %v2768, -3e+38
      %v3188 = vsel %vm3107, %v2769, -3e+38
      %v3189 = vsel %vm3107, %v2770, -3e+38
      %v3190 = vsel %vm3107, %v2771, -3e+38
      %v3191 = vsel %vm3107, %v2772, -3e+38
      %v3192 = vsel %vm3107, %v2773, -3e+38
      %v3193 = vsel %vm3107, %v2774, -3e+38
      %v3194 = vsel %vm3107, %v2775, -3e+38
      %v3195 = vsel %vm3107, %v2776, -3e+38
      %v3196 = vsel %vm3108, %v2777, -3e+38
      %v3197 = vsel %vm3108, %v2778, -3e+38
      %v3198 = vsel %vm3108, %v2779, -3e+38
      %v3199 = vsel %vm3108, %v2780, -3e+38
      %v3200 = vsel %vm3108, %v2781, -3e+38
      %v3201 = vsel %vm3108, %v2782, -3e+38
      %v3202 = vsel %vm3108, %v2783, -3e+38
      %v3203 = vsel %vm3108, %v2784, -3e+38
      %v3204 = vsel %vm3109, %v2785, -3e+38
      %v3205 = vsel %vm3109, %v2786, -3e+38
      %v3206 = vsel %vm3109, %v2787, -3e+38
      %v3207 = vsel %vm3109, %v2788, -3e+38
      %v3208 = vsel %vm3109, %v2789, -3e+38
      %v3209 = vsel %vm3109, %v2790, -3e+38
      %v3210 = vsel %vm3109, %v2791, -3e+38
      %v3211 = vsel %vm3109, %v2792, -3e+38
      %v3212 = vsel %vm3110, %v2793, -3e+38
      %v3213 = vsel %vm3110, %v2794, -3e+38
      %v3214 = vsel %vm3110, %v2795, -3e+38
      %v3215 = vsel %vm3110, %v2796, -3e+38
      %v3216 = vsel %vm3110, %v2797, -3e+38
      %v3217 = vsel %vm3110, %v2798, -3e+38
      %v3218 = vsel %vm3110, %v2799, -3e+38
      %v3219 = vsel %vm3110, %v2800, -3e+38
      %v3220 = vsel %vm3111, %v2801, -3e+38
      %v3221 = vsel %vm3111, %v2802, -3e+38
      %v3222 = vsel %vm3111, %v2803, -3e+38
      %v3223 = vsel %vm3111, %v2804, -3e+38
      %v3224 = vsel %vm3111, %v2805, -3e+38
      %v3225 = vsel %vm3111, %v2806, -3e+38
      %v3226 = vsel %vm3111, %v2807, -3e+38
      %v3227 = vsel %vm3111, %v2808, -3e+38
      %v3228 = vsel %vm3112, %v2809, -3e+38
      %v3229 = vsel %vm3112, %v2810, -3e+38
      %v3230 = vsel %vm3112, %v2811, -3e+38
      %v3231 = vsel %vm3112, %v2812, -3e+38
      %v3232 = vsel %vm3112, %v2813, -3e+38
      %v3233 = vsel %vm3112, %v2814, -3e+38
      %v3234 = vsel %vm3112, %v2815, -3e+38
      %v3235 = vsel %vm3112, %v2816, -3e+38
      %v3236 = vsel %vm3113, %v2817, -3e+38
      %v3237 = vsel %vm3113, %v2818, -3e+38
      %v3238 = vsel %vm3113, %v2819, -3e+38
      %v3239 = vsel %vm3113, %v2820, -3e+38
      %v3240 = vsel %vm3113, %v2821, -3e+38
      %v3241 = vsel %vm3113, %v2822, -3e+38
      %v3242 = vsel %vm3113, %v2823, -3e+38
      %v3243 = vsel %vm3113, %v2824, -3e+38
      %v3244 = vsel %vm3114, %v2825, -3e+38
      %v3245 = vsel %vm3114, %v2826, -3e+38
      %v3246 = vsel %vm3114, %v2827, -3e+38
      %v3247 = vsel %vm3114, %v2828, -3e+38
      %v3248 = vsel %vm3114, %v2829, -3e+38
      %v3249 = vsel %vm3114, %v2830, -3e+38
      %v3250 = vsel %vm3114, %v2831, -3e+38
      %v3251 = vsel %vm3114, %v2832, -3e+38
      %v3252 = vsel %vm3115, %v2833, -3e+38
      %v3253 = vsel %vm3115, %v2834, -3e+38
      %v3254 = vsel %vm3115, %v2835, -3e+38
      %v3255 = vsel %vm3115, %v2836, -3e+38
      %v3256 = vsel %vm3115, %v2837, -3e+38
      %v3257 = vsel %vm3115, %v2838, -3e+38
      %v3258 = vsel %vm3115, %v2839, -3e+38
      %v3259 = vsel %vm3115, %v2840, -3e+38
      %v3260 = vsel %vm3116, %v2841, -3e+38
      %v3261 = vsel %vm3116, %v2842, -3e+38
      %v3262 = vsel %vm3116, %v2843, -3e+38
      %v3263 = vsel %vm3116, %v2844, -3e+38
      %v3264 = vsel %vm3116, %v2845, -3e+38
      %v3265 = vsel %vm3116, %v2846, -3e+38
      %v3266 = vsel %vm3116, %v2847, -3e+38
      %v3267 = vsel %vm3116, %v2848, -3e+38
      %v3268 = vsel %vm3117, %v2849, -3e+38
      %v3269 = vsel %vm3117, %v2850, -3e+38
      %v3270 = vsel %vm3117, %v2851, -3e+38
      %v3271 = vsel %vm3117, %v2852, -3e+38
      %v3272 = vsel %vm3117, %v2853, -3e+38
      %v3273 = vsel %vm3117, %v2854, -3e+38
      %v3274 = vsel %vm3117, %v2855, -3e+38
      %v3275 = vsel %vm3117, %v2856, -3e+38
      %v3276 = vsel %vm3118, %v2857, -3e+38
      %v3277 = vsel %vm3118, %v2858, -3e+38
      %v3278 = vsel %vm3118, %v2859, -3e+38
      %v3279 = vsel %vm3118, %v2860, -3e+38
      %v3280 = vsel %vm3118, %v2861, -3e+38
      %v3281 = vsel %vm3118, %v2862, -3e+38
      %v3282 = vsel %vm3118, %v2863, -3e+38
      %v3283 = vsel %vm3118, %v2864, -3e+38
      %v3284 = vsel %vm3119, %v2865, -3e+38
      %v3285 = vsel %vm3119, %v2866, -3e+38
      %v3286 = vsel %vm3119, %v2867, -3e+38
      %v3287 = vsel %vm3119, %v2868, -3e+38
      %v3288 = vsel %vm3119, %v2869, -3e+38
      %v3289 = vsel %vm3119, %v2870, -3e+38
      %v3290 = vsel %vm3119, %v2871, -3e+38
      %v3291 = vsel %vm3119, %v2872, -3e+38
      %v3292 = vsel %vm3120, %v2873, -3e+38
      %v3293 = vsel %vm3120, %v2874, -3e+38
      %v3294 = vsel %vm3120, %v2875, -3e+38
      %v3295 = vsel %vm3120, %v2876, -3e+38
      %v3296 = vsel %vm3120, %v2877, -3e+38
      %v3297 = vsel %vm3120, %v2878, -3e+38
      %v3298 = vsel %vm3120, %v2879, -3e+38
      %v3299 = vsel %vm3120, %v2880, -3e+38
      %v3300 = vsel %vm3121, %v2881, -3e+38
      %v3301 = vsel %vm3121, %v2882, -3e+38
      %v3302 = vsel %vm3121, %v2883, -3e+38
      %v3303 = vsel %vm3121, %v2884, -3e+38
      %v3304 = vsel %vm3121, %v2885, -3e+38
      %v3305 = vsel %vm3121, %v2886, -3e+38
      %v3306 = vsel %vm3121, %v2887, -3e+38
      %v3307 = vsel %vm3121, %v2888, -3e+38
      %v3308 = vsel %vm3122, %v2889, -3e+38
      %v3309 = vsel %vm3122, %v2890, -3e+38
      %v3310 = vsel %vm3122, %v2891, -3e+38
      %v3311 = vsel %vm3122, %v2892, -3e+38
      %v3312 = vsel %vm3122, %v2893, -3e+38
      %v3313 = vsel %vm3122, %v2894, -3e+38
      %v3314 = vsel %vm3122, %v2895, -3e+38
      %v3315 = vsel %vm3122, %v2896, -3e+38
      %v3316 = vsel %vm3123, %v2897, -3e+38
      %v3317 = vsel %vm3123, %v2898, -3e+38
      %v3318 = vsel %vm3123, %v2899, -3e+38
      %v3319 = vsel %vm3123, %v2900, -3e+38
      %v3320 = vsel %vm3123, %v2901, -3e+38
      %v3321 = vsel %vm3123, %v2902, -3e+38
      %v3322 = vsel %vm3123, %v2903, -3e+38
      %v3323 = vsel %vm3123, %v2904, -3e+38
      %v3324 = vsel %vm3124, %v2905, -3e+38
      %v3325 = vsel %vm3124, %v2906, -3e+38
      %v3326 = vsel %vm3124, %v2907, -3e+38
      %v3327 = vsel %vm3124, %v2908, -3e+38
      %v3328 = vsel %vm3124, %v2909, -3e+38
      %v3329 = vsel %vm3124, %v2910, -3e+38
      %v3330 = vsel %vm3124, %v2911, -3e+38
      %v3331 = vsel %vm3124, %v2912, -3e+38
      %v3332 = vsel %vm3125, %v2913, -3e+38
      %v3333 = vsel %vm3125, %v2914, -3e+38
      %v3334 = vsel %vm3125, %v2915, -3e+38
      %v3335 = vsel %vm3125, %v2916, -3e+38
      %v3336 = vsel %vm3125, %v2917, -3e+38
      %v3337 = vsel %vm3125, %v2918, -3e+38
      %v3338 = vsel %vm3125, %v2919, -3e+38
      %v3339 = vsel %vm3125, %v2920, -3e+38
      %v3340 = vsel %vm3126, %v2921, -3e+38
      %v3341 = vsel %vm3126, %v2922, -3e+38
      %v3342 = vsel %vm3126, %v2923, -3e+38
      %v3343 = vsel %vm3126, %v2924, -3e+38
      %v3344 = vsel %vm3126, %v2925, -3e+38
      %v3345 = vsel %vm3126, %v2926, -3e+38
      %v3346 = vsel %vm3126, %v2927, -3e+38
      %v3347 = vsel %vm3126, %v2928, -3e+38
      %v3348 = vsel %vm3127, %v2929, -3e+38
      %v3349 = vsel %vm3127, %v2930, -3e+38
      %v3350 = vsel %vm3127, %v2931, -3e+38
      %v3351 = vsel %vm3127, %v2932, -3e+38
      %v3352 = vsel %vm3127, %v2933, -3e+38
      %v3353 = vsel %vm3127, %v2934, -3e+38
      %v3354 = vsel %vm3127, %v2935, -3e+38
      %v3355 = vsel %vm3127, %v2936, -3e+38
      %v3356 = vsel %vm3128, %v2937, -3e+38
      %v3357 = vsel %vm3128, %v2938, -3e+38
      %v3358 = vsel %vm3128, %v2939, -3e+38
      %v3359 = vsel %vm3128, %v2940, -3e+38
      %v3360 = vsel %vm3128, %v2941, -3e+38
      %v3361 = vsel %vm3128, %v2942, -3e+38
      %v3362 = vsel %vm3128, %v2943, -3e+38
      %v3363 = vsel %vm3128, %v2944, -3e+38
      %v3364 = vsel %vm3129, %v2945, -3e+38
      %v3365 = vsel %vm3129, %v2946, -3e+38
      %v3366 = vsel %vm3129, %v2947, -3e+38
      %v3367 = vsel %vm3129, %v2948, -3e+38
      %v3368 = vsel %vm3129, %v2949, -3e+38
      %v3369 = vsel %vm3129, %v2950, -3e+38
      %v3370 = vsel %vm3129, %v2951, -3e+38
      %v3371 = vsel %vm3129, %v2952, -3e+38
      %v3372 = vsel %vm3130, %v2953, -3e+38
      %v3373 = vsel %vm3130, %v2954, -3e+38
      %v3374 = vsel %vm3130, %v2955, -3e+38
      %v3375 = vsel %vm3130, %v2956, -3e+38
      %v3376 = vsel %vm3130, %v2957, -3e+38
      %v3377 = vsel %vm3130, %v2958, -3e+38
      %v3378 = vsel %vm3130, %v2959, -3e+38
      %v3379 = vsel %vm3130, %v2960, -3e+38
      %v3380 = vsel %vm3131, %v2961, -3e+38
      %v3381 = vsel %vm3131, %v2962, -3e+38
      %v3382 = vsel %vm3131, %v2963, -3e+38
      %v3383 = vsel %vm3131, %v2964, -3e+38
      %v3384 = vsel %vm3131, %v2965, -3e+38
      %v3385 = vsel %vm3131, %v2966, -3e+38
      %v3386 = vsel %vm3131, %v2967, -3e+38
      %v3387 = vsel %vm3131, %v2968, -3e+38
      %v3388 = vmax.f32 %v3132, %v3140
      %v3389 = vmax.f32 %v3388, %v3148
      %v3390 = vmax.f32 %v3389, %v3156
      %v3391 = vmax.f32 %v3390, %v3164
      %v3392 = vmax.f32 %v3391, %v3172
      %v3393 = vmax.f32 %v3392, %v3180
      %v3394 = vmax.f32 %v3393, %v3188
      %v3395 = vmax.f32 %v3394, %v3196
      %v3396 = vmax.f32 %v3395, %v3204
      %v3397 = vmax.f32 %v3396, %v3212
      %v3398 = vmax.f32 %v3397, %v3220
      %v3399 = vmax.f32 %v3398, %v3228
      %v3400 = vmax.f32 %v3399, %v3236
      %v3401 = vmax.f32 %v3400, %v3244
      %v3402 = vmax.f32 %v3401, %v3252
      %v3403 = vmax.f32 %v3402, %v3260
      %v3404 = vmax.f32 %v3403, %v3268
      %v3405 = vmax.f32 %v3404, %v3276
      %v3406 = vmax.f32 %v3405, %v3284
      %v3407 = vmax.f32 %v3406, %v3292
      %v3408 = vmax.f32 %v3407, %v3300
      %v3409 = vmax.f32 %v3408, %v3308
      %v3410 = vmax.f32 %v3409, %v3316
      %v3411 = vmax.f32 %v3410, %v3324
      %v3412 = vmax.f32 %v3411, %v3332
      %v3413 = vmax.f32 %v3412, %v3340
      %v3414 = vmax.f32 %v3413, %v3348
      %v3415 = vmax.f32 %v3414, %v3356
      %v3416 = vmax.f32 %v3415, %v3364
      %v3417 = vmax.f32 %v3416, %v3372
      %v3418 = vmax.f32 %v3417, %v3380
      %v3419 = vrot.slane %v3418, 4
      %v3420 = vmax.f32 %v3418, %v3419
      %v3421 = vrot.slane %v3420, 2
      %v3422 = vmax.f32 %v3420, %v3421
      %v3423 = vrot.slane %v3422, 1
      %v3424 = vmax.f32 %v3422, %v3423
      %v3425 = vmax.f32 %v3133, %v3141
      %v3426 = vmax.f32 %v3425, %v3149
      %v3427 = vmax.f32 %v3426, %v3157
      %v3428 = vmax.f32 %v3427, %v3165
      %v3429 = vmax.f32 %v3428, %v3173
      %v3430 = vmax.f32 %v3429, %v3181
      %v3431 = vmax.f32 %v3430, %v3189
      %v3432 = vmax.f32 %v3431, %v3197
      %v3433 = vmax.f32 %v3432, %v3205
      %v3434 = vmax.f32 %v3433, %v3213
      %v3435 = vmax.f32 %v3434, %v3221
      %v3436 = vmax.f32 %v3435, %v3229
      %v3437 = vmax.f32 %v3436, %v3237
      %v3438 = vmax.f32 %v3437, %v3245
      %v3439 = vmax.f32 %v3438, %v3253
      %v3440 = vmax.f32 %v3439, %v3261
      %v3441 = vmax.f32 %v3440, %v3269
      %v3442 = vmax.f32 %v3441, %v3277
      %v3443 = vmax.f32 %v3442, %v3285
      %v3444 = vmax.f32 %v3443, %v3293
      %v3445 = vmax.f32 %v3444, %v3301
      %v3446 = vmax.f32 %v3445, %v3309
      %v3447 = vmax.f32 %v3446, %v3317
      %v3448 = vmax.f32 %v3447, %v3325
      %v3449 = vmax.f32 %v3448, %v3333
      %v3450 = vmax.f32 %v3449, %v3341
      %v3451 = vmax.f32 %v3450, %v3349
      %v3452 = vmax.f32 %v3451, %v3357
      %v3453 = vmax.f32 %v3452, %v3365
      %v3454 = vmax.f32 %v3453, %v3373
      %v3455 = vmax.f32 %v3454, %v3381
      %v3456 = vrot.slane %v3455, 4
      %v3457 = vmax.f32 %v3455, %v3456
      %v3458 = vrot.slane %v3457, 2
      %v3459 = vmax.f32 %v3457, %v3458
      %v3460 = vrot.slane %v3459, 1
      %v3461 = vmax.f32 %v3459, %v3460
      %v3462 = vmax.f32 %v3134, %v3142
      %v3463 = vmax.f32 %v3462, %v3150
      %v3464 = vmax.f32 %v3463, %v3158
      %v3465 = vmax.f32 %v3464, %v3166
      %v3466 = vmax.f32 %v3465, %v3174
      %v3467 = vmax.f32 %v3466, %v3182
      %v3468 = vmax.f32 %v3467, %v3190
      %v3469 = vmax.f32 %v3468, %v3198
      %v3470 = vmax.f32 %v3469, %v3206
      %v3471 = vmax.f32 %v3470, %v3214
      %v3472 = vmax.f32 %v3471, %v3222
      %v3473 = vmax.f32 %v3472, %v3230
      %v3474 = vmax.f32 %v3473, %v3238
      %v3475 = vmax.f32 %v3474, %v3246
      %v3476 = vmax.f32 %v3475, %v3254
      %v3477 = vmax.f32 %v3476, %v3262
      %v3478 = vmax.f32 %v3477, %v3270
      %v3479 = vmax.f32 %v3478, %v3278
      %v3480 = vmax.f32 %v3479, %v3286
      %v3481 = vmax.f32 %v3480, %v3294
      %v3482 = vmax.f32 %v3481, %v3302
      %v3483 = vmax.f32 %v3482, %v3310
      %v3484 = vmax.f32 %v3483, %v3318
      %v3485 = vmax.f32 %v3484, %v3326
      %v3486 = vmax.f32 %v3485, %v3334
      %v3487 = vmax.f32 %v3486, %v3342
      %v3488 = vmax.f32 %v3487, %v3350
      %v3489 = vmax.f32 %v3488, %v3358
      %v3490 = vmax.f32 %v3489, %v3366
      %v3491 = vmax.f32 %v3490, %v3374
      %v3492 = vmax.f32 %v3491, %v3382
      %v3493 = vrot.slane %v3492, 4
      %v3494 = vmax.f32 %v3492, %v3493
      %v3495 = vrot.slane %v3494, 2
      %v3496 = vmax.f32 %v3494, %v3495
      %v3497 = vrot.slane %v3496, 1
      %v3498 = vmax.f32 %v3496, %v3497
      %v3499 = vmax.f32 %v3135, %v3143
      %v3500 = vmax.f32 %v3499, %v3151
      %v3501 = vmax.f32 %v3500, %v3159
      %v3502 = vmax.f32 %v3501, %v3167
      %v3503 = vmax.f32 %v3502, %v3175
      %v3504 = vmax.f32 %v3503, %v3183
      %v3505 = vmax.f32 %v3504, %v3191
      %v3506 = vmax.f32 %v3505, %v3199
      %v3507 = vmax.f32 %v3506, %v3207
      %v3508 = vmax.f32 %v3507, %v3215
      %v3509 = vmax.f32 %v3508, %v3223
      %v3510 = vmax.f32 %v3509, %v3231
      %v3511 = vmax.f32 %v3510, %v3239
      %v3512 = vmax.f32 %v3511, %v3247
      %v3513 = vmax.f32 %v3512, %v3255
      %v3514 = vmax.f32 %v3513, %v3263
      %v3515 = vmax.f32 %v3514, %v3271
      %v3516 = vmax.f32 %v3515, %v3279
      %v3517 = vmax.f32 %v3516, %v3287
      %v3518 = vmax.f32 %v3517, %v3295
      %v3519 = vmax.f32 %v3518, %v3303
      %v3520 = vmax.f32 %v3519, %v3311
      %v3521 = vmax.f32 %v3520, %v3319
      %v3522 = vmax.f32 %v3521, %v3327
      %v3523 = vmax.f32 %v3522, %v3335
      %v3524 = vmax.f32 %v3523, %v3343
      %v3525 = vmax.f32 %v3524, %v3351
      %v3526 = vmax.f32 %v3525, %v3359
      %v3527 = vmax.f32 %v3526, %v3367
      %v3528 = vmax.f32 %v3527, %v3375
      %v3529 = vmax.f32 %v3528, %v3383
      %v3530 = vrot.slane %v3529, 4
      %v3531 = vmax.f32 %v3529, %v3530
      %v3532 = vrot.slane %v3531, 2
      %v3533 = vmax.f32 %v3531, %v3532
      %v3534 = vrot.slane %v3533, 1
      %v3535 = vmax.f32 %v3533, %v3534
      %v3536 = vmax.f32 %v3136, %v3144
      %v3537 = vmax.f32 %v3536, %v3152
      %v3538 = vmax.f32 %v3537, %v3160
      %v3539 = vmax.f32 %v3538, %v3168
      %v3540 = vmax.f32 %v3539, %v3176
      %v3541 = vmax.f32 %v3540, %v3184
      %v3542 = vmax.f32 %v3541, %v3192
      %v3543 = vmax.f32 %v3542, %v3200
      %v3544 = vmax.f32 %v3543, %v3208
      %v3545 = vmax.f32 %v3544, %v3216
      %v3546 = vmax.f32 %v3545, %v3224
      %v3547 = vmax.f32 %v3546, %v3232
      %v3548 = vmax.f32 %v3547, %v3240
      %v3549 = vmax.f32 %v3548, %v3248
      %v3550 = vmax.f32 %v3549, %v3256
      %v3551 = vmax.f32 %v3550, %v3264
      %v3552 = vmax.f32 %v3551, %v3272
      %v3553 = vmax.f32 %v3552, %v3280
      %v3554 = vmax.f32 %v3553, %v3288
      %v3555 = vmax.f32 %v3554, %v3296
      %v3556 = vmax.f32 %v3555, %v3304
      %v3557 = vmax.f32 %v3556, %v3312
      %v3558 = vmax.f32 %v3557, %v3320
      %v3559 = vmax.f32 %v3558, %v3328
      %v3560 = vmax.f32 %v3559, %v3336
      %v3561 = vmax.f32 %v3560, %v3344
      %v3562 = vmax.f32 %v3561, %v3352
      %v3563 = vmax.f32 %v3562, %v3360
      %v3564 = vmax.f32 %v3563, %v3368
      %v3565 = vmax.f32 %v3564, %v3376
      %v3566 = vmax.f32 %v3565, %v3384
      %v3567 = vrot.slane %v3566, 4
      %v3568 = vmax.f32 %v3566, %v3567
      %v3569 = vrot.slane %v3568, 2
      %v3570 = vmax.f32 %v3568, %v3569
      %v3571 = vrot.slane %v3570, 1
      %v3572 = vmax.f32 %v3570, %v3571
      %v3573 = vmax.f32 %v3137, %v3145
      %v3574 = vmax.f32 %v3573, %v3153
      %v3575 = vmax.f32 %v3574, %v3161
      %v3576 = vmax.f32 %v3575, %v3169
      %v3577 = vmax.f32 %v3576, %v3177
      %v3578 = vmax.f32 %v3577, %v3185
      %v3579 = vmax.f32 %v3578, %v3193
      %v3580 = vmax.f32 %v3579, %v3201
      %v3581 = vmax.f32 %v3580, %v3209
      %v3582 = vmax.f32 %v3581, %v3217
      %v3583 = vmax.f32 %v3582, %v3225
      %v3584 = vmax.f32 %v3583, %v3233
      %v3585 = vmax.f32 %v3584, %v3241
      %v3586 = vmax.f32 %v3585, %v3249
      %v3587 = vmax.f32 %v3586, %v3257
      %v3588 = vmax.f32 %v3587, %v3265
      %v3589 = vmax.f32 %v3588, %v3273
      %v3590 = vmax.f32 %v3589, %v3281
      %v3591 = vmax.f32 %v3590, %v3289
      %v3592 = vmax.f32 %v3591, %v3297
      %v3593 = vmax.f32 %v3592, %v3305
      %v3594 = vmax.f32 %v3593, %v3313
      %v3595 = vmax.f32 %v3594, %v3321
      %v3596 = vmax.f32 %v3595, %v3329
      %v3597 = vmax.f32 %v3596, %v3337
      %v3598 = vmax.f32 %v3597, %v3345
      %v3599 = vmax.f32 %v3598, %v3353
      %v3600 = vmax.f32 %v3599, %v3361
      %v3601 = vmax.f32 %v3600, %v3369
      %v3602 = vmax.f32 %v3601, %v3377
      %v3603 = vmax.f32 %v3602, %v3385
      %v3604 = vrot.slane %v3603, 4
      %v3605 = vmax.f32 %v3603, %v3604
      %v3606 = vrot.slane %v3605, 2
      %v3607 = vmax.f32 %v3605, %v3606
      %v3608 = vrot.slane %v3607, 1
      %v3609 = vmax.f32 %v3607, %v3608
      %v3610 = vmax.f32 %v3138, %v3146
      %v3611 = vmax.f32 %v3610, %v3154
      %v3612 = vmax.f32 %v3611, %v3162
      %v3613 = vmax.f32 %v3612, %v3170
      %v3614 = vmax.f32 %v3613, %v3178
      %v3615 = vmax.f32 %v3614, %v3186
      %v3616 = vmax.f32 %v3615, %v3194
      %v3617 = vmax.f32 %v3616, %v3202
      %v3618 = vmax.f32 %v3617, %v3210
      %v3619 = vmax.f32 %v3618, %v3218
      %v3620 = vmax.f32 %v3619, %v3226
      %v3621 = vmax.f32 %v3620, %v3234
      %v3622 = vmax.f32 %v3621, %v3242
      %v3623 = vmax.f32 %v3622, %v3250
      %v3624 = vmax.f32 %v3623, %v3258
      %v3625 = vmax.f32 %v3624, %v3266
      %v3626 = vmax.f32 %v3625, %v3274
      %v3627 = vmax.f32 %v3626, %v3282
      %v3628 = vmax.f32 %v3627, %v3290
      %v3629 = vmax.f32 %v3628, %v3298
      %v3630 = vmax.f32 %v3629, %v3306
      %v3631 = vmax.f32 %v3630, %v3314
      %v3632 = vmax.f32 %v3631, %v3322
      %v3633 = vmax.f32 %v3632, %v3330
      %v3634 = vmax.f32 %v3633, %v3338
      %v3635 = vmax.f32 %v3634, %v3346
      %v3636 = vmax.f32 %v3635, %v3354
      %v3637 = vmax.f32 %v3636, %v3362
      %v3638 = vmax.f32 %v3637, %v3370
      %v3639 = vmax.f32 %v3638, %v3378
      %v3640 = vmax.f32 %v3639, %v3386
      %v3641 = vrot.slane %v3640, 4
      %v3642 = vmax.f32 %v3640, %v3641
      %v3643 = vrot.slane %v3642, 2
      %v3644 = vmax.f32 %v3642, %v3643
      %v3645 = vrot.slane %v3644, 1
      %v3646 = vmax.f32 %v3644, %v3645
      %v3647 = vmax.f32 %v3139, %v3147
      %v3648 = vmax.f32 %v3647, %v3155
      %v3649 = vmax.f32 %v3648, %v3163
      %v3650 = vmax.f32 %v3649, %v3171
      %v3651 = vmax.f32 %v3650, %v3179
      %v3652 = vmax.f32 %v3651, %v3187
      %v3653 = vmax.f32 %v3652, %v3195
      %v3654 = vmax.f32 %v3653, %v3203
      %v3655 = vmax.f32 %v3654, %v3211
      %v3656 = vmax.f32 %v3655, %v3219
      %v3657 = vmax.f32 %v3656, %v3227
      %v3658 = vmax.f32 %v3657, %v3235
      %v3659 = vmax.f32 %v3658, %v3243
      %v3660 = vmax.f32 %v3659, %v3251
      %v3661 = vmax.f32 %v3660, %v3259
      %v3662 = vmax.f32 %v3661, %v3267
      %v3663 = vmax.f32 %v3662, %v3275
      %v3664 = vmax.f32 %v3663, %v3283
      %v3665 = vmax.f32 %v3664, %v3291
      %v3666 = vmax.f32 %v3665, %v3299
      %v3667 = vmax.f32 %v3666, %v3307
      %v3668 = vmax.f32 %v3667, %v3315
      %v3669 = vmax.f32 %v3668, %v3323
      %v3670 = vmax.f32 %v3669, %v3331
      %v3671 = vmax.f32 %v3670, %v3339
      %v3672 = vmax.f32 %v3671, %v3347
      %v3673 = vmax.f32 %v3672, %v3355
      %v3674 = vmax.f32 %v3673, %v3363
      %v3675 = vmax.f32 %v3674, %v3371
      %v3676 = vmax.f32 %v3675, %v3379
      %v3677 = vmax.f32 %v3676, %v3387
      %v3678 = vrot.slane %v3677, 4
      %v3679 = vmax.f32 %v3677, %v3678
      %v3680 = vrot.slane %v3679, 2
      %v3681 = vmax.f32 %v3679, %v3680
      %v3682 = vrot.slane %v3681, 1
      %v3683 = vmax.f32 %v3681, %v3682
      %p3684 = scmp.eq.s32.totalorder %s26, 0
      // Predicated region
      $region61: #{pointnet_tokenizer_forward.2} parent=59 // pred_check
        %p3685 = pneg %p3684
      $region62: #{pointnet_tokenizer_forward.2} parent=59 // pred_check_branch
        %3687 = sbr.rel (%p3685) target = $region64
      $region63: #{pointnet_tokenizer_forward.2} parent=59 // pred_region
        %3688 = vst [vmem:[%s385] sm:$0xff] -3e+38
      $region64: #{pointnet_tokenizer_forward.2} parent=59 // pred_fallthru
        _
      %v3689 = vld [vmem:[%s385] sm:$0xff]
      %v3698 = vcombine.low %v3424, %v3461
      %v3699 = vcombine.low %v3498, %v3535
      %v3700 = vcombine.low %v3572, %v3609
      %v3701 = vcombine.low %v3646, %v3683
      %v3703 = vunpack.c.l.s4 1966171168
      %v3704 = vunpack.c.0.s8 %v3703
      %v3705 = vlaneseq
      %v3706 = vshrl.u32 %v3705, 7
      %v3707 = vsub.s32 %v3704, %v3706
      %v3708 = vrot.slane %v3698, %v3707
      %v3710 = vunpack.c.l.s4 1966171168
      %v3711 = vunpack.c.0.s8 %v3710
      %v3712 = vlaneseq
      %v3713 = vshrl.u32 %v3712, 7
      %v3714 = vsub.s32 %v3711, %v3713
      %v3715 = vrot.slane %v3699, %v3714
      %v3717 = vunpack.c.l.s4 1966171168
      %v3718 = vunpack.c.0.s8 %v3717
      %v3719 = vlaneseq
      %v3720 = vshrl.u32 %v3719, 7
      %v3721 = vsub.s32 %v3718, %v3720
      %v3722 = vrot.slane %v3700, %v3721
      %v3724 = vunpack.c.l.s4 1966171168
      %v3725 = vunpack.c.0.s8 %v3724
      %v3726 = vlaneseq
      %v3727 = vshrl.u32 %v3726, 7
      %v3728 = vsub.s32 %v3725, %v3727
      %v3729 = vrot.slane %v3701, %v3728
      %v3730 = vcombine.low %v3708, %v3715
      %v3731 = vcombine.low %v3722, %v3729
      %v3733 = vunpack.c.l.s4 1966171168
      %v3734 = vunpack.c.0.s8 %v3733
      %v3735 = vlaneseq
      %v3736 = vshrl.u32 %v3735, 7
      %v3737 = vsub.s32 %v3734, %v3736
      %v3738 = vrot.slane %v3730, %v3737
      %v3740 = vunpack.c.l.s4 1966171168
      %v3741 = vunpack.c.0.s8 %v3740
      %v3742 = vlaneseq
      %v3743 = vshrl.u32 %v3742, 7
      %v3744 = vsub.s32 %v3741, %v3743
      %v3745 = vrot.slane %v3731, %v3744
      %v3746 = vcombine.low %v3738, %v3745
      %v3748 = vmax.f32 %v3689, %v3746
      %3749 = vst [vmem:[%s385] sm:$0xff] %v3748
      %p3750 = scmp.lt.s32.totalorder %s25, 1
      %s3751 = scalar_select %p3750, %s25, 1
      %s3752 = smul.addr %s3751, 8
      %s3753 = scalar_lea.vmem %s10, %s3752
      // Predicated region
      $region65: #{pointnet_tokenizer_forward.2} parent=59 // pred_check
        %p3754 = pneg %p268
      $region66: #{pointnet_tokenizer_forward.2} parent=59 // pred_check_branch
        %3756 = sbr.rel (%p3754) target = $region68
      $region67: #{pointnet_tokenizer_forward.2} parent=59 // pred_region
        _
      $region68: #{pointnet_tokenizer_forward.2} parent=59 // pred_fallthru
        _
    $region60: #{pointnet_tokenizer_forward.2} parent=5 // pred_fallthru
      _
    %p3757 = scmp.le.s32.totalorder 2, %s16
    // Predicated region
    $region69: #{pointnet_tokenizer_forward.2} parent=5 // pred_check
      %p3758 = pneg %p3757
    $region70: #{pointnet_tokenizer_forward.2} parent=5 // pred_check_branch
      %3760 = sbr.rel (%p3758) target = $region72
    $region71: #{pointnet_tokenizer_forward.2} parent=5 // pred_region
      %s3761 = ssub.s32 %s16, 2
      // Predicated region
      $region73: #{pointnet_tokenizer_forward.2} parent=71 // pred_check
        %p3762 = pneg %p274
      $region74: #{pointnet_tokenizer_forward.2} parent=71 // pred_check_branch
        %3764 = sbr.rel (%p3762) target = $region76
      $region75: #{pointnet_tokenizer_forward.2} parent=71 // pred_region
        %p3765 = scmp.lt.s32.totalorder %s27, 1
        %s3766 = scalar_select %p3765, %s27, 1
        %s3767 = smul.addr %s3766, 8
        %s3768 = scalar_lea.vmem %s10, %s3767
      $region76: #{pointnet_tokenizer_forward.2} parent=71 // pred_fallthru
        _
    $region72: #{pointnet_tokenizer_forward.2} parent=5 // pred_fallthru
      _
  $region6: #{pointnet_tokenizer_forward.2} parent=0 // loop_footer
    %s20 = sadd.s32 1, %s16
  $region7: #{pointnet_tokenizer_forward.2} parent=0 // loop_footer_branch
    %15 = sbr.rel target = $region3
  $region8: #{pointnet_tokenizer_forward.2} parent=0 // loop_exit
    _

// kernel: pointnet_tokenizer_forward.3
$region0: #{pointnet_tokenizer_forward.3}
  #allocation0 [shape = 'u32[]', space=smem, size = 0x4, offset = 0x4, fixed_abs, tag = 'smem constant byte address 0x4 - core index']
  #allocation1 [shape = 'u32[144,128]{1,0:T(1,128)}', space=vmem, size = 0x12000, scoped, tag = 'internal scratch']
  %s0 = inlined_call_operand.vmem [shape: bf16[16,1024], index: 0, kind: input, shape index: {}]
  %s1 = inlined_call_operand.vmem [shape: bf16[1024,512], index: 1, kind: input, shape index: {}]
  %s2 = inlined_call_operand.vmem [shape: f32[1,512], index: 2, kind: input, shape index: {}]
  %s3 = inlined_call_operand.vmem [shape: f32[1,512], index: 3, kind: input, shape index: {}]
  %s4 = inlined_call_operand.vmem [shape: bf16[512,256], index: 4, kind: input, shape index: {}]
  %s5 = inlined_call_operand.vmem [shape: f32[1,256], index: 5, kind: input, shape index: {}]
  %s6 = inlined_call_operand.vmem [shape: f32[1,256], index: 6, kind: input, shape index: {}]
  %s7 = inlined_call_operand.vmem [shape: bf16[256,128], index: 7, kind: input, shape index: {}]
  %s8 = inlined_call_operand.vmem [shape: f32[1,128], index: 8, kind: input, shape index: {}]
  %s9 = inlined_call_operand.vmem [shape: f32[16,128], index: 9, kind: output, shape index: {}]
  %s10 = sld [smem:[#allocation0]]
  $region46: #{pointnet_tokenizer_forward.3} parent=0
    _
  %s12 = ssub.s32 1, %s10
  %s13 = scalar_select 0, %s12, %s10
  // Predicated region
  $region2: #{pointnet_tokenizer_forward.3} parent=0 // pred_check
    _
  $region3: #{pointnet_tokenizer_forward.3} parent=0 // pred_check_branch
    %15 = sbr.rel (0) target = $region5
  $region4: #{pointnet_tokenizer_forward.3} parent=0 // pred_region
    _
  $region5: #{pointnet_tokenizer_forward.3} parent=0 // pred_fallthru
    _
  // Predicated region
  $region6: #{pointnet_tokenizer_forward.3} parent=0 // pred_check
    _
  $region7: #{pointnet_tokenizer_forward.3} parent=0 // pred_check_branch
    %17 = sbr.rel (0) target = $region9
  $region8: #{pointnet_tokenizer_forward.3} parent=0 // pred_region
    _
  $region9: #{pointnet_tokenizer_forward.3} parent=0 // pred_fallthru
    _
  // Predicated region
  $region10: #{pointnet_tokenizer_forward.3} parent=0 // pred_check
    _
  $region11: #{pointnet_tokenizer_forward.3} parent=0 // pred_check_branch
    %19 = sbr.rel (0) target = $region13
  $region12: #{pointnet_tokenizer_forward.3} parent=0 // pred_region
    _
  $region13: #{pointnet_tokenizer_forward.3} parent=0 // pred_fallthru
    _
  // Predicated region
  $region14: #{pointnet_tokenizer_forward.3} parent=0 // pred_check
    _
  $region15: #{pointnet_tokenizer_forward.3} parent=0 // pred_check_branch
    %21 = sbr.rel (0) target = $region17
  $region16: #{pointnet_tokenizer_forward.3} parent=0 // pred_region
    _
  $region17: #{pointnet_tokenizer_forward.3} parent=0 // pred_fallthru
    _
  // Predicated region
  $region18: #{pointnet_tokenizer_forward.3} parent=0 // pred_check
    _
  $region19: #{pointnet_tokenizer_forward.3} parent=0 // pred_check_branch
    %23 = sbr.rel (0) target = $region21
  $region20: #{pointnet_tokenizer_forward.3} parent=0 // pred_region
    _
  $region21: #{pointnet_tokenizer_forward.3} parent=0 // pred_fallthru
    _
  // Predicated region
  $region22: #{pointnet_tokenizer_forward.3} parent=0 // pred_check
    _
  $region23: #{pointnet_tokenizer_forward.3} parent=0 // pred_check_branch
    %25 = sbr.rel (0) target = $region25
  $region24: #{pointnet_tokenizer_forward.3} parent=0 // pred_region
    _
  $region25: #{pointnet_tokenizer_forward.3} parent=0 // pred_fallthru
    _
  // Predicated region
  $region26: #{pointnet_tokenizer_forward.3} parent=0 // pred_check
    _
  $region27: #{pointnet_tokenizer_forward.3} parent=0 // pred_check_branch
    %27 = sbr.rel (0) target = $region29
  $region28: #{pointnet_tokenizer_forward.3} parent=0 // pred_region
    _
  $region29: #{pointnet_tokenizer_forward.3} parent=0 // pred_fallthru
    _
  // Predicated region
  $region30: #{pointnet_tokenizer_forward.3} parent=0 // pred_check
    _
  $region31: #{pointnet_tokenizer_forward.3} parent=0 // pred_check_branch
    %29 = sbr.rel (0) target = $region33
  $region32: #{pointnet_tokenizer_forward.3} parent=0 // pred_region
    _
  $region33: #{pointnet_tokenizer_forward.3} parent=0 // pred_fallthru
    _
  // Predicated region
  $region34: #{pointnet_tokenizer_forward.3} parent=0 // pred_check
    _
  $region35: #{pointnet_tokenizer_forward.3} parent=0 // pred_check_branch
    %31 = sbr.rel (0) target = $region37
  $region36: #{pointnet_tokenizer_forward.3} parent=0 // pred_region
    _
  $region37: #{pointnet_tokenizer_forward.3} parent=0 // pred_fallthru
    _
  %v33 = vld [vmem:[%s0] sm:$0xff]
  %v34 = vld [vmem:[%s0 + $0x8] sm:$0xff]
  %v35 = vld [vmem:[%s0 + $0x10] sm:$0xff]
  %v36 = vld [vmem:[%s0 + $0x18] sm:$0xff]
  %v37 = vld [vmem:[%s0 + $0x20] sm:$0xff]
  %v38 = vld [vmem:[%s0 + $0x28] sm:$0xff]
  %v39 = vld [vmem:[%s0 + $0x30] sm:$0xff]
  %v40 = vld [vmem:[%s0 + $0x38] sm:$0xff]
  %v41 = vld [vmem:[%s1] sm:$0xff]
  %v42 = vld [vmem:[%s1 + $0x8] sm:$0xff]
  %v43 = vld [vmem:[%s1 + $0x10] sm:$0xff]
  %v44 = vld [vmem:[%s1 + $0x18] sm:$0xff]
  %v45 = vld [vmem:[%s1 + $0x20] sm:$0xff]
  %v46 = vld [vmem:[%s1 + $0x28] sm:$0xff]
  %v47 = vld [vmem:[%s1 + $0x30] sm:$0xff]
  %v48 = vld [vmem:[%s1 + $0x38] sm:$0xff]
  %v49 = vld [vmem:[%s1 + $0x40] sm:$0xff]
  %v50 = vld [vmem:[%s1 + $0x48] sm:$0xff]
  %v51 = vld [vmem:[%s1 + $0x50] sm:$0xff]
  %v52 = vld [vmem:[%s1 + $0x58] sm:$0xff]
  %v53 = vld [vmem:[%s1 + $0x60] sm:$0xff]
  %v54 = vld [vmem:[%s1 + $0x68] sm:$0xff]
  %v55 = vld [vmem:[%s1 + $0x70] sm:$0xff]
  %v56 = vld [vmem:[%s1 + $0x78] sm:$0xff]
  %v57 = vld [vmem:[%s1 + $0x80] sm:$0xff]
  %v58 = vld [vmem:[%s1 + $0x88] sm:$0xff]
  %v59 = vld [vmem:[%s1 + $0x90] sm:$0xff]
  %v60 = vld [vmem:[%s1 + $0x98] sm:$0xff]
  %v61 = vld [vmem:[%s1 + $0xa0] sm:$0xff]
  %v62 = vld [vmem:[%s1 + $0xa8] sm:$0xff]
  %v63 = vld [vmem:[%s1 + $0xb0] sm:$0xff]
  %v64 = vld [vmem:[%s1 + $0xb8] sm:$0xff]
  %v65 = vld [vmem:[%s1 + $0xc0] sm:$0xff]
  %v66 = vld [vmem:[%s1 + $0xc8] sm:$0xff]
  %v67 = vld [vmem:[%s1 + $0xd0] sm:$0xff]
  %v68 = vld [vmem:[%s1 + $0xd8] sm:$0xff]
  %v69 = vld [vmem:[%s1 + $0xe0] sm:$0xff]
  %v70 = vld [vmem:[%s1 + $0xe8] sm:$0xff]
  %v71 = vld [vmem:[%s1 + $0xf0] sm:$0xff]
  %v72 = vld [vmem:[%s1 + $0xf8] sm:$0xff]
  %v73 = vld [vmem:[%s1 + $0x100] sm:$0xff]
  %v74 = vld [vmem:[%s1 + $0x108] sm:$0xff]
  %v75 = vld [vmem:[%s1 + $0x110] sm:$0xff]
  %v76 = vld [vmem:[%s1 + $0x118] sm:$0xff]
  %v77 = vld [vmem:[%s1 + $0x120] sm:$0xff]
  %v78 = vld [vmem:[%s1 + $0x128] sm:$0xff]
  %v79 = vld [vmem:[%s1 + $0x130] sm:$0xff]
  %v80 = vld [vmem:[%s1 + $0x138] sm:$0xff]
  %v81 = vld [vmem:[%s1 + $0x140] sm:$0xff]
  %v82 = vld [vmem:[%s1 + $0x148] sm:$0xff]
  %v83 = vld [vmem:[%s1 + $0x150] sm:$0xff]
  %v84 = vld [vmem:[%s1 + $0x158] sm:$0xff]
  %v85 = vld [vmem:[%s1 + $0x160] sm:$0xff]
  %v86 = vld [vmem:[%s1 + $0x168] sm:$0xff]
  %v87 = vld [vmem:[%s1 + $0x170] sm:$0xff]
  %v88 = vld [vmem:[%s1 + $0x178] sm:$0xff]
  %v89 = vld [vmem:[%s1 + $0x180] sm:$0xff]
  %v90 = vld [vmem:[%s1 + $0x188] sm:$0xff]
  %v91 = vld [vmem:[%s1 + $0x190] sm:$0xff]
  %v92 = vld [vmem:[%s1 + $0x198] sm:$0xff]
  %v93 = vld [vmem:[%s1 + $0x1a0] sm:$0xff]
  %v94 = vld [vmem:[%s1 + $0x1a8] sm:$0xff]
  %v95 = vld [vmem:[%s1 + $0x1b0] sm:$0xff]
  %v96 = vld [vmem:[%s1 + $0x1b8] sm:$0xff]
  %v97 = vld [vmem:[%s1 + $0x1c0] sm:$0xff]
  %v98 = vld [vmem:[%s1 + $0x1c8] sm:$0xff]
  %v99 = vld [vmem:[%s1 + $0x1d0] sm:$0xff]
  %v100 = vld [vmem:[%s1 + $0x1d8] sm:$0xff]
  %v101 = vld [vmem:[%s1 + $0x1e0] sm:$0xff]
  %v102 = vld [vmem:[%s1 + $0x1e8] sm:$0xff]
  %v103 = vld [vmem:[%s1 + $0x1f0] sm:$0xff]
  %v104 = vld [vmem:[%s1 + $0x1f8] sm:$0xff]
  %v105 = vld [vmem:[%s1 + $0x200] sm:$0xff]
  %v106 = vld [vmem:[%s1 + $0x208] sm:$0xff]
  %v107 = vld [vmem:[%s1 + $0x210] sm:$0xff]
  %v108 = vld [vmem:[%s1 + $0x218] sm:$0xff]
  %v109 = vld [vmem:[%s1 + $0x220] sm:$0xff]
  %v110 = vld [vmem:[%s1 + $0x228] sm:$0xff]
  %v111 = vld [vmem:[%s1 + $0x230] sm:$0xff]
  %v112 = vld [vmem:[%s1 + $0x238] sm:$0xff]
  %v113 = vld [vmem:[%s1 + $0x240] sm:$0xff]
  %v114 = vld [vmem:[%s1 + $0x248] sm:$0xff]
  %v115 = vld [vmem:[%s1 + $0x250] sm:$0xff]
  %v116 = vld [vmem:[%s1 + $0x258] sm:$0xff]
  %v117 = vld [vmem:[%s1 + $0x260] sm:$0xff]
  %v118 = vld [vmem:[%s1 + $0x268] sm:$0xff]
  %v119 = vld [vmem:[%s1 + $0x270] sm:$0xff]
  %v120 = vld [vmem:[%s1 + $0x278] sm:$0xff]
  %v121 = vld [vmem:[%s1 + $0x280] sm:$0xff]
  %v122 = vld [vmem:[%s1 + $0x288] sm:$0xff]
  %v123 = vld [vmem:[%s1 + $0x290] sm:$0xff]
  %v124 = vld [vmem:[%s1 + $0x298] sm:$0xff]
  %v125 = vld [vmem:[%s1 + $0x2a0] sm:$0xff]
  %v126 = vld [vmem:[%s1 + $0x2a8] sm:$0xff]
  %v127 = vld [vmem:[%s1 + $0x2b0] sm:$0xff]
  %v128 = vld [vmem:[%s1 + $0x2b8] sm:$0xff]
  %v129 = vld [vmem:[%s1 + $0x2c0] sm:$0xff]
  %v130 = vld [vmem:[%s1 + $0x2c8] sm:$0xff]
  %v131 = vld [vmem:[%s1 + $0x2d0] sm:$0xff]
  %v132 = vld [vmem:[%s1 + $0x2d8] sm:$0xff]
  %v133 = vld [vmem:[%s1 + $0x2e0] sm:$0xff]
  %v134 = vld [vmem:[%s1 + $0x2e8] sm:$0xff]
  %v135 = vld [vmem:[%s1 + $0x2f0] sm:$0xff]
  %v136 = vld [vmem:[%s1 + $0x2f8] sm:$0xff]
  %v137 = vld [vmem:[%s1 + $0x300] sm:$0xff]
  %v138 = vld [vmem:[%s1 + $0x308] sm:$0xff]
  %v139 = vld [vmem:[%s1 + $0x310] sm:$0xff]
  %v140 = vld [vmem:[%s1 + $0x318] sm:$0xff]
  %v141 = vld [vmem:[%s1 + $0x320] sm:$0xff]
  %v142 = vld [vmem:[%s1 + $0x328] sm:$0xff]
  %v143 = vld [vmem:[%s1 + $0x330] sm:$0xff]
  %v144 = vld [vmem:[%s1 + $0x338] sm:$0xff]
  %v145 = vld [vmem:[%s1 + $0x340] sm:$0xff]
  %v146 = vld [vmem:[%s1 + $0x348] sm:$0xff]
  %v147 = vld [vmem:[%s1 + $0x350] sm:$0xff]
  %v148 = vld [vmem:[%s1 + $0x358] sm:$0xff]
  %v149 = vld [vmem:[%s1 + $0x360] sm:$0xff]
  %v150 = vld [vmem:[%s1 + $0x368] sm:$0xff]
  %v151 = vld [vmem:[%s1 + $0x370] sm:$0xff]
  %v152 = vld [vmem:[%s1 + $0x378] sm:$0xff]
  %v153 = vld [vmem:[%s1 + $0x380] sm:$0xff]
  %v154 = vld [vmem:[%s1 + $0x388] sm:$0xff]
  %v155 = vld [vmem:[%s1 + $0x390] sm:$0xff]
  %v156 = vld [vmem:[%s1 + $0x398] sm:$0xff]
  %v157 = vld [vmem:[%s1 + $0x3a0] sm:$0xff]
  %v158 = vld [vmem:[%s1 + $0x3a8] sm:$0xff]
  %v159 = vld [vmem:[%s1 + $0x3b0] sm:$0xff]
  %v160 = vld [vmem:[%s1 + $0x3b8] sm:$0xff]
  %v161 = vld [vmem:[%s1 + $0x3c0] sm:$0xff]
  %v162 = vld [vmem:[%s1 + $0x3c8] sm:$0xff]
  %v163 = vld [vmem:[%s1 + $0x3d0] sm:$0xff]
  %v164 = vld [vmem:[%s1 + $0x3d8] sm:$0xff]
  %v165 = vld [vmem:[%s1 + $0x3e0] sm:$0xff]
  %v166 = vld [vmem:[%s1 + $0x3e8] sm:$0xff]
  %v167 = vld [vmem:[%s1 + $0x3f0] sm:$0xff]
  %v168 = vld [vmem:[%s1 + $0x3f8] sm:$0xff]
  %v169 = vld [vmem:[%s1 + $0x400] sm:$0xff]
  %v170 = vld [vmem:[%s1 + $0x408] sm:$0xff]
  %v171 = vld [vmem:[%s1 + $0x410] sm:$0xff]
  %v172 = vld [vmem:[%s1 + $0x418] sm:$0xff]
  %v173 = vld [vmem:[%s1 + $0x420] sm:$0xff]
  %v174 = vld [vmem:[%s1 + $0x428] sm:$0xff]
  %v175 = vld [vmem:[%s1 + $0x430] sm:$0xff]
  %v176 = vld [vmem:[%s1 + $0x438] sm:$0xff]
  %v177 = vld [vmem:[%s1 + $0x440] sm:$0xff]
  %v178 = vld [vmem:[%s1 + $0x448] sm:$0xff]
  %v179 = vld [vmem:[%s1 + $0x450] sm:$0xff]
  %v180 = vld [vmem:[%s1 + $0x458] sm:$0xff]
  %v181 = vld [vmem:[%s1 + $0x460] sm:$0xff]
  %v182 = vld [vmem:[%s1 + $0x468] sm:$0xff]
  %v183 = vld [vmem:[%s1 + $0x470] sm:$0xff]
  %v184 = vld [vmem:[%s1 + $0x478] sm:$0xff]
  %v185 = vld [vmem:[%s1 + $0x480] sm:$0xff]
  %v186 = vld [vmem:[%s1 + $0x488] sm:$0xff]
  %v187 = vld [vmem:[%s1 + $0x490] sm:$0xff]
  %v188 = vld [vmem:[%s1 + $0x498] sm:$0xff]
  %v189 = vld [vmem:[%s1 + $0x4a0] sm:$0xff]
  %v190 = vld [vmem:[%s1 + $0x4a8] sm:$0xff]
  %v191 = vld [vmem:[%s1 + $0x4b0] sm:$0xff]
  %v192 = vld [vmem:[%s1 + $0x4b8] sm:$0xff]
  %v193 = vld [vmem:[%s1 + $0x4c0] sm:$0xff]
  %v194 = vld [vmem:[%s1 + $0x4c8] sm:$0xff]
  %v195 = vld [vmem:[%s1 + $0x4d0] sm:$0xff]
  %v196 = vld [vmem:[%s1 + $0x4d8] sm:$0xff]
  %v197 = vld [vmem:[%s1 + $0x4e0] sm:$0xff]
  %v198 = vld [vmem:[%s1 + $0x4e8] sm:$0xff]
  %v199 = vld [vmem:[%s1 + $0x4f0] sm:$0xff]
  %v200 = vld [vmem:[%s1 + $0x4f8] sm:$0xff]
  %v201 = vld [vmem:[%s1 + $0x500] sm:$0xff]
  %v202 = vld [vmem:[%s1 + $0x508] sm:$0xff]
  %v203 = vld [vmem:[%s1 + $0x510] sm:$0xff]
  %v204 = vld [vmem:[%s1 + $0x518] sm:$0xff]
  %v205 = vld [vmem:[%s1 + $0x520] sm:$0xff]
  %v206 = vld [vmem:[%s1 + $0x528] sm:$0xff]
  %v207 = vld [vmem:[%s1 + $0x530] sm:$0xff]
  %v208 = vld [vmem:[%s1 + $0x538] sm:$0xff]
  %v209 = vld [vmem:[%s1 + $0x540] sm:$0xff]
  %v210 = vld [vmem:[%s1 + $0x548] sm:$0xff]
  %v211 = vld [vmem:[%s1 + $0x550] sm:$0xff]
  %v212 = vld [vmem:[%s1 + $0x558] sm:$0xff]
  %v213 = vld [vmem:[%s1 + $0x560] sm:$0xff]
  %v214 = vld [vmem:[%s1 + $0x568] sm:$0xff]
  %v215 = vld [vmem:[%s1 + $0x570] sm:$0xff]
  %v216 = vld [vmem:[%s1 + $0x578] sm:$0xff]
  %v217 = vld [vmem:[%s1 + $0x580] sm:$0xff]
  %v218 = vld [vmem:[%s1 + $0x588] sm:$0xff]
  %v219 = vld [vmem:[%s1 + $0x590] sm:$0xff]
  %v220 = vld [vmem:[%s1 + $0x598] sm:$0xff]
  %v221 = vld [vmem:[%s1 + $0x5a0] sm:$0xff]
  %v222 = vld [vmem:[%s1 + $0x5a8] sm:$0xff]
  %v223 = vld [vmem:[%s1 + $0x5b0] sm:$0xff]
  %v224 = vld [vmem:[%s1 + $0x5b8] sm:$0xff]
  %v225 = vld [vmem:[%s1 + $0x5c0] sm:$0xff]
  %v226 = vld [vmem:[%s1 + $0x5c8] sm:$0xff]
  %v227 = vld [vmem:[%s1 + $0x5d0] sm:$0xff]
  %v228 = vld [vmem:[%s1 + $0x5d8] sm:$0xff]
  %v229 = vld [vmem:[%s1 + $0x5e0] sm:$0xff]
  %v230 = vld [vmem:[%s1 + $0x5e8] sm:$0xff]
  %v231 = vld [vmem:[%s1 + $0x5f0] sm:$0xff]
  %v232 = vld [vmem:[%s1 + $0x5f8] sm:$0xff]
  %v233 = vld [vmem:[%s1 + $0x600] sm:$0xff]
  %v234 = vld [vmem:[%s1 + $0x608] sm:$0xff]
  %v235 = vld [vmem:[%s1 + $0x610] sm:$0xff]
  %v236 = vld [vmem:[%s1 + $0x618] sm:$0xff]
  %v237 = vld [vmem:[%s1 + $0x620] sm:$0xff]
  %v238 = vld [vmem:[%s1 + $0x628] sm:$0xff]
  %v239 = vld [vmem:[%s1 + $0x630] sm:$0xff]
  %v240 = vld [vmem:[%s1 + $0x638] sm:$0xff]
  %v241 = vld [vmem:[%s1 + $0x640] sm:$0xff]
  %v242 = vld [vmem:[%s1 + $0x648] sm:$0xff]
  %v243 = vld [vmem:[%s1 + $0x650] sm:$0xff]
  %v244 = vld [vmem:[%s1 + $0x658] sm:$0xff]
  %v245 = vld [vmem:[%s1 + $0x660] sm:$0xff]
  %v246 = vld [vmem:[%s1 + $0x668] sm:$0xff]
  %v247 = vld [vmem:[%s1 + $0x670] sm:$0xff]
  %v248 = vld [vmem:[%s1 + $0x678] sm:$0xff]
  %v249 = vld [vmem:[%s1 + $0x680] sm:$0xff]
  %v250 = vld [vmem:[%s1 + $0x688] sm:$0xff]
  %v251 = vld [vmem:[%s1 + $0x690] sm:$0xff]
  %v252 = vld [vmem:[%s1 + $0x698] sm:$0xff]
  %v253 = vld [vmem:[%s1 + $0x6a0] sm:$0xff]
  %v254 = vld [vmem:[%s1 + $0x6a8] sm:$0xff]
  %v255 = vld [vmem:[%s1 + $0x6b0] sm:$0xff]
  %v256 = vld [vmem:[%s1 + $0x6b8] sm:$0xff]
  %v257 = vld [vmem:[%s1 + $0x6c0] sm:$0xff]
  %v258 = vld [vmem:[%s1 + $0x6c8] sm:$0xff]
  %v259 = vld [vmem:[%s1 + $0x6d0] sm:$0xff]
  %v260 = vld [vmem:[%s1 + $0x6d8] sm:$0xff]
  %v261 = vld [vmem:[%s1 + $0x6e0] sm:$0xff]
  %v262 = vld [vmem:[%s1 + $0x6e8] sm:$0xff]
  %v263 = vld [vmem:[%s1 + $0x6f0] sm:$0xff]
  %v264 = vld [vmem:[%s1 + $0x6f8] sm:$0xff]
  %v265 = vld [vmem:[%s1 + $0x700] sm:$0xff]
  %v266 = vld [vmem:[%s1 + $0x708] sm:$0xff]
  %v267 = vld [vmem:[%s1 + $0x710] sm:$0xff]
  %v268 = vld [vmem:[%s1 + $0x718] sm:$0xff]
  %v269 = vld [vmem:[%s1 + $0x720] sm:$0xff]
  %v270 = vld [vmem:[%s1 + $0x728] sm:$0xff]
  %v271 = vld [vmem:[%s1 + $0x730] sm:$0xff]
  %v272 = vld [vmem:[%s1 + $0x738] sm:$0xff]
  %v273 = vld [vmem:[%s1 + $0x740] sm:$0xff]
  %v274 = vld [vmem:[%s1 + $0x748] sm:$0xff]
  %v275 = vld [vmem:[%s1 + $0x750] sm:$0xff]
  %v276 = vld [vmem:[%s1 + $0x758] sm:$0xff]
  %v277 = vld [vmem:[%s1 + $0x760] sm:$0xff]
  %v278 = vld [vmem:[%s1 + $0x768] sm:$0xff]
  %v279 = vld [vmem:[%s1 + $0x770] sm:$0xff]
  %v280 = vld [vmem:[%s1 + $0x778] sm:$0xff]
  %v281 = vld [vmem:[%s1 + $0x780] sm:$0xff]
  %v282 = vld [vmem:[%s1 + $0x788] sm:$0xff]
  %v283 = vld [vmem:[%s1 + $0x790] sm:$0xff]
  %v284 = vld [vmem:[%s1 + $0x798] sm:$0xff]
  %v285 = vld [vmem:[%s1 + $0x7a0] sm:$0xff]
  %v286 = vld [vmem:[%s1 + $0x7a8] sm:$0xff]
  %v287 = vld [vmem:[%s1 + $0x7b0] sm:$0xff]
  %v288 = vld [vmem:[%s1 + $0x7b8] sm:$0xff]
  %v289 = vld [vmem:[%s1 + $0x7c0] sm:$0xff]
  %v290 = vld [vmem:[%s1 + $0x7c8] sm:$0xff]
  %v291 = vld [vmem:[%s1 + $0x7d0] sm:$0xff]
  %v292 = vld [vmem:[%s1 + $0x7d8] sm:$0xff]
  %v293 = vld [vmem:[%s1 + $0x7e0] sm:$0xff]
  %v294 = vld [vmem:[%s1 + $0x7e8] sm:$0xff]
  %v295 = vld [vmem:[%s1 + $0x7f0] sm:$0xff]
  %v296 = vld [vmem:[%s1 + $0x7f8] sm:$0xff]
  %v305 = vunpack.c.l.b16 %v33
  %v306 = vunpack.c.h.b16 %v33
  %v307 = vunpack.c.l.b16 %v34
  %v308 = vunpack.c.h.b16 %v34
  %v309 = vunpack.c.l.b16 %v35
  %v310 = vunpack.c.h.b16 %v35
  %v311 = vunpack.c.l.b16 %v36
  %v312 = vunpack.c.h.b16 %v36
  %v313 = vunpack.c.l.b16 %v37
  %v314 = vunpack.c.h.b16 %v37
  %v315 = vunpack.c.l.b16 %v38
  %v316 = vunpack.c.h.b16 %v38
  %v317 = vunpack.c.l.b16 %v39
  %v318 = vunpack.c.h.b16 %v39
  %v319 = vunpack.c.l.b16 %v40
  %v320 = vunpack.c.h.b16 %v40
  %v321 = vpack.c.b16 %v313, %v305
  %v322 = vpack.c.b16 %v314, %v306
  %v323 = vpack.c.b16 %v315, %v307
  %v324 = vpack.c.b16 %v316, %v308
  %v325 = vpack.c.b16 %v317, %v309
  %v326 = vpack.c.b16 %v318, %v310
  %v327 = vpack.c.b16 %v319, %v311
  %v328 = vpack.c.b16 %v320, %v312
  %v593 = vunpack.c.l.b16 %v41
  %v594 = vunpack.c.h.b16 %v41
  %v595 = vunpack.c.l.b16 %v42
  %v596 = vunpack.c.h.b16 %v42
  %v597 = vunpack.c.l.b16 %v43
  %v598 = vunpack.c.h.b16 %v43
  %v599 = vunpack.c.l.b16 %v44
  %v600 = vunpack.c.h.b16 %v44
  %v601 = vunpack.c.l.b16 %v45
  %v602 = vunpack.c.h.b16 %v45
  %v603 = vunpack.c.l.b16 %v46
  %v604 = vunpack.c.h.b16 %v46
  %v605 = vunpack.c.l.b16 %v47
  %v606 = vunpack.c.h.b16 %v47
  %v607 = vunpack.c.l.b16 %v48
  %v608 = vunpack.c.h.b16 %v48
  %v609 = vunpack.c.l.b16 %v49
  %v610 = vunpack.c.h.b16 %v49
  %v611 = vunpack.c.l.b16 %v50
  %v612 = vunpack.c.h.b16 %v50
  %v613 = vunpack.c.l.b16 %v51
  %v614 = vunpack.c.h.b16 %v51
  %v615 = vunpack.c.l.b16 %v52
  %v616 = vunpack.c.h.b16 %v52
  %v617 = vunpack.c.l.b16 %v53
  %v618 = vunpack.c.h.b16 %v53
  %v619 = vunpack.c.l.b16 %v54
  %v620 = vunpack.c.h.b16 %v54
  %v621 = vunpack.c.l.b16 %v55
  %v622 = vunpack.c.h.b16 %v55
  %v623 = vunpack.c.l.b16 %v56
  %v624 = vunpack.c.h.b16 %v56
  %v625 = vunpack.c.l.b16 %v57
  %v626 = vunpack.c.h.b16 %v57
  %v627 = vunpack.c.l.b16 %v58
  %v628 = vunpack.c.h.b16 %v58
  %v629 = vunpack.c.l.b16 %v59
  %v630 = vunpack.c.h.b16 %v59
  %v631 = vunpack.c.l.b16 %v60
  %v632 = vunpack.c.h.b16 %v60
  %v633 = vunpack.c.l.b16 %v61
  %v634 = vunpack.c.h.b16 %v61
  %v635 = vunpack.c.l.b16 %v62
  %v636 = vunpack.c.h.b16 %v62
  %v637 = vunpack.c.l.b16 %v63
  %v638 = vunpack.c.h.b16 %v63
  %v639 = vunpack.c.l.b16 %v64
  %v640 = vunpack.c.h.b16 %v64
  %v641 = vunpack.c.l.b16 %v65
  %v642 = vunpack.c.h.b16 %v65
  %v643 = vunpack.c.l.b16 %v66
  %v644 = vunpack.c.h.b16 %v66
  %v645 = vunpack.c.l.b16 %v67
  %v646 = vunpack.c.h.b16 %v67
  %v647 = vunpack.c.l.b16 %v68
  %v648 = vunpack.c.h.b16 %v68
  %v649 = vunpack.c.l.b16 %v69
  %v650 = vunpack.c.h.b16 %v69
  %v651 = vunpack.c.l.b16 %v70
  %v652 = vunpack.c.h.b16 %v70
  %v653 = vunpack.c.l.b16 %v71
  %v654 = vunpack.c.h.b16 %v71
  %v655 = vunpack.c.l.b16 %v72
  %v656 = vunpack.c.h.b16 %v72
  %v657 = vunpack.c.l.b16 %v73
  %v658 = vunpack.c.h.b16 %v73
  %v659 = vunpack.c.l.b16 %v74
  %v660 = vunpack.c.h.b16 %v74
  %v661 = vunpack.c.l.b16 %v75
  %v662 = vunpack.c.h.b16 %v75
  %v663 = vunpack.c.l.b16 %v76
  %v664 = vunpack.c.h.b16 %v76
  %v665 = vunpack.c.l.b16 %v77
  %v666 = vunpack.c.h.b16 %v77
  %v667 = vunpack.c.l.b16 %v78
  %v668 = vunpack.c.h.b16 %v78
  %v669 = vunpack.c.l.b16 %v79
  %v670 = vunpack.c.h.b16 %v79
  %v671 = vunpack.c.l.b16 %v80
  %v672 = vunpack.c.h.b16 %v80
  %v673 = vunpack.c.l.b16 %v81
  %v674 = vunpack.c.h.b16 %v81
  %v675 = vunpack.c.l.b16 %v82
  %v676 = vunpack.c.h.b16 %v82
  %v677 = vunpack.c.l.b16 %v83
  %v678 = vunpack.c.h.b16 %v83
  %v679 = vunpack.c.l.b16 %v84
  %v680 = vunpack.c.h.b16 %v84
  %v681 = vunpack.c.l.b16 %v85
  %v682 = vunpack.c.h.b16 %v85
  %v683 = vunpack.c.l.b16 %v86
  %v684 = vunpack.c.h.b16 %v86
  %v685 = vunpack.c.l.b16 %v87
  %v686 = vunpack.c.h.b16 %v87
  %v687 = vunpack.c.l.b16 %v88
  %v688 = vunpack.c.h.b16 %v88
  %v689 = vunpack.c.l.b16 %v89
  %v690 = vunpack.c.h.b16 %v89
  %v691 = vunpack.c.l.b16 %v90
  %v692 = vunpack.c.h.b16 %v90
  %v693 = vunpack.c.l.b16 %v91
  %v694 = vunpack.c.h.b16 %v91
  %v695 = vunpack.c.l.b16 %v92
  %v696 = vunpack.c.h.b16 %v92
  %v697 = vunpack.c.l.b16 %v93
  %v698 = vunpack.c.h.b16 %v93
  %v699 = vunpack.c.l.b16 %v94
  %v700 = vunpack.c.h.b16 %v94
  %v701 = vunpack.c.l.b16 %v95
  %v702 = vunpack.c.h.b16 %v95
  %v703 = vunpack.c.l.b16 %v96
  %v704 = vunpack.c.h.b16 %v96
  %v705 = vunpack.c.l.b16 %v97
  %v706 = vunpack.c.h.b16 %v97
  %v707 = vunpack.c.l.b16 %v98
  %v708 = vunpack.c.h.b16 %v98
  %v709 = vunpack.c.l.b16 %v99
  %v710 = vunpack.c.h.b16 %v99
  %v711 = vunpack.c.l.b16 %v100
  %v712 = vunpack.c.h.b16 %v100
  %v713 = vunpack.c.l.b16 %v101
  %v714 = vunpack.c.h.b16 %v101
  %v715 = vunpack.c.l.b16 %v102
  %v716 = vunpack.c.h.b16 %v102
  %v717 = vunpack.c.l.b16 %v103
  %v718 = vunpack.c.h.b16 %v103
  %v719 = vunpack.c.l.b16 %v104
  %v720 = vunpack.c.h.b16 %v104
  %v721 = vunpack.c.l.b16 %v105
  %v722 = vunpack.c.h.b16 %v105
  %v723 = vunpack.c.l.b16 %v106
  %v724 = vunpack.c.h.b16 %v106
  %v725 = vunpack.c.l.b16 %v107
  %v726 = vunpack.c.h.b16 %v107
  %v727 = vunpack.c.l.b16 %v108
  %v728 = vunpack.c.h.b16 %v108
  %v729 = vunpack.c.l.b16 %v109
  %v730 = vunpack.c.h.b16 %v109
  %v731 = vunpack.c.l.b16 %v110
  %v732 = vunpack.c.h.b16 %v110
  %v733 = vunpack.c.l.b16 %v111
  %v734 = vunpack.c.h.b16 %v111
  %v735 = vunpack.c.l.b16 %v112
  %v736 = vunpack.c.h.b16 %v112
  %v737 = vunpack.c.l.b16 %v113
  %v738 = vunpack.c.h.b16 %v113
  %v739 = vunpack.c.l.b16 %v114
  %v740 = vunpack.c.h.b16 %v114
  %v741 = vunpack.c.l.b16 %v115
  %v742 = vunpack.c.h.b16 %v115
  %v743 = vunpack.c.l.b16 %v116
  %v744 = vunpack.c.h.b16 %v116
  %v745 = vunpack.c.l.b16 %v117
  %v746 = vunpack.c.h.b16 %v117
  %v747 = vunpack.c.l.b16 %v118
  %v748 = vunpack.c.h.b16 %v118
  %v749 = vunpack.c.l.b16 %v119
  %v750 = vunpack.c.h.b16 %v119
  %v751 = vunpack.c.l.b16 %v120
  %v752 = vunpack.c.h.b16 %v120
  %v753 = vunpack.c.l.b16 %v121
  %v754 = vunpack.c.h.b16 %v121
  %v755 = vunpack.c.l.b16 %v122
  %v756 = vunpack.c.h.b16 %v122
  %v757 = vunpack.c.l.b16 %v123
  %v758 = vunpack.c.h.b16 %v123
  %v759 = vunpack.c.l.b16 %v124
  %v760 = vunpack.c.h.b16 %v124
  %v761 = vunpack.c.l.b16 %v125
  %v762 = vunpack.c.h.b16 %v125
  %v763 = vunpack.c.l.b16 %v126
  %v764 = vunpack.c.h.b16 %v126
  %v765 = vunpack.c.l.b16 %v127
  %v766 = vunpack.c.h.b16 %v127
  %v767 = vunpack.c.l.b16 %v128
  %v768 = vunpack.c.h.b16 %v128
  %v769 = vunpack.c.l.b16 %v129
  %v770 = vunpack.c.h.b16 %v129
  %v771 = vunpack.c.l.b16 %v130
  %v772 = vunpack.c.h.b16 %v130
  %v773 = vunpack.c.l.b16 %v131
  %v774 = vunpack.c.h.b16 %v131
  %v775 = vunpack.c.l.b16 %v132
  %v776 = vunpack.c.h.b16 %v132
  %v777 = vunpack.c.l.b16 %v133
  %v778 = vunpack.c.h.b16 %v133
  %v779 = vunpack.c.l.b16 %v134
  %v780 = vunpack.c.h.b16 %v134
  %v781 = vunpack.c.l.b16 %v135
  %v782 = vunpack.c.h.b16 %v135
  %v783 = vunpack.c.l.b16 %v136
  %v784 = vunpack.c.h.b16 %v136
  %v785 = vunpack.c.l.b16 %v137
  %v786 = vunpack.c.h.b16 %v137
  %v787 = vunpack.c.l.b16 %v138
  %v788 = vunpack.c.h.b16 %v138
  %v789 = vunpack.c.l.b16 %v139
  %v790 = vunpack.c.h.b16 %v139
  %v791 = vunpack.c.l.b16 %v140
  %v792 = vunpack.c.h.b16 %v140
  %v793 = vunpack.c.l.b16 %v141
  %v794 = vunpack.c.h.b16 %v141
  %v795 = vunpack.c.l.b16 %v142
  %v796 = vunpack.c.h.b16 %v142
  %v797 = vunpack.c.l.b16 %v143
  %v798 = vunpack.c.h.b16 %v143
  %v799 = vunpack.c.l.b16 %v144
  %v800 = vunpack.c.h.b16 %v144
  %v801 = vunpack.c.l.b16 %v145
  %v802 = vunpack.c.h.b16 %v145
  %v803 = vunpack.c.l.b16 %v146
  %v804 = vunpack.c.h.b16 %v146
  %v805 = vunpack.c.l.b16 %v147
  %v806 = vunpack.c.h.b16 %v147
  %v807 = vunpack.c.l.b16 %v148
  %v808 = vunpack.c.h.b16 %v148
  %v809 = vunpack.c.l.b16 %v149
  %v810 = vunpack.c.h.b16 %v149
  %v811 = vunpack.c.l.b16 %v150
  %v812 = vunpack.c.h.b16 %v150
  %v813 = vunpack.c.l.b16 %v151
  %v814 = vunpack.c.h.b16 %v151
  %v815 = vunpack.c.l.b16 %v152
  %v816 = vunpack.c.h.b16 %v152
  %v817 = vunpack.c.l.b16 %v153
  %v818 = vunpack.c.h.b16 %v153
  %v819 = vunpack.c.l.b16 %v154
  %v820 = vunpack.c.h.b16 %v154
  %v821 = vunpack.c.l.b16 %v155
  %v822 = vunpack.c.h.b16 %v155
  %v823 = vunpack.c.l.b16 %v156
  %v824 = vunpack.c.h.b16 %v156
  %v825 = vunpack.c.l.b16 %v157
  %v826 = vunpack.c.h.b16 %v157
  %v827 = vunpack.c.l.b16 %v158
  %v828 = vunpack.c.h.b16 %v158
  %v829 = vunpack.c.l.b16 %v159
  %v830 = vunpack.c.h.b16 %v159
  %v831 = vunpack.c.l.b16 %v160
  %v832 = vunpack.c.h.b16 %v160
  %v833 = vunpack.c.l.b16 %v161
  %v834 = vunpack.c.h.b16 %v161
  %v835 = vunpack.c.l.b16 %v162
  %v836 = vunpack.c.h.b16 %v162
  %v837 = vunpack.c.l.b16 %v163
  %v838 = vunpack.c.h.b16 %v163
  %v839 = vunpack.c.l.b16 %v164
  %v840 = vunpack.c.h.b16 %v164
  %v841 = vunpack.c.l.b16 %v165
  %v842 = vunpack.c.h.b16 %v165
  %v843 = vunpack.c.l.b16 %v166
  %v844 = vunpack.c.h.b16 %v166
  %v845 = vunpack.c.l.b16 %v167
  %v846 = vunpack.c.h.b16 %v167
  %v847 = vunpack.c.l.b16 %v168
  %v848 = vunpack.c.h.b16 %v168
  %v849 = vunpack.c.l.b16 %v169
  %v850 = vunpack.c.h.b16 %v169
  %v851 = vunpack.c.l.b16 %v170
  %v852 = vunpack.c.h.b16 %v170
  %v853 = vunpack.c.l.b16 %v171
  %v854 = vunpack.c.h.b16 %v171
  %v855 = vunpack.c.l.b16 %v172
  %v856 = vunpack.c.h.b16 %v172
  %v857 = vunpack.c.l.b16 %v173
  %v858 = vunpack.c.h.b16 %v173
  %v859 = vunpack.c.l.b16 %v174
  %v860 = vunpack.c.h.b16 %v174
  %v861 = vunpack.c.l.b16 %v175
  %v862 = vunpack.c.h.b16 %v175
  %v863 = vunpack.c.l.b16 %v176
  %v864 = vunpack.c.h.b16 %v176
  %v865 = vunpack.c.l.b16 %v177
  %v866 = vunpack.c.h.b16 %v177
  %v867 = vunpack.c.l.b16 %v178
  %v868 = vunpack.c.h.b16 %v178
  %v869 = vunpack.c.l.b16 %v179
  %v870 = vunpack.c.h.b16 %v179
  %v871 = vunpack.c.l.b16 %v180
  %v872 = vunpack.c.h.b16 %v180
  %v873 = vunpack.c.l.b16 %v181
  %v874 = vunpack.c.h.b16 %v181
  %v875 = vunpack.c.l.b16 %v182
  %v876 = vunpack.c.h.b16 %v182
  %v877 = vunpack.c.l.b16 %v183
  %v878 = vunpack.c.h.b16 %v183
  %v879 = vunpack.c.l.b16 %v184
  %v880 = vunpack.c.h.b16 %v184
  %v881 = vunpack.c.l.b16 %v185
  %v882 = vunpack.c.h.b16 %v185
  %v883 = vunpack.c.l.b16 %v186
  %v884 = vunpack.c.h.b16 %v186
  %v885 = vunpack.c.l.b16 %v187
  %v886 = vunpack.c.h.b16 %v187
  %v887 = vunpack.c.l.b16 %v188
  %v888 = vunpack.c.h.b16 %v188
  %v889 = vunpack.c.l.b16 %v189
  %v890 = vunpack.c.h.b16 %v189
  %v891 = vunpack.c.l.b16 %v190
  %v892 = vunpack.c.h.b16 %v190
  %v893 = vunpack.c.l.b16 %v191
  %v894 = vunpack.c.h.b16 %v191
  %v895 = vunpack.c.l.b16 %v192
  %v896 = vunpack.c.h.b16 %v192
  %v897 = vunpack.c.l.b16 %v193
  %v898 = vunpack.c.h.b16 %v193
  %v899 = vunpack.c.l.b16 %v194
  %v900 = vunpack.c.h.b16 %v194
  %v901 = vunpack.c.l.b16 %v195
  %v902 = vunpack.c.h.b16 %v195
  %v903 = vunpack.c.l.b16 %v196
  %v904 = vunpack.c.h.b16 %v196
  %v905 = vunpack.c.l.b16 %v197
  %v906 = vunpack.c.h.b16 %v197
  %v907 = vunpack.c.l.b16 %v198
  %v908 = vunpack.c.h.b16 %v198
  %v909 = vunpack.c.l.b16 %v199
  %v910 = vunpack.c.h.b16 %v199
  %v911 = vunpack.c.l.b16 %v200
  %v912 = vunpack.c.h.b16 %v200
  %v913 = vunpack.c.l.b16 %v201
  %v914 = vunpack.c.h.b16 %v201
  %v915 = vunpack.c.l.b16 %v202
  %v916 = vunpack.c.h.b16 %v202
  %v917 = vunpack.c.l.b16 %v203
  %v918 = vunpack.c.h.b16 %v203
  %v919 = vunpack.c.l.b16 %v204
  %v920 = vunpack.c.h.b16 %v204
  %v921 = vunpack.c.l.b16 %v205
  %v922 = vunpack.c.h.b16 %v205
  %v923 = vunpack.c.l.b16 %v206
  %v924 = vunpack.c.h.b16 %v206
  %v925 = vunpack.c.l.b16 %v207
  %v926 = vunpack.c.h.b16 %v207
  %v927 = vunpack.c.l.b16 %v208
  %v928 = vunpack.c.h.b16 %v208
  %v929 = vunpack.c.l.b16 %v209
  %v930 = vunpack.c.h.b16 %v209
  %v931 = vunpack.c.l.b16 %v210
  %v932 = vunpack.c.h.b16 %v210
  %v933 = vunpack.c.l.b16 %v211
  %v934 = vunpack.c.h.b16 %v211
  %v935 = vunpack.c.l.b16 %v212
  %v936 = vunpack.c.h.b16 %v212
  %v937 = vunpack.c.l.b16 %v213
  %v938 = vunpack.c.h.b16 %v213
  %v939 = vunpack.c.l.b16 %v214
  %v940 = vunpack.c.h.b16 %v214
  %v941 = vunpack.c.l.b16 %v215
  %v942 = vunpack.c.h.b16 %v215
  %v943 = vunpack.c.l.b16 %v216
  %v944 = vunpack.c.h.b16 %v216
  %v945 = vunpack.c.l.b16 %v217
  %v946 = vunpack.c.h.b16 %v217
  %v947 = vunpack.c.l.b16 %v218
  %v948 = vunpack.c.h.b16 %v218
  %v949 = vunpack.c.l.b16 %v219
  %v950 = vunpack.c.h.b16 %v219
  %v951 = vunpack.c.l.b16 %v220
  %v952 = vunpack.c.h.b16 %v220
  %v953 = vunpack.c.l.b16 %v221
  %v954 = vunpack.c.h.b16 %v221
  %v955 = vunpack.c.l.b16 %v222
  %v956 = vunpack.c.h.b16 %v222
  %v957 = vunpack.c.l.b16 %v223
  %v958 = vunpack.c.h.b16 %v223
  %v959 = vunpack.c.l.b16 %v224
  %v960 = vunpack.c.h.b16 %v224
  %v961 = vunpack.c.l.b16 %v225
  %v962 = vunpack.c.h.b16 %v225
  %v963 = vunpack.c.l.b16 %v226
  %v964 = vunpack.c.h.b16 %v226
  %v965 = vunpack.c.l.b16 %v227
  %v966 = vunpack.c.h.b16 %v227
  %v967 = vunpack.c.l.b16 %v228
  %v968 = vunpack.c.h.b16 %v228
  %v969 = vunpack.c.l.b16 %v229
  %v970 = vunpack.c.h.b16 %v229
  %v971 = vunpack.c.l.b16 %v230
  %v972 = vunpack.c.h.b16 %v230
  %v973 = vunpack.c.l.b16 %v231
  %v974 = vunpack.c.h.b16 %v231
  %v975 = vunpack.c.l.b16 %v232
  %v976 = vunpack.c.h.b16 %v232
  %v977 = vunpack.c.l.b16 %v233
  %v978 = vunpack.c.h.b16 %v233
  %v979 = vunpack.c.l.b16 %v234
  %v980 = vunpack.c.h.b16 %v234
  %v981 = vunpack.c.l.b16 %v235
  %v982 = vunpack.c.h.b16 %v235
  %v983 = vunpack.c.l.b16 %v236
  %v984 = vunpack.c.h.b16 %v236
  %v985 = vunpack.c.l.b16 %v237
  %v986 = vunpack.c.h.b16 %v237
  %v987 = vunpack.c.l.b16 %v238
  %v988 = vunpack.c.h.b16 %v238
  %v989 = vunpack.c.l.b16 %v239
  %v990 = vunpack.c.h.b16 %v239
  %v991 = vunpack.c.l.b16 %v240
  %v992 = vunpack.c.h.b16 %v240
  %v993 = vunpack.c.l.b16 %v241
  %v994 = vunpack.c.h.b16 %v241
  %v995 = vunpack.c.l.b16 %v242
  %v996 = vunpack.c.h.b16 %v242
  %v997 = vunpack.c.l.b16 %v243
  %v998 = vunpack.c.h.b16 %v243
  %v999 = vunpack.c.l.b16 %v244
  %v1000 = vunpack.c.h.b16 %v244
  %v1001 = vunpack.c.l.b16 %v245
  %v1002 = vunpack.c.h.b16 %v245
  %v1003 = vunpack.c.l.b16 %v246
  %v1004 = vunpack.c.h.b16 %v246
  %v1005 = vunpack.c.l.b16 %v247
  %v1006 = vunpack.c.h.b16 %v247
  %v1007 = vunpack.c.l.b16 %v248
  %v1008 = vunpack.c.h.b16 %v248
  %v1009 = vunpack.c.l.b16 %v249
  %v1010 = vunpack.c.h.b16 %v249
  %v1011 = vunpack.c.l.b16 %v250
  %v1012 = vunpack.c.h.b16 %v250
  %v1013 = vunpack.c.l.b16 %v251
  %v1014 = vunpack.c.h.b16 %v251
  %v1015 = vunpack.c.l.b16 %v252
  %v1016 = vunpack.c.h.b16 %v252
  %v1017 = vunpack.c.l.b16 %v253
  %v1018 = vunpack.c.h.b16 %v253
  %v1019 = vunpack.c.l.b16 %v254
  %v1020 = vunpack.c.h.b16 %v254
  %v1021 = vunpack.c.l.b16 %v255
  %v1022 = vunpack.c.h.b16 %v255
  %v1023 = vunpack.c.l.b16 %v256
  %v1024 = vunpack.c.h.b16 %v256
  %v1025 = vunpack.c.l.b16 %v257
  %v1026 = vunpack.c.h.b16 %v257
  %v1027 = vunpack.c.l.b16 %v258
  %v1028 = vunpack.c.h.b16 %v258
  %v1029 = vunpack.c.l.b16 %v259
  %v1030 = vunpack.c.h.b16 %v259
  %v1031 = vunpack.c.l.b16 %v260
  %v1032 = vunpack.c.h.b16 %v260
  %v1033 = vunpack.c.l.b16 %v261
  %v1034 = vunpack.c.h.b16 %v261
  %v1035 = vunpack.c.l.b16 %v262
  %v1036 = vunpack.c.h.b16 %v262
  %v1037 = vunpack.c.l.b16 %v263
  %v1038 = vunpack.c.h.b16 %v263
  %v1039 = vunpack.c.l.b16 %v264
  %v1040 = vunpack.c.h.b16 %v264
  %v1041 = vunpack.c.l.b16 %v265
  %v1042 = vunpack.c.h.b16 %v265
  %v1043 = vunpack.c.l.b16 %v266
  %v1044 = vunpack.c.h.b16 %v266
  %v1045 = vunpack.c.l.b16 %v267
  %v1046 = vunpack.c.h.b16 %v267
  %v1047 = vunpack.c.l.b16 %v268
  %v1048 = vunpack.c.h.b16 %v268
  %v1049 = vunpack.c.l.b16 %v269
  %v1050 = vunpack.c.h.b16 %v269
  %v1051 = vunpack.c.l.b16 %v270
  %v1052 = vunpack.c.h.b16 %v270
  %v1053 = vunpack.c.l.b16 %v271
  %v1054 = vunpack.c.h.b16 %v271
  %v1055 = vunpack.c.l.b16 %v272
  %v1056 = vunpack.c.h.b16 %v272
  %v1057 = vunpack.c.l.b16 %v273
  %v1058 = vunpack.c.h.b16 %v273
  %v1059 = vunpack.c.l.b16 %v274
  %v1060 = vunpack.c.h.b16 %v274
  %v1061 = vunpack.c.l.b16 %v275
  %v1062 = vunpack.c.h.b16 %v275
  %v1063 = vunpack.c.l.b16 %v276
  %v1064 = vunpack.c.h.b16 %v276
  %v1065 = vunpack.c.l.b16 %v277
  %v1066 = vunpack.c.h.b16 %v277
  %v1067 = vunpack.c.l.b16 %v278
  %v1068 = vunpack.c.h.b16 %v278
  %v1069 = vunpack.c.l.b16 %v279
  %v1070 = vunpack.c.h.b16 %v279
  %v1071 = vunpack.c.l.b16 %v280
  %v1072 = vunpack.c.h.b16 %v280
  %v1073 = vunpack.c.l.b16 %v281
  %v1074 = vunpack.c.h.b16 %v281
  %v1075 = vunpack.c.l.b16 %v282
  %v1076 = vunpack.c.h.b16 %v282
  %v1077 = vunpack.c.l.b16 %v283
  %v1078 = vunpack.c.h.b16 %v283
  %v1079 = vunpack.c.l.b16 %v284
  %v1080 = vunpack.c.h.b16 %v284
  %v1081 = vunpack.c.l.b16 %v285
  %v1082 = vunpack.c.h.b16 %v285
  %v1083 = vunpack.c.l.b16 %v286
  %v1084 = vunpack.c.h.b16 %v286
  %v1085 = vunpack.c.l.b16 %v287
  %v1086 = vunpack.c.h.b16 %v287
  %v1087 = vunpack.c.l.b16 %v288
  %v1088 = vunpack.c.h.b16 %v288
  %v1089 = vunpack.c.l.b16 %v289
  %v1090 = vunpack.c.h.b16 %v289
  %v1091 = vunpack.c.l.b16 %v290
  %v1092 = vunpack.c.h.b16 %v290
  %v1093 = vunpack.c.l.b16 %v291
  %v1094 = vunpack.c.h.b16 %v291
  %v1095 = vunpack.c.l.b16 %v292
  %v1096 = vunpack.c.h.b16 %v292
  %v1097 = vunpack.c.l.b16 %v293
  %v1098 = vunpack.c.h.b16 %v293
  %v1099 = vunpack.c.l.b16 %v294
  %v1100 = vunpack.c.h.b16 %v294
  %v1101 = vunpack.c.l.b16 %v295
  %v1102 = vunpack.c.h.b16 %v295
  %v1103 = vunpack.c.l.b16 %v296
  %v1104 = vunpack.c.h.b16 %v296
  %v1105 = vpack.c.b16 %v597, %v593
  %v1106 = vpack.c.b16 %v598, %v594
  %v1107 = vpack.c.b16 %v599, %v595
  %v1108 = vpack.c.b16 %v600, %v596
  %v1109 = vpack.c.b16 %v605, %v601
  %v1110 = vpack.c.b16 %v606, %v602
  %v1111 = vpack.c.b16 %v607, %v603
  %v1112 = vpack.c.b16 %v608, %v604
  %v1113 = vpack.c.b16 %v613, %v609
  %v1114 = vpack.c.b16 %v614, %v610
  %v1115 = vpack.c.b16 %v615, %v611
  %v1116 = vpack.c.b16 %v616, %v612
  %v1117 = vpack.c.b16 %v621, %v617
  %v1118 = vpack.c.b16 %v622, %v618
  %v1119 = vpack.c.b16 %v623, %v619
  %v1120 = vpack.c.b16 %v624, %v620
  %v1121 = vpack.c.b16 %v629, %v625
  %v1122 = vpack.c.b16 %v630, %v626
  %v1123 = vpack.c.b16 %v631, %v627
  %v1124 = vpack.c.b16 %v632, %v628
  %v1125 = vpack.c.b16 %v637, %v633
  %v1126 = vpack.c.b16 %v638, %v634
  %v1127 = vpack.c.b16 %v639, %v635
  %v1128 = vpack.c.b16 %v640, %v636
  %v1129 = vpack.c.b16 %v645, %v641
  %v1130 = vpack.c.b16 %v646, %v642
  %v1131 = vpack.c.b16 %v647, %v643
  %v1132 = vpack.c.b16 %v648, %v644
  %v1133 = vpack.c.b16 %v653, %v649
  %v1134 = vpack.c.b16 %v654, %v650
  %v1135 = vpack.c.b16 %v655, %v651
  %v1136 = vpack.c.b16 %v656, %v652
  %v1137 = vpack.c.b16 %v661, %v657
  %v1138 = vpack.c.b16 %v662, %v658
  %v1139 = vpack.c.b16 %v663, %v659
  %v1140 = vpack.c.b16 %v664, %v660
  %v1141 = vpack.c.b16 %v669, %v665
  %v1142 = vpack.c.b16 %v670, %v666
  %v1143 = vpack.c.b16 %v671, %v667
  %v1144 = vpack.c.b16 %v672, %v668
  %v1145 = vpack.c.b16 %v677, %v673
  %v1146 = vpack.c.b16 %v678, %v674
  %v1147 = vpack.c.b16 %v679, %v675
  %v1148 = vpack.c.b16 %v680, %v676
  %v1149 = vpack.c.b16 %v685, %v681
  %v1150 = vpack.c.b16 %v686, %v682
  %v1151 = vpack.c.b16 %v687, %v683
  %v1152 = vpack.c.b16 %v688, %v684
  %v1153 = vpack.c.b16 %v693, %v689
  %v1154 = vpack.c.b16 %v694, %v690
  %v1155 = vpack.c.b16 %v695, %v691
  %v1156 = vpack.c.b16 %v696, %v692
  %v1157 = vpack.c.b16 %v701, %v697
  %v1158 = vpack.c.b16 %v702, %v698
  %v1159 = vpack.c.b16 %v703, %v699
  %v1160 = vpack.c.b16 %v704, %v700
  %v1161 = vpack.c.b16 %v709, %v705
  %v1162 = vpack.c.b16 %v710, %v706
  %v1163 = vpack.c.b16 %v711, %v707
  %v1164 = vpack.c.b16 %v712, %v708
  %v1165 = vpack.c.b16 %v717, %v713
  %v1166 = vpack.c.b16 %v718, %v714
  %v1167 = vpack.c.b16 %v719, %v715
  %v1168 = vpack.c.b16 %v720, %v716
  %v1169 = vpack.c.b16 %v725, %v721
  %v1170 = vpack.c.b16 %v726, %v722
  %v1171 = vpack.c.b16 %v727, %v723
  %v1172 = vpack.c.b16 %v728, %v724
  %v1173 = vpack.c.b16 %v733, %v729
  %v1174 = vpack.c.b16 %v734, %v730
  %v1175 = vpack.c.b16 %v735, %v731
  %v1176 = vpack.c.b16 %v736, %v732
  %v1177 = vpack.c.b16 %v741, %v737
  %v1178 = vpack.c.b16 %v742, %v738
  %v1179 = vpack.c.b16 %v743, %v739
  %v1180 = vpack.c.b16 %v744, %v740
  %v1181 = vpack.c.b16 %v749, %v745
  %v1182 = vpack.c.b16 %v750, %v746
  %v1183 = vpack.c.b16 %v751, %v747
  %v1184 = vpack.c.b16 %v752, %v748
  %v1185 = vpack.c.b16 %v757, %v753
  %v1186 = vpack.c.b16 %v758, %v754
  %v1187 = vpack.c.b16 %v759, %v755
  %v1188 = vpack.c.b16 %v760, %v756
  %v1189 = vpack.c.b16 %v765, %v761
  %v1190 = vpack.c.b16 %v766, %v762
  %v1191 = vpack.c.b16 %v767, %v763
  %v1192 = vpack.c.b16 %v768, %v764
  %v1193 = vpack.c.b16 %v773, %v769
  %v1194 = vpack.c.b16 %v774, %v770
  %v1195 = vpack.c.b16 %v775, %v771
  %v1196 = vpack.c.b16 %v776, %v772
  %v1197 = vpack.c.b16 %v781, %v777
  %v1198 = vpack.c.b16 %v782, %v778
  %v1199 = vpack.c.b16 %v783, %v779
  %v1200 = vpack.c.b16 %v784, %v780
  %v1201 = vpack.c.b16 %v789, %v785
  %v1202 = vpack.c.b16 %v790, %v786
  %v1203 = vpack.c.b16 %v791, %v787
  %v1204 = vpack.c.b16 %v792, %v788
  %v1205 = vpack.c.b16 %v797, %v793
  %v1206 = vpack.c.b16 %v798, %v794
  %v1207 = vpack.c.b16 %v799, %v795
  %v1208 = vpack.c.b16 %v800, %v796
  %v1209 = vpack.c.b16 %v805, %v801
  %v1210 = vpack.c.b16 %v806, %v802
  %v1211 = vpack.c.b16 %v807, %v803
  %v1212 = vpack.c.b16 %v808, %v804
  %v1213 = vpack.c.b16 %v813, %v809
  %v1214 = vpack.c.b16 %v814, %v810
  %v1215 = vpack.c.b16 %v815, %v811
  %v1216 = vpack.c.b16 %v816, %v812
  %v1217 = vpack.c.b16 %v821, %v817
  %v1218 = vpack.c.b16 %v822, %v818
  %v1219 = vpack.c.b16 %v823, %v819
  %v1220 = vpack.c.b16 %v824, %v820
  %v1221 = vpack.c.b16 %v829, %v825
  %v1222 = vpack.c.b16 %v830, %v826
  %v1223 = vpack.c.b16 %v831, %v827
  %v1224 = vpack.c.b16 %v832, %v828
  %v1225 = vpack.c.b16 %v837, %v833
  %v1226 = vpack.c.b16 %v838, %v834
  %v1227 = vpack.c.b16 %v839, %v835
  %v1228 = vpack.c.b16 %v840, %v836
  %v1229 = vpack.c.b16 %v845, %v841
  %v1230 = vpack.c.b16 %v846, %v842
  %v1231 = vpack.c.b16 %v847, %v843
  %v1232 = vpack.c.b16 %v848, %v844
  %v1233 = vpack.c.b16 %v853, %v849
  %v1234 = vpack.c.b16 %v854, %v850
  %v1235 = vpack.c.b16 %v855, %v851
  %v1236 = vpack.c.b16 %v856, %v852
  %v1237 = vpack.c.b16 %v861, %v857
  %v1238 = vpack.c.b16 %v862, %v858
  %v1239 = vpack.c.b16 %v863, %v859
  %v1240 = vpack.c.b16 %v864, %v860
  %v1241 = vpack.c.b16 %v869, %v865
  %v1242 = vpack.c.b16 %v870, %v866
  %v1243 = vpack.c.b16 %v871, %v867
  %v1244 = vpack.c.b16 %v872, %v868
  %v1245 = vpack.c.b16 %v877, %v873
  %v1246 = vpack.c.b16 %v878, %v874
  %v1247 = vpack.c.b16 %v879, %v875
  %v1248 = vpack.c.b16 %v880, %v876
  %v1249 = vpack.c.b16 %v885, %v881
  %v1250 = vpack.c.b16 %v886, %v882
  %v1251 = vpack.c.b16 %v887, %v883
  %v1252 = vpack.c.b16 %v888, %v884
  %v1253 = vpack.c.b16 %v893, %v889
  %v1254 = vpack.c.b16 %v894, %v890
  %v1255 = vpack.c.b16 %v895, %v891
  %v1256 = vpack.c.b16 %v896, %v892
  %v1257 = vpack.c.b16 %v901, %v897
  %v1258 = vpack.c.b16 %v902, %v898
  %v1259 = vpack.c.b16 %v903, %v899
  %v1260 = vpack.c.b16 %v904, %v900
  %v1261 = vpack.c.b16 %v909, %v905
  %v1262 = vpack.c.b16 %v910, %v906
  %v1263 = vpack.c.b16 %v911, %v907
  %v1264 = vpack.c.b16 %v912, %v908
  %v1265 = vpack.c.b16 %v917, %v913
  %v1266 = vpack.c.b16 %v918, %v914
  %v1267 = vpack.c.b16 %v919, %v915
  %v1268 = vpack.c.b16 %v920, %v916
  %v1269 = vpack.c.b16 %v925, %v921
  %v1270 = vpack.c.b16 %v926, %v922
  %v1271 = vpack.c.b16 %v927, %v923
  %v1272 = vpack.c.b16 %v928, %v924
  %v1273 = vpack.c.b16 %v933, %v929
  %v1274 = vpack.c.b16 %v934, %v930
  %v1275 = vpack.c.b16 %v935, %v931
  %v1276 = vpack.c.b16 %v936, %v932
  %v1277 = vpack.c.b16 %v941, %v937
  %v1278 = vpack.c.b16 %v942, %v938
  %v1279 = vpack.c.b16 %v943, %v939
  %v1280 = vpack.c.b16 %v944, %v940
  %v1281 = vpack.c.b16 %v949, %v945
  %v1282 = vpack.c.b16 %v950, %v946
  %v1283 = vpack.c.b16 %v951, %v947
  %v1284 = vpack.c.b16 %v952, %v948
  %v1285 = vpack.c.b16 %v957, %v953
  %v1286 = vpack.c.b16 %v958, %v954
  %v1287 = vpack.c.b16 %v959, %v955
  %v1288 = vpack.c.b16 %v960, %v956
  %v1289 = vpack.c.b16 %v965, %v961
  %v1290 = vpack.c.b16 %v966, %v962
  %v1291 = vpack.c.b16 %v967, %v963
  %v1292 = vpack.c.b16 %v968, %v964
  %v1293 = vpack.c.b16 %v973, %v969
  %v1294 = vpack.c.b16 %v974, %v970
  %v1295 = vpack.c.b16 %v975, %v971
  %v1296 = vpack.c.b16 %v976, %v972
  %v1297 = vpack.c.b16 %v981, %v977
  %v1298 = vpack.c.b16 %v982, %v978
  %v1299 = vpack.c.b16 %v983, %v979
  %v1300 = vpack.c.b16 %v984, %v980
  %v1301 = vpack.c.b16 %v989, %v985
  %v1302 = vpack.c.b16 %v990, %v986
  %v1303 = vpack.c.b16 %v991, %v987
  %v1304 = vpack.c.b16 %v992, %v988
  %v1305 = vpack.c.b16 %v997, %v993
  %v1306 = vpack.c.b16 %v998, %v994
  %v1307 = vpack.c.b16 %v999, %v995
  %v1308 = vpack.c.b16 %v1000, %v996
  %v1309 = vpack.c.b16 %v1005, %v1001
  %v1310 = vpack.c.b16 %v1006, %v1002
  %v1311 = vpack.c.b16 %v1007, %v1003
  %v1312 = vpack.c.b16 %v1008, %v1004
  %v1313 = vpack.c.b16 %v1013, %v1009
  %v1314 = vpack.c.b16 %v1014, %v1010
  %v1315 = vpack.c.b16 %v1015, %v1011
  %v1316 = vpack.c.b16 %v1016, %v1012
  %v1317 = vpack.c.b16 %v1021, %v1017
  %v1318 = vpack.c.b16 %v1022, %v1018
  %v1319 = vpack.c.b16 %v1023, %v1019
  %v1320 = vpack.c.b16 %v1024, %v1020
  %v1321 = vpack.c.b16 %v1029, %v1025
  %v1322 = vpack.c.b16 %v1030, %v1026
  %v1323 = vpack.c.b16 %v1031, %v1027
  %v1324 = vpack.c.b16 %v1032, %v1028
  %v1325 = vpack.c.b16 %v1037, %v1033
  %v1326 = vpack.c.b16 %v1038, %v1034
  %v1327 = vpack.c.b16 %v1039, %v1035
  %v1328 = vpack.c.b16 %v1040, %v1036
  %v1329 = vpack.c.b16 %v1045, %v1041
  %v1330 = vpack.c.b16 %v1046, %v1042
  %v1331 = vpack.c.b16 %v1047, %v1043
  %v1332 = vpack.c.b16 %v1048, %v1044
  %v1333 = vpack.c.b16 %v1053, %v1049
  %v1334 = vpack.c.b16 %v1054, %v1050
  %v1335 = vpack.c.b16 %v1055, %v1051
  %v1336 = vpack.c.b16 %v1056, %v1052
  %v1337 = vpack.c.b16 %v1061, %v1057
  %v1338 = vpack.c.b16 %v1062, %v1058
  %v1339 = vpack.c.b16 %v1063, %v1059
  %v1340 = vpack.c.b16 %v1064, %v1060
  %v1341 = vpack.c.b16 %v1069, %v1065
  %v1342 = vpack.c.b16 %v1070, %v1066
  %v1343 = vpack.c.b16 %v1071, %v1067
  %v1344 = vpack.c.b16 %v1072, %v1068
  %v1345 = vpack.c.b16 %v1077, %v1073
  %v1346 = vpack.c.b16 %v1078, %v1074
  %v1347 = vpack.c.b16 %v1079, %v1075
  %v1348 = vpack.c.b16 %v1080, %v1076
  %v1349 = vpack.c.b16 %v1085, %v1081
  %v1350 = vpack.c.b16 %v1086, %v1082
  %v1351 = vpack.c.b16 %v1087, %v1083
  %v1352 = vpack.c.b16 %v1088, %v1084
  %v1353 = vpack.c.b16 %v1093, %v1089
  %v1354 = vpack.c.b16 %v1094, %v1090
  %v1355 = vpack.c.b16 %v1095, %v1091
  %v1356 = vpack.c.b16 %v1096, %v1092
  %v1357 = vpack.c.b16 %v1101, %v1097
  %v1358 = vpack.c.b16 %v1102, %v1098
  %v1359 = vpack.c.b16 %v1103, %v1099
  %v1360 = vpack.c.b16 %v1104, %v1100
  %1617 = vmatprep.subr.bf16.mxu0 %v1106
  %1618 = vmatpush1.bf16.msra.mxu0 %v1105
  %1619 = vmatprep.subr.bf16.mxu0 %v1110
  %1620 = vmatpush1.bf16.msra.mxu0 %v1109
  %1621 = vmatprep.subr.bf16.mxu0 %v1114
  %1622 = vmatpush1.bf16.msra.mxu0 %v1113
  %1623 = vmatprep.subr.bf16.mxu0 %v1118
  %1624 = vmatpush1.bf16.msra.mxu0 %v1117
  %1625 = vmatprep.subr.bf16.mxu0 %v1122
  %1626 = vmatpush1.bf16.msra.mxu0 %v1121
  %1627 = vmatprep.subr.bf16.mxu0 %v1126
  %1628 = vmatpush1.bf16.msra.mxu0 %v1125
  %1629 = vmatprep.subr.bf16.mxu0 %v1130
  %1630 = vmatpush1.bf16.msra.mxu0 %v1129
  %1631 = vmatprep.subr.bf16.mxu0 %v1134
  %1632 = vmatpush1.bf16.msra.mxu0 %v1133
  %1633 = vmatprep.subr.bf16.mxu0 %v1138
  %1634 = vmatpush1.bf16.msra.mxu0 %v1137
  %1635 = vmatprep.subr.bf16.mxu0 %v1142
  %1636 = vmatpush1.bf16.msra.mxu0 %v1141
  %1637 = vmatprep.subr.bf16.mxu0 %v1146
  %1638 = vmatpush1.bf16.msra.mxu0 %v1145
  %1639 = vmatprep.subr.bf16.mxu0 %v1150
  %1640 = vmatpush1.bf16.msra.mxu0 %v1149
  %1641 = vmatprep.subr.bf16.mxu0 %v1154
  %1642 = vmatpush1.bf16.msra.mxu0 %v1153
  %1643 = vmatprep.subr.bf16.mxu0 %v1158
  %1644 = vmatpush1.bf16.msra.mxu0 %v1157
  %1645 = vmatprep.subr.bf16.mxu0 %v1162
  %1646 = vmatpush1.bf16.msra.mxu0 %v1161
  %1647 = vmatprep.subr.bf16.mxu0 %v1166
  %1648 = vmatpush1.bf16.msra.mxu0 %v1165
  %1649 = vmatprep.mubr.bf16.mxu0 %v322
  %1650 = vmatmul.mubr.bf16.gmra.mrb[0].mxu0 %v321
  %v1651 = vpop.f32.mrb[0].mxu0
  %v1652 = vadd.f32 0.0, %v1651
  %v1653 = vpop.f32.mrb[0].mxu0
  %v1654 = vadd.f32 0.0, %v1653
  %v1655 = vpop.f32.mrb[0].mxu0
  %v1656 = vadd.f32 0.0, %v1655
  %v1657 = vpop.f32.mrb[0].mxu0
  %v1658 = vadd.f32 0.0, %v1657
  %1659 = vdwg.mxu0
  %1660 = vmatprep.subr.bf16.mxu0 %v1170
  %1661 = vmatpush1.bf16.msra.mxu0 %v1169
  %1662 = vmatprep.subr.bf16.mxu0 %v1174
  %1663 = vmatpush1.bf16.msra.mxu0 %v1173
  %1664 = vmatprep.subr.bf16.mxu0 %v1178
  %1665 = vmatpush1.bf16.msra.mxu0 %v1177
  %1666 = vmatprep.subr.bf16.mxu0 %v1182
  %1667 = vmatpush1.bf16.msra.mxu0 %v1181
  %1668 = vmatprep.subr.bf16.mxu0 %v1186
  %1669 = vmatpush1.bf16.msra.mxu0 %v1185
  %1670 = vmatprep.subr.bf16.mxu0 %v1190
  %1671 = vmatpush1.bf16.msra.mxu0 %v1189
  %1672 = vmatprep.subr.bf16.mxu0 %v1194
  %1673 = vmatpush1.bf16.msra.mxu0 %v1193
  %1674 = vmatprep.subr.bf16.mxu0 %v1198
  %1675 = vmatpush1.bf16.msra.mxu0 %v1197
  %1676 = vmatprep.subr.bf16.mxu0 %v1202
  %1677 = vmatpush1.bf16.msra.mxu0 %v1201
  %1678 = vmatprep.subr.bf16.mxu0 %v1206
  %1679 = vmatpush1.bf16.msra.mxu0 %v1205
  %1680 = vmatprep.subr.bf16.mxu0 %v1210
  %1681 = vmatpush1.bf16.msra.mxu0 %v1209
  %1682 = vmatprep.subr.bf16.mxu0 %v1214
  %1683 = vmatpush1.bf16.msra.mxu0 %v1213
  %1684 = vmatprep.subr.bf16.mxu0 %v1218
  %1685 = vmatpush1.bf16.msra.mxu0 %v1217
  %1686 = vmatprep.subr.bf16.mxu0 %v1222
  %1687 = vmatpush1.bf16.msra.mxu0 %v1221
  %1688 = vmatprep.subr.bf16.mxu0 %v1226
  %1689 = vmatpush1.bf16.msra.mxu0 %v1225
  %1690 = vmatprep.subr.bf16.mxu0 %v1230
  %1691 = vmatpush1.bf16.msra.mxu0 %v1229
  %1692 = vmatprep.mubr.bf16.mxu0 %v324
  %1693 = vmatmul.mubr.bf16.gmra.mrb[0].mxu0 %v323
  %v1694 = vpop.f32.mrb[0].mxu0
  %v1695 = vadd.f32 %v1652, %v1694
  %v1696 = vpop.f32.mrb[0].mxu0
  %v1697 = vadd.f32 %v1654, %v1696
  %v1698 = vpop.f32.mrb[0].mxu0
  %v1699 = vadd.f32 %v1656, %v1698
  %v1700 = vpop.f32.mrb[0].mxu0
  %v1701 = vadd.f32 %v1658, %v1700
  %1702 = vdwg.mxu0
  %1703 = vmatprep.subr.bf16.mxu0 %v1234
  %1704 = vmatpush1.bf16.msra.mxu0 %v1233
  %1705 = vmatprep.subr.bf16.mxu0 %v1238
  %1706 = vmatpush1.bf16.msra.mxu0 %v1237
  %1707 = vmatprep.subr.bf16.mxu0 %v1242
  %1708 = vmatpush1.bf16.msra.mxu0 %v1241
  %1709 = vmatprep.subr.bf16.mxu0 %v1246
  %1710 = vmatpush1.bf16.msra.mxu0 %v1245
  %1711 = vmatprep.subr.bf16.mxu0 %v1250
  %1712 = vmatpush1.bf16.msra.mxu0 %v1249
  %1713 = vmatprep.subr.bf16.mxu0 %v1254
  %1714 = vmatpush1.bf16.msra.mxu0 %v1253
  %1715 = vmatprep.subr.bf16.mxu0 %v1258
  %1716 = vmatpush1.bf16.msra.mxu0 %v1257
  %1717 = vmatprep.subr.bf16.mxu0 %v1262
  %1718 = vmatpush1.bf16.msra.mxu0 %v1261
  %1719 = vmatprep.subr.bf16.mxu0 %v1266
  %1720 = vmatpush1.bf16.msra.mxu0 %v1265
  %1721 = vmatprep.subr.bf16.mxu0 %v1270
  %1722 = vmatpush1.bf16.msra.mxu0 %v1269
  %1723 = vmatprep.subr.bf16.mxu0 %v1274
  %1724 = vmatpush1.bf16.msra.mxu0 %v1273
  %1725 = vmatprep.subr.bf16.mxu0 %v1278
  %1726 = vmatpush1.bf16.msra.mxu0 %v1277
  %1727 = vmatprep.subr.bf16.mxu0 %v1282
  %1728 = vmatpush1.bf16.msra.mxu0 %v1281
  %1729 = vmatprep.subr.bf16.mxu0 %v1286
  %1730 = vmatpush1.bf16.msra.mxu0 %v1285
  %1731 = vmatprep.subr.bf16.mxu0 %v1290
  %1732 = vmatpush1.bf16.msra.mxu0 %v1289
  %1733 = vmatprep.subr.bf16.mxu0 %v1294
  %1734 = vmatpush1.bf16.msra.mxu0 %v1293
  %1735 = vmatprep.mubr.bf16.mxu0 %v326
  %1736 = vmatmul.mubr.bf16.gmra.mrb[0].mxu0 %v325
  %v1737 = vpop.f32.mrb[0].mxu0
  %v1738 = vadd.f32 %v1695, %v1737
  %v1739 = vpop.f32.mrb[0].mxu0
  %v1740 = vadd.f32 %v1697, %v1739
  %v1741 = vpop.f32.mrb[0].mxu0
  %v1742 = vadd.f32 %v1699, %v1741
  %v1743 = vpop.f32.mrb[0].mxu0
  %v1744 = vadd.f32 %v1701, %v1743
  %1745 = vdwg.mxu0
  %1746 = vmatprep.subr.bf16.mxu0 %v1298
  %1747 = vmatpush1.bf16.msra.mxu0 %v1297
  %1748 = vmatprep.subr.bf16.mxu0 %v1302
  %1749 = vmatpush1.bf16.msra.mxu0 %v1301
  %1750 = vmatprep.subr.bf16.mxu0 %v1306
  %1751 = vmatpush1.bf16.msra.mxu0 %v1305
  %1752 = vmatprep.subr.bf16.mxu0 %v1310
  %1753 = vmatpush1.bf16.msra.mxu0 %v1309
  %1754 = vmatprep.subr.bf16.mxu0 %v1314
  %1755 = vmatpush1.bf16.msra.mxu0 %v1313
  %1756 = vmatprep.subr.bf16.mxu0 %v1318
  %1757 = vmatpush1.bf16.msra.mxu0 %v1317
  %1758 = vmatprep.subr.bf16.mxu0 %v1322
  %1759 = vmatpush1.bf16.msra.mxu0 %v1321
  %1760 = vmatprep.subr.bf16.mxu0 %v1326
  %1761 = vmatpush1.bf16.msra.mxu0 %v1325
  %1762 = vmatprep.subr.bf16.mxu0 %v1330
  %1763 = vmatpush1.bf16.msra.mxu0 %v1329
  %1764 = vmatprep.subr.bf16.mxu0 %v1334
  %1765 = vmatpush1.bf16.msra.mxu0 %v1333
  %1766 = vmatprep.subr.bf16.mxu0 %v1338
  %1767 = vmatpush1.bf16.msra.mxu0 %v1337
  %1768 = vmatprep.subr.bf16.mxu0 %v1342
  %1769 = vmatpush1.bf16.msra.mxu0 %v1341
  %1770 = vmatprep.subr.bf16.mxu0 %v1346
  %1771 = vmatpush1.bf16.msra.mxu0 %v1345
  %1772 = vmatprep.subr.bf16.mxu0 %v1350
  %1773 = vmatpush1.bf16.msra.mxu0 %v1349
  %1774 = vmatprep.subr.bf16.mxu0 %v1354
  %1775 = vmatpush1.bf16.msra.mxu0 %v1353
  %1776 = vmatprep.subr.bf16.mxu0 %v1358
  %1777 = vmatpush1.bf16.msra.mxu0 %v1357
  %1778 = vmatprep.mubr.bf16.mxu0 %v328
  %1779 = vmatmul.mubr.bf16.gmra.mrb[0].mxu0 %v327
  %v1780 = vpop.f32.mrb[0].mxu0
  %v1781 = vadd.f32 %v1738, %v1780
  %v1782 = vpop.f32.mrb[0].mxu0
  %v1783 = vadd.f32 %v1740, %v1782
  %v1784 = vpop.f32.mrb[0].mxu0
  %v1785 = vadd.f32 %v1742, %v1784
  %v1786 = vpop.f32.mrb[0].mxu0
  %v1787 = vadd.f32 %v1744, %v1786
  %1788 = vdwg.mxu0
  %1789 = vmatprep.subr.bf16.mxu0 %v1108
  %1790 = vmatpush1.bf16.msra.mxu0 %v1107
  %1791 = vmatprep.subr.bf16.mxu0 %v1112
  %1792 = vmatpush1.bf16.msra.mxu0 %v1111
  %1793 = vmatprep.subr.bf16.mxu0 %v1116
  %1794 = vmatpush1.bf16.msra.mxu0 %v1115
  %1795 = vmatprep.subr.bf16.mxu0 %v1120
  %1796 = vmatpush1.bf16.msra.mxu0 %v1119
  %1797 = vmatprep.subr.bf16.mxu0 %v1124
  %1798 = vmatpush1.bf16.msra.mxu0 %v1123
  %1799 = vmatprep.subr.bf16.mxu0 %v1128
  %1800 = vmatpush1.bf16.msra.mxu0 %v1127
  %1801 = vmatprep.subr.bf16.mxu0 %v1132
  %1802 = vmatpush1.bf16.msra.mxu0 %v1131
  %1803 = vmatprep.subr.bf16.mxu0 %v1136
  %1804 = vmatpush1.bf16.msra.mxu0 %v1135
  %1805 = vmatprep.subr.bf16.mxu0 %v1140
  %1806 = vmatpush1.bf16.msra.mxu0 %v1139
  %1807 = vmatprep.subr.bf16.mxu0 %v1144
  %1808 = vmatpush1.bf16.msra.mxu0 %v1143
  %1809 = vmatprep.subr.bf16.mxu0 %v1148
  %1810 = vmatpush1.bf16.msra.mxu0 %v1147
  %1811 = vmatprep.subr.bf16.mxu0 %v1152
  %1812 = vmatpush1.bf16.msra.mxu0 %v1151
  %1813 = vmatprep.subr.bf16.mxu0 %v1156
  %1814 = vmatpush1.bf16.msra.mxu0 %v1155
  %1815 = vmatprep.subr.bf16.mxu0 %v1160
  %1816 = vmatpush1.bf16.msra.mxu0 %v1159
  %1817 = vmatprep.subr.bf16.mxu0 %v1164
  %1818 = vmatpush1.bf16.msra.mxu0 %v1163
  %1819 = vmatprep.subr.bf16.mxu0 %v1168
  %1820 = vmatpush1.bf16.msra.mxu0 %v1167
  %1821 = vmatprep.mubr.bf16.mxu0 %v322
  %1822 = vmatmul.mubr.bf16.gmra.mrb[0].mxu0 %v321
  %v1823 = vpop.f32.mrb[0].mxu0
  %v1824 = vadd.f32 0.0, %v1823
  %v1825 = vpop.f32.mrb[0].mxu0
  %v1826 = vadd.f32 0.0, %v1825
  %v1827 = vpop.f32.mrb[0].mxu0
  %v1828 = vadd.f32 0.0, %v1827
  %v1829 = vpop.f32.mrb[0].mxu0
  %v1830 = vadd.f32 0.0, %v1829
  %1831 = vdwg.mxu0
  %1832 = vmatprep.subr.bf16.mxu0 %v1172
  %1833 = vmatpush1.bf16.msra.mxu0 %v1171
  %1834 = vmatprep.subr.bf16.mxu0 %v1176
  %1835 = vmatpush1.bf16.msra.mxu0 %v1175
  %1836 = vmatprep.subr.bf16.mxu0 %v1180
  %1837 = vmatpush1.bf16.msra.mxu0 %v1179
  %1838 = vmatprep.subr.bf16.mxu0 %v1184
  %1839 = vmatpush1.bf16.msra.mxu0 %v1183
  %1840 = vmatprep.subr.bf16.mxu0 %v1188
  %1841 = vmatpush1.bf16.msra.mxu0 %v1187
  %1842 = vmatprep.subr.bf16.mxu0 %v1192
  %1843 = vmatpush1.bf16.msra.mxu0 %v1191
  %1844 = vmatprep.subr.bf16.mxu0 %v1196
  %1845 = vmatpush1.bf16.msra.mxu0 %v1195
  %1846 = vmatprep.subr.bf16.mxu0 %v1200
  %1847 = vmatpush1.bf16.msra.mxu0 %v1199
  %1848 = vmatprep.subr.bf16.mxu0 %v1204
  %1849 = vmatpush1.bf16.msra.mxu0 %v1203
  %1850 = vmatprep.subr.bf16.mxu0 %v1208
  %1851 = vmatpush1.bf16.msra.mxu0 %v1207
  %1852 = vmatprep.subr.bf16.mxu0 %v1212
  %1853 = vmatpush1.bf16.msra.mxu0 %v1211
  %1854 = vmatprep.subr.bf16.mxu0 %v1216
  %1855 = vmatpush1.bf16.msra.mxu0 %v1215
  %1856 = vmatprep.subr.bf16.mxu0 %v1220
  %1857 = vmatpush1.bf16.msra.mxu0 %v1219
  %1858 = vmatprep.subr.bf16.mxu0 %v1224
  %1859 = vmatpush1.bf16.msra.mxu0 %v1223
  %1860 = vmatprep.subr.bf16.mxu0 %v1228
  %1861 = vmatpush1.bf16.msra.mxu0 %v1227
  %1862 = vmatprep.subr.bf16.mxu0 %v1232
  %1863 = vmatpush1.bf16.msra.mxu0 %v1231
  %1864 = vmatprep.mubr.bf16.mxu0 %v324
  %1865 = vmatmul.mubr.bf16.gmra.mrb[0].mxu0 %v323
  %v1866 = vpop.f32.mrb[0].mxu0
  %v1867 = vadd.f32 %v1824, %v1866
  %v1868 = vpop.f32.mrb[0].mxu0
  %v1869 = vadd.f32 %v1826, %v1868
  %v1870 = vpop.f32.mrb[0].mxu0
  %v1871 = vadd.f32 %v1828, %v1870
  %v1872 = vpop.f32.mrb[0].mxu0
  %v1873 = vadd.f32 %v1830, %v1872
  %1874 = vdwg.mxu0
  %1875 = vmatprep.subr.bf16.mxu0 %v1236
  %1876 = vmatpush1.bf16.msra.mxu0 %v1235
  %1877 = vmatprep.subr.bf16.mxu0 %v1240
  %1878 = vmatpush1.bf16.msra.mxu0 %v1239
  %1879 = vmatprep.subr.bf16.mxu0 %v1244
  %1880 = vmatpush1.bf16.msra.mxu0 %v1243
  %1881 = vmatprep.subr.bf16.mxu0 %v1248
  %1882 = vmatpush1.bf16.msra.mxu0 %v1247
  %1883 = vmatprep.subr.bf16.mxu0 %v1252
  %1884 = vmatpush1.bf16.msra.mxu0 %v1251
  %1885 = vmatprep.subr.bf16.mxu0 %v1256
  %1886 = vmatpush1.bf16.msra.mxu0 %v1255
  %1887 = vmatprep.subr.bf16.mxu0 %v1260
  %1888 = vmatpush1.bf16.msra.mxu0 %v1259
  %1889 = vmatprep.subr.bf16.mxu0 %v1264
  %1890 = vmatpush1.bf16.msra.mxu0 %v1263
  %1891 = vmatprep.subr.bf16.mxu0 %v1268
  %1892 = vmatpush1.bf16.msra.mxu0 %v1267
  %1893 = vmatprep.subr.bf16.mxu0 %v1272
  %1894 = vmatpush1.bf16.msra.mxu0 %v1271
  %1895 = vmatprep.subr.bf16.mxu0 %v1276
  %1896 = vmatpush1.bf16.msra.mxu0 %v1275
  %1897 = vmatprep.subr.bf16.mxu0 %v1280
  %1898 = vmatpush1.bf16.msra.mxu0 %v1279
  %1899 = vmatprep.subr.bf16.mxu0 %v1284
  %1900 = vmatpush1.bf16.msra.mxu0 %v1283
  %1901 = vmatprep.subr.bf16.mxu0 %v1288
  %1902 = vmatpush1.bf16.msra.mxu0 %v1287
  %1903 = vmatprep.subr.bf16.mxu0 %v1292
  %1904 = vmatpush1.bf16.msra.mxu0 %v1291
  %1905 = vmatprep.subr.bf16.mxu0 %v1296
  %1906 = vmatpush1.bf16.msra.mxu0 %v1295
  %1907 = vmatprep.mubr.bf16.mxu0 %v326
  %1908 = vmatmul.mubr.bf16.gmra.mrb[0].mxu0 %v325
  %v1909 = vpop.f32.mrb[0].mxu0
  %v1910 = vadd.f32 %v1867, %v1909
  %v1911 = vpop.f32.mrb[0].mxu0
  %v1912 = vadd.f32 %v1869, %v1911
  %v1913 = vpop.f32.mrb[0].mxu0
  %v1914 = vadd.f32 %v1871, %v1913
  %v1915 = vpop.f32.mrb[0].mxu0
  %v1916 = vadd.f32 %v1873, %v1915
  %1917 = vdwg.mxu0
  %1918 = vmatprep.subr.bf16.mxu0 %v1300
  %1919 = vmatpush1.bf16.msra.mxu0 %v1299
  %1920 = vmatprep.subr.bf16.mxu0 %v1304
  %1921 = vmatpush1.bf16.msra.mxu0 %v1303
  %1922 = vmatprep.subr.bf16.mxu0 %v1308
  %1923 = vmatpush1.bf16.msra.mxu0 %v1307
  %1924 = vmatprep.subr.bf16.mxu0 %v1312
  %1925 = vmatpush1.bf16.msra.mxu0 %v1311
  %1926 = vmatprep.subr.bf16.mxu0 %v1316
  %1927 = vmatpush1.bf16.msra.mxu0 %v1315
  %1928 = vmatprep.subr.bf16.mxu0 %v1320
  %1929 = vmatpush1.bf16.msra.mxu0 %v1319
  %1930 = vmatprep.subr.bf16.mxu0 %v1324
  %1931 = vmatpush1.bf16.msra.mxu0 %v1323
  %1932 = vmatprep.subr.bf16.mxu0 %v1328
  %1933 = vmatpush1.bf16.msra.mxu0 %v1327
  %1934 = vmatprep.subr.bf16.mxu0 %v1332
  %1935 = vmatpush1.bf16.msra.mxu0 %v1331
  %1936 = vmatprep.subr.bf16.mxu0 %v1336
  %1937 = vmatpush1.bf16.msra.mxu0 %v1335
  %1938 = vmatprep.subr.bf16.mxu0 %v1340
  %1939 = vmatpush1.bf16.msra.mxu0 %v1339
  %1940 = vmatprep.subr.bf16.mxu0 %v1344
  %1941 = vmatpush1.bf16.msra.mxu0 %v1343
  %1942 = vmatprep.subr.bf16.mxu0 %v1348
  %1943 = vmatpush1.bf16.msra.mxu0 %v1347
  %1944 = vmatprep.subr.bf16.mxu0 %v1352
  %1945 = vmatpush1.bf16.msra.mxu0 %v1351
  %1946 = vmatprep.subr.bf16.mxu0 %v1356
  %1947 = vmatpush1.bf16.msra.mxu0 %v1355
  %1948 = vmatprep.subr.bf16.mxu0 %v1360
  %1949 = vmatpush1.bf16.msra.mxu0 %v1359
  %1950 = vmatprep.mubr.bf16.mxu0 %v328
  %1951 = vmatmul.mubr.bf16.gmra.mrb[0].mxu0 %v327
  %v1952 = vpop.f32.mrb[0].mxu0
  %v1953 = vadd.f32 %v1910, %v1952
  %v1954 = vpop.f32.mrb[0].mxu0
  %v1955 = vadd.f32 %v1912, %v1954
  %v1956 = vpop.f32.mrb[0].mxu0
  %v1957 = vadd.f32 %v1914, %v1956
  %v1958 = vpop.f32.mrb[0].mxu0
  %v1959 = vadd.f32 %v1916, %v1958
  %1960 = vdwg.mxu0
  %v1961 = vld [vmem:[%s2] sm:$0xf]
  %v1963 = vlaneseq
  %v1964 = vshrl.u32 %v1963, 7
  %v1965 = vsub.s32 0, %v1964
  %v1966 = vrot.slane %v1961, %v1965
  %v1967 = vlaneseq
  %v1968 = vshrl.u32 %v1967, 7
  %v1969 = vsub.s32 1, %v1968
  %v1970 = vrot.slane %v1961, %v1969
  %v1971 = vlaneseq
  %v1972 = vshrl.u32 %v1971, 7
  %v1973 = vsub.s32 2, %v1972
  %v1974 = vrot.slane %v1961, %v1973
  %v1975 = vlaneseq
  %v1976 = vshrl.u32 %v1975, 7
  %v1977 = vsub.s32 3, %v1976
  %v1978 = vrot.slane %v1961, %v1977
  %v1983 = vmul.f32 %v1781, %v1966
  %v1984 = vmul.f32 %v1783, %v1970
  %v1985 = vmul.f32 %v1953, %v1974
  %v1986 = vmul.f32 %v1955, %v1978
  %v1987 = vmul.f32 %v1785, %v1966
  %v1988 = vmul.f32 %v1787, %v1970
  %v1989 = vmul.f32 %v1957, %v1974
  %v1990 = vmul.f32 %v1959, %v1978
  %v1991 = vld [vmem:[%s3] sm:$0xf]
  %v1993 = vlaneseq
  %v1994 = vshrl.u32 %v1993, 7
  %v1995 = vsub.s32 0, %v1994
  %v1996 = vrot.slane %v1991, %v1995
  %v1997 = vlaneseq
  %v1998 = vshrl.u32 %v1997, 7
  %v1999 = vsub.s32 1, %v1998
  %v2000 = vrot.slane %v1991, %v1999
  %v2001 = vlaneseq
  %v2002 = vshrl.u32 %v2001, 7
  %v2003 = vsub.s32 2, %v2002
  %v2004 = vrot.slane %v1991, %v2003
  %v2005 = vlaneseq
  %v2006 = vshrl.u32 %v2005, 7
  %v2007 = vsub.s32 3, %v2006
  %v2008 = vrot.slane %v1991, %v2007
  %v2013 = vadd.f32 %v1983, %v1996
  %v2014 = vadd.f32 %v1984, %v2000
  %v2015 = vadd.f32 %v1985, %v2004
  %v2016 = vadd.f32 %v1986, %v2008
  %v2017 = vadd.f32 %v1987, %v1996
  %v2018 = vadd.f32 %v1988, %v2000
  %v2019 = vadd.f32 %v1989, %v2004
  %v2020 = vadd.f32 %v1990, %v2008
  %v2021 = vmax.f32 %v2013, 0.0
  %v2022 = vmax.f32 %v2014, 0.0
  %v2023 = vmax.f32 %v2015, 0.0
  %v2024 = vmax.f32 %v2016, 0.0
  %v2025 = vmax.f32 %v2017, 0.0
  %v2026 = vmax.f32 %v2018, 0.0
  %v2027 = vmax.f32 %v2019, 0.0
  %v2028 = vmax.f32 %v2020, 0.0
  %v2029 = vpack.c.bf16 %v2025, %v2021
  %v2030 = vpack.c.bf16 %v2026, %v2022
  %v2031 = vpack.c.bf16 %v2027, %v2023
  %v2032 = vpack.c.bf16 %v2028, %v2024
  %v2033 = vld [vmem:[%s4] sm:$0xff]
  %v2034 = vld [vmem:[%s4 + $0x8] sm:$0xff]
  %v2035 = vld [vmem:[%s4 + $0x10] sm:$0xff]
  %v2036 = vld [vmem:[%s4 + $0x18] sm:$0xff]
  %v2037 = vld [vmem:[%s4 + $0x20] sm:$0xff]
  %v2038 = vld [vmem:[%s4 + $0x28] sm:$0xff]
  %v2039 = vld [vmem:[%s4 + $0x30] sm:$0xff]
  %v2040 = vld [vmem:[%s4 + $0x38] sm:$0xff]
  %v2041 = vld [vmem:[%s4 + $0x40] sm:$0xff]
  %v2042 = vld [vmem:[%s4 + $0x48] sm:$0xff]
  %v2043 = vld [vmem:[%s4 + $0x50] sm:$0xff]
  %v2044 = vld [vmem:[%s4 + $0x58] sm:$0xff]
  %v2045 = vld [vmem:[%s4 + $0x60] sm:$0xff]
  %v2046 = vld [vmem:[%s4 + $0x68] sm:$0xff]
  %v2047 = vld [vmem:[%s4 + $0x70] sm:$0xff]
  %v2048 = vld [vmem:[%s4 + $0x78] sm:$0xff]
  %v2049 = vld [vmem:[%s4 + $0x80] sm:$0xff]
  %v2050 = vld [vmem:[%s4 + $0x88] sm:$0xff]
  %v2051 = vld [vmem:[%s4 + $0x90] sm:$0xff]
  %v2052 = vld [vmem:[%s4 + $0x98] sm:$0xff]
  %v2053 = vld [vmem:[%s4 + $0xa0] sm:$0xff]
  %v2054 = vld [vmem:[%s4 + $0xa8] sm:$0xff]
  %v2055 = vld [vmem:[%s4 + $0xb0] sm:$0xff]
  %v2056 = vld [vmem:[%s4 + $0xb8] sm:$0xff]
  %v2057 = vld [vmem:[%s4 + $0xc0] sm:$0xff]
  %v2058 = vld [vmem:[%s4 + $0xc8] sm:$0xff]
  %v2059 = vld [vmem:[%s4 + $0xd0] sm:$0xff]
  %v2060 = vld [vmem:[%s4 + $0xd8] sm:$0xff]
  %v2061 = vld [vmem:[%s4 + $0xe0] sm:$0xff]
  %v2062 = vld [vmem:[%s4 + $0xe8] sm:$0xff]
  %v2063 = vld [vmem:[%s4 + $0xf0] sm:$0xff]
  %v2064 = vld [vmem:[%s4 + $0xf8] sm:$0xff]
  %v2065 = vld [vmem:[%s4 + $0x100] sm:$0xff]
  %v2066 = vld [vmem:[%s4 + $0x108] sm:$0xff]
  %v2067 = vld [vmem:[%s4 + $0x110] sm:$0xff]
  %v2068 = vld [vmem:[%s4 + $0x118] sm:$0xff]
  %v2069 = vld [vmem:[%s4 + $0x120] sm:$0xff]
  %v2070 = vld [vmem:[%s4 + $0x128] sm:$0xff]
  %v2071 = vld [vmem:[%s4 + $0x130] sm:$0xff]
  %v2072 = vld [vmem:[%s4 + $0x138] sm:$0xff]
  %v2073 = vld [vmem:[%s4 + $0x140] sm:$0xff]
  %v2074 = vld [vmem:[%s4 + $0x148] sm:$0xff]
  %v2075 = vld [vmem:[%s4 + $0x150] sm:$0xff]
  %v2076 = vld [vmem:[%s4 + $0x158] sm:$0xff]
  %v2077 = vld [vmem:[%s4 + $0x160] sm:$0xff]
  %v2078 = vld [vmem:[%s4 + $0x168] sm:$0xff]
  %v2079 = vld [vmem:[%s4 + $0x170] sm:$0xff]
  %v2080 = vld [vmem:[%s4 + $0x178] sm:$0xff]
  %v2081 = vld [vmem:[%s4 + $0x180] sm:$0xff]
  %v2082 = vld [vmem:[%s4 + $0x188] sm:$0xff]
  %v2083 = vld [vmem:[%s4 + $0x190] sm:$0xff]
  %v2084 = vld [vmem:[%s4 + $0x198] sm:$0xff]
  %v2085 = vld [vmem:[%s4 + $0x1a0] sm:$0xff]
  %v2086 = vld [vmem:[%s4 + $0x1a8] sm:$0xff]
  %v2087 = vld [vmem:[%s4 + $0x1b0] sm:$0xff]
  %v2088 = vld [vmem:[%s4 + $0x1b8] sm:$0xff]
  %v2089 = vld [vmem:[%s4 + $0x1c0] sm:$0xff]
  %v2090 = vld [vmem:[%s4 + $0x1c8] sm:$0xff]
  %v2091 = vld [vmem:[%s4 + $0x1d0] sm:$0xff]
  %v2092 = vld [vmem:[%s4 + $0x1d8] sm:$0xff]
  %v2093 = vld [vmem:[%s4 + $0x1e0] sm:$0xff]
  %v2094 = vld [vmem:[%s4 + $0x1e8] sm:$0xff]
  %v2095 = vld [vmem:[%s4 + $0x1f0] sm:$0xff]
  %v2096 = vld [vmem:[%s4 + $0x1f8] sm:$0xff]
  %v2161 = vunpack.c.l.b16 %v2033
  %v2162 = vunpack.c.h.b16 %v2033
  %v2163 = vunpack.c.l.b16 %v2034
  %v2164 = vunpack.c.h.b16 %v2034
  %v2165 = vunpack.c.l.b16 %v2035
  %v2166 = vunpack.c.h.b16 %v2035
  %v2167 = vunpack.c.l.b16 %v2036
  %v2168 = vunpack.c.h.b16 %v2036
  %v2169 = vunpack.c.l.b16 %v2037
  %v2170 = vunpack.c.h.b16 %v2037
  %v2171 = vunpack.c.l.b16 %v2038
  %v2172 = vunpack.c.h.b16 %v2038
  %v2173 = vunpack.c.l.b16 %v2039
  %v2174 = vunpack.c.h.b16 %v2039
  %v2175 = vunpack.c.l.b16 %v2040
  %v2176 = vunpack.c.h.b16 %v2040
  %v2177 = vunpack.c.l.b16 %v2041
  %v2178 = vunpack.c.h.b16 %v2041
  %v2179 = vunpack.c.l.b16 %v2042
  %v2180 = vunpack.c.h.b16 %v2042
  %v2181 = vunpack.c.l.b16 %v2043
  %v2182 = vunpack.c.h.b16 %v2043
  %v2183 = vunpack.c.l.b16 %v2044
  %v2184 = vunpack.c.h.b16 %v2044
  %v2185 = vunpack.c.l.b16 %v2045
  %v2186 = vunpack.c.h.b16 %v2045
  %v2187 = vunpack.c.l.b16 %v2046
  %v2188 = vunpack.c.h.b16 %v2046
  %v2189 = vunpack.c.l.b16 %v2047
  %v2190 = vunpack.c.h.b16 %v2047
  %v2191 = vunpack.c.l.b16 %v2048
  %v2192 = vunpack.c.h.b16 %v2048
  %v2193 = vunpack.c.l.b16 %v2049
  %v2194 = vunpack.c.h.b16 %v2049
  %v2195 = vunpack.c.l.b16 %v2050
  %v2196 = vunpack.c.h.b16 %v2050
  %v2197 = vunpack.c.l.b16 %v2051
  %v2198 = vunpack.c.h.b16 %v2051
  %v2199 = vunpack.c.l.b16 %v2052
  %v2200 = vunpack.c.h.b16 %v2052
  %v2201 = vunpack.c.l.b16 %v2053
  %v2202 = vunpack.c.h.b16 %v2053
  %v2203 = vunpack.c.l.b16 %v2054
  %v2204 = vunpack.c.h.b16 %v2054
  %v2205 = vunpack.c.l.b16 %v2055
  %v2206 = vunpack.c.h.b16 %v2055
  %v2207 = vunpack.c.l.b16 %v2056
  %v2208 = vunpack.c.h.b16 %v2056
  %v2209 = vunpack.c.l.b16 %v2057
  %v2210 = vunpack.c.h.b16 %v2057
  %v2211 = vunpack.c.l.b16 %v2058
  %v2212 = vunpack.c.h.b16 %v2058
  %v2213 = vunpack.c.l.b16 %v2059
  %v2214 = vunpack.c.h.b16 %v2059
  %v2215 = vunpack.c.l.b16 %v2060
  %v2216 = vunpack.c.h.b16 %v2060
  %v2217 = vunpack.c.l.b16 %v2061
  %v2218 = vunpack.c.h.b16 %v2061
  %v2219 = vunpack.c.l.b16 %v2062
  %v2220 = vunpack.c.h.b16 %v2062
  %v2221 = vunpack.c.l.b16 %v2063
  %v2222 = vunpack.c.h.b16 %v2063
  %v2223 = vunpack.c.l.b16 %v2064
  %v2224 = vunpack.c.h.b16 %v2064
  %v2225 = vunpack.c.l.b16 %v2065
  %v2226 = vunpack.c.h.b16 %v2065
  %v2227 = vunpack.c.l.b16 %v2066
  %v2228 = vunpack.c.h.b16 %v2066
  %v2229 = vunpack.c.l.b16 %v2067
  %v2230 = vunpack.c.h.b16 %v2067
  %v2231 = vunpack.c.l.b16 %v2068
  %v2232 = vunpack.c.h.b16 %v2068
  %v2233 = vunpack.c.l.b16 %v2069
  %v2234 = vunpack.c.h.b16 %v2069
  %v2235 = vunpack.c.l.b16 %v2070
  %v2236 = vunpack.c.h.b16 %v2070
  %v2237 = vunpack.c.l.b16 %v2071
  %v2238 = vunpack.c.h.b16 %v2071
  %v2239 = vunpack.c.l.b16 %v2072
  %v2240 = vunpack.c.h.b16 %v2072
  %v2241 = vunpack.c.l.b16 %v2073
  %v2242 = vunpack.c.h.b16 %v2073
  %v2243 = vunpack.c.l.b16 %v2074
  %v2244 = vunpack.c.h.b16 %v2074
  %v2245 = vunpack.c.l.b16 %v2075
  %v2246 = vunpack.c.h.b16 %v2075
  %v2247 = vunpack.c.l.b16 %v2076
  %v2248 = vunpack.c.h.b16 %v2076
  %v2249 = vunpack.c.l.b16 %v2077
  %v2250 = vunpack.c.h.b16 %v2077
  %v2251 = vunpack.c.l.b16 %v2078
  %v2252 = vunpack.c.h.b16 %v2078
  %v2253 = vunpack.c.l.b16 %v2079
  %v2254 = vunpack.c.h.b16 %v2079
  %v2255 = vunpack.c.l.b16 %v2080
  %v2256 = vunpack.c.h.b16 %v2080
  %v2257 = vunpack.c.l.b16 %v2081
  %v2258 = vunpack.c.h.b16 %v2081
  %v2259 = vunpack.c.l.b16 %v2082
  %v2260 = vunpack.c.h.b16 %v2082
  %v2261 = vunpack.c.l.b16 %v2083
  %v2262 = vunpack.c.h.b16 %v2083
  %v2263 = vunpack.c.l.b16 %v2084
  %v2264 = vunpack.c.h.b16 %v2084
  %v2265 = vunpack.c.l.b16 %v2085
  %v2266 = vunpack.c.h.b16 %v2085
  %v2267 = vunpack.c.l.b16 %v2086
  %v2268 = vunpack.c.h.b16 %v2086
  %v2269 = vunpack.c.l.b16 %v2087
  %v2270 = vunpack.c.h.b16 %v2087
  %v2271 = vunpack.c.l.b16 %v2088
  %v2272 = vunpack.c.h.b16 %v2088
  %v2273 = vunpack.c.l.b16 %v2089
  %v2274 = vunpack.c.h.b16 %v2089
  %v2275 = vunpack.c.l.b16 %v2090
  %v2276 = vunpack.c.h.b16 %v2090
  %v2277 = vunpack.c.l.b16 %v2091
  %v2278 = vunpack.c.h.b16 %v2091
  %v2279 = vunpack.c.l.b16 %v2092
  %v2280 = vunpack.c.h.b16 %v2092
  %v2281 = vunpack.c.l.b16 %v2093
  %v2282 = vunpack.c.h.b16 %v2093
  %v2283 = vunpack.c.l.b16 %v2094
  %v2284 = vunpack.c.h.b16 %v2094
  %v2285 = vunpack.c.l.b16 %v2095
  %v2286 = vunpack.c.h.b16 %v2095
  %v2287 = vunpack.c.l.b16 %v2096
  %v2288 = vunpack.c.h.b16 %v2096
  %v2289 = vpack.c.b16 %v2163, %v2161
  %v2290 = vpack.c.b16 %v2164, %v2162
  %v2291 = vpack.c.b16 %v2167, %v2165
  %v2292 = vpack.c.b16 %v2168, %v2166
  %v2293 = vpack.c.b16 %v2171, %v2169
  %v2294 = vpack.c.b16 %v2172, %v2170
  %v2295 = vpack.c.b16 %v2175, %v2173
  %v2296 = vpack.c.b16 %v2176, %v2174
  %v2297 = vpack.c.b16 %v2179, %v2177
  %v2298 = vpack.c.b16 %v2180, %v2178
  %v2299 = vpack.c.b16 %v2183, %v2181
  %v2300 = vpack.c.b16 %v2184, %v2182
  %v2301 = vpack.c.b16 %v2187, %v2185
  %v2302 = vpack.c.b16 %v2188, %v2186
  %v2303 = vpack.c.b16 %v2191, %v2189
  %v2304 = vpack.c.b16 %v2192, %v2190
  %v2305 = vpack.c.b16 %v2195, %v2193
  %v2306 = vpack.c.b16 %v2196, %v2194
  %v2307 = vpack.c.b16 %v2199, %v2197
  %v2308 = vpack.c.b16 %v2200, %v2198
  %v2309 = vpack.c.b16 %v2203, %v2201
  %v2310 = vpack.c.b16 %v2204, %v2202
  %v2311 = vpack.c.b16 %v2207, %v2205
  %v2312 = vpack.c.b16 %v2208, %v2206
  %v2313 = vpack.c.b16 %v2211, %v2209
  %v2314 = vpack.c.b16 %v2212, %v2210
  %v2315 = vpack.c.b16 %v2215, %v2213
  %v2316 = vpack.c.b16 %v2216, %v2214
  %v2317 = vpack.c.b16 %v2219, %v2217
  %v2318 = vpack.c.b16 %v2220, %v2218
  %v2319 = vpack.c.b16 %v2223, %v2221
  %v2320 = vpack.c.b16 %v2224, %v2222
  %v2321 = vpack.c.b16 %v2227, %v2225
  %v2322 = vpack.c.b16 %v2228, %v2226
  %v2323 = vpack.c.b16 %v2231, %v2229
  %v2324 = vpack.c.b16 %v2232, %v2230
  %v2325 = vpack.c.b16 %v2235, %v2233
  %v2326 = vpack.c.b16 %v2236, %v2234
  %v2327 = vpack.c.b16 %v2239, %v2237
  %v2328 = vpack.c.b16 %v2240, %v2238
  %v2329 = vpack.c.b16 %v2243, %v2241
  %v2330 = vpack.c.b16 %v2244, %v2242
  %v2331 = vpack.c.b16 %v2247, %v2245
  %v2332 = vpack.c.b16 %v2248, %v2246
  %v2333 = vpack.c.b16 %v2251, %v2249
  %v2334 = vpack.c.b16 %v2252, %v2250
  %v2335 = vpack.c.b16 %v2255, %v2253
  %v2336 = vpack.c.b16 %v2256, %v2254
  %v2337 = vpack.c.b16 %v2259, %v2257
  %v2338 = vpack.c.b16 %v2260, %v2258
  %v2339 = vpack.c.b16 %v2263, %v2261
  %v2340 = vpack.c.b16 %v2264, %v2262
  %v2341 = vpack.c.b16 %v2267, %v2265
  %v2342 = vpack.c.b16 %v2268, %v2266
  %v2343 = vpack.c.b16 %v2271, %v2269
  %v2344 = vpack.c.b16 %v2272, %v2270
  %v2345 = vpack.c.b16 %v2275, %v2273
  %v2346 = vpack.c.b16 %v2276, %v2274
  %v2347 = vpack.c.b16 %v2279, %v2277
  %v2348 = vpack.c.b16 %v2280, %v2278
  %v2349 = vpack.c.b16 %v2283, %v2281
  %v2350 = vpack.c.b16 %v2284, %v2282
  %v2351 = vpack.c.b16 %v2287, %v2285
  %v2352 = vpack.c.b16 %v2288, %v2286
  %2417 = vmatprep.subr.bf16.mxu0 %v2290
  %2418 = vmatpush1.bf16.msra.mxu0 %v2289
  %2419 = vmatprep.subr.bf16.mxu0 %v2292
  %2420 = vmatpush1.bf16.msra.mxu0 %v2291
  %2421 = vmatprep.subr.bf16.mxu0 %v2294
  %2422 = vmatpush1.bf16.msra.mxu0 %v2293
  %2423 = vmatprep.subr.bf16.mxu0 %v2296
  %2424 = vmatpush1.bf16.msra.mxu0 %v2295
  %2425 = vmatprep.subr.bf16.mxu0 %v2298
  %2426 = vmatpush1.bf16.msra.mxu0 %v2297
  %2427 = vmatprep.subr.bf16.mxu0 %v2300
  %2428 = vmatpush1.bf16.msra.mxu0 %v2299
  %2429 = vmatprep.subr.bf16.mxu0 %v2302
  %2430 = vmatpush1.bf16.msra.mxu0 %v2301
  %2431 = vmatprep.subr.bf16.mxu0 %v2304
  %2432 = vmatpush1.bf16.msra.mxu0 %v2303
  %2433 = vmatprep.subr.bf16.mxu0 %v2306
  %2434 = vmatpush1.bf16.msra.mxu0 %v2305
  %2435 = vmatprep.subr.bf16.mxu0 %v2308
  %2436 = vmatpush1.bf16.msra.mxu0 %v2307
  %2437 = vmatprep.subr.bf16.mxu0 %v2310
  %2438 = vmatpush1.bf16.msra.mxu0 %v2309
  %2439 = vmatprep.subr.bf16.mxu0 %v2312
  %2440 = vmatpush1.bf16.msra.mxu0 %v2311
  %2441 = vmatprep.subr.bf16.mxu0 %v2314
  %2442 = vmatpush1.bf16.msra.mxu0 %v2313
  %2443 = vmatprep.subr.bf16.mxu0 %v2316
  %2444 = vmatpush1.bf16.msra.mxu0 %v2315
  %2445 = vmatprep.subr.bf16.mxu0 %v2318
  %2446 = vmatpush1.bf16.msra.mxu0 %v2317
  %2447 = vmatprep.subr.bf16.mxu0 %v2320
  %2448 = vmatpush1.bf16.msra.mxu0 %v2319
  %2449 = vmatprep.mubr.bf16.mxu0 %v2030
  %2450 = vmatmul.mubr.bf16.gmra.mrb[0].mxu0 %v2029
  %v2451 = vpop.f32.mrb[0].mxu0
  %v2452 = vadd.f32 0.0, %v2451
  %v2453 = vpop.f32.mrb[0].mxu0
  %v2454 = vadd.f32 0.0, %v2453
  %v2455 = vpop.f32.mrb[0].mxu0
  %v2456 = vadd.f32 0.0, %v2455
  %v2457 = vpop.f32.mrb[0].mxu0
  %v2458 = vadd.f32 0.0, %v2457
  %2459 = vdwg.mxu0
  %2460 = vmatprep.subr.bf16.mxu0 %v2322
  %2461 = vmatpush1.bf16.msra.mxu0 %v2321
  %2462 = vmatprep.subr.bf16.mxu0 %v2324
  %2463 = vmatpush1.bf16.msra.mxu0 %v2323
  %2464 = vmatprep.subr.bf16.mxu0 %v2326
  %2465 = vmatpush1.bf16.msra.mxu0 %v2325
  %2466 = vmatprep.subr.bf16.mxu0 %v2328
  %2467 = vmatpush1.bf16.msra.mxu0 %v2327
  %2468 = vmatprep.subr.bf16.mxu0 %v2330
  %2469 = vmatpush1.bf16.msra.mxu0 %v2329
  %2470 = vmatprep.subr.bf16.mxu0 %v2332
  %2471 = vmatpush1.bf16.msra.mxu0 %v2331
  %2472 = vmatprep.subr.bf16.mxu0 %v2334
  %2473 = vmatpush1.bf16.msra.mxu0 %v2333
  %2474 = vmatprep.subr.bf16.mxu0 %v2336
  %2475 = vmatpush1.bf16.msra.mxu0 %v2335
  %2476 = vmatprep.subr.bf16.mxu0 %v2338
  %2477 = vmatpush1.bf16.msra.mxu0 %v2337
  %2478 = vmatprep.subr.bf16.mxu0 %v2340
  %2479 = vmatpush1.bf16.msra.mxu0 %v2339
  %2480 = vmatprep.subr.bf16.mxu0 %v2342
  %2481 = vmatpush1.bf16.msra.mxu0 %v2341
  %2482 = vmatprep.subr.bf16.mxu0 %v2344
  %2483 = vmatpush1.bf16.msra.mxu0 %v2343
  %2484 = vmatprep.subr.bf16.mxu0 %v2346
  %2485 = vmatpush1.bf16.msra.mxu0 %v2345
  %2486 = vmatprep.subr.bf16.mxu0 %v2348
  %2487 = vmatpush1.bf16.msra.mxu0 %v2347
  %2488 = vmatprep.subr.bf16.mxu0 %v2350
  %2489 = vmatpush1.bf16.msra.mxu0 %v2349
  %2490 = vmatprep.subr.bf16.mxu0 %v2352
  %2491 = vmatpush1.bf16.msra.mxu0 %v2351
  %2492 = vmatprep.mubr.bf16.mxu0 %v2032
  %2493 = vmatmul.mubr.bf16.gmra.mrb[0].mxu0 %v2031
  %v2494 = vpop.f32.mrb[0].mxu0
  %v2495 = vadd.f32 %v2452, %v2494
  %v2496 = vpop.f32.mrb[0].mxu0
  %v2497 = vadd.f32 %v2454, %v2496
  %v2498 = vpop.f32.mrb[0].mxu0
  %v2499 = vadd.f32 %v2456, %v2498
  %v2500 = vpop.f32.mrb[0].mxu0
  %v2501 = vadd.f32 %v2458, %v2500
  %2502 = vdwg.mxu0
  %v2503 = vld [vmem:[%s5] sm:$0x3]
  %v2505 = vlaneseq
  %v2506 = vshrl.u32 %v2505, 7
  %v2507 = vsub.s32 0, %v2506
  %v2508 = vrot.slane %v2503, %v2507
  %v2509 = vlaneseq
  %v2510 = vshrl.u32 %v2509, 7
  %v2511 = vsub.s32 1, %v2510
  %v2512 = vrot.slane %v2503, %v2511
  %v2515 = vmul.f32 %v2495, %v2508
  %v2516 = vmul.f32 %v2497, %v2512
  %v2517 = vmul.f32 %v2499, %v2508
  %v2518 = vmul.f32 %v2501, %v2512
  %v2519 = vld [vmem:[%s6] sm:$0x3]
  %v2521 = vlaneseq
  %v2522 = vshrl.u32 %v2521, 7
  %v2523 = vsub.s32 0, %v2522
  %v2524 = vrot.slane %v2519, %v2523
  %v2525 = vlaneseq
  %v2526 = vshrl.u32 %v2525, 7
  %v2527 = vsub.s32 1, %v2526
  %v2528 = vrot.slane %v2519, %v2527
  %v2531 = vadd.f32 %v2515, %v2524
  %v2532 = vadd.f32 %v2516, %v2528
  %v2533 = vadd.f32 %v2517, %v2524
  %v2534 = vadd.f32 %v2518, %v2528
  %v2535 = vmax.f32 %v2531, 0.0
  %v2536 = vmax.f32 %v2532, 0.0
  %v2537 = vmax.f32 %v2533, 0.0
  %v2538 = vmax.f32 %v2534, 0.0
  %v2539 = vpack.c.bf16 %v2537, %v2535
  %v2540 = vpack.c.bf16 %v2538, %v2536
  %v2541 = vld [vmem:[%s7] sm:$0xf]
  %v2542 = vld [vmem:[%s7 + $0x4] sm:$0xf]
  %v2543 = vld [vmem:[%s7 + $0x8] sm:$0xf]
  %v2544 = vld [vmem:[%s7 + $0xc] sm:$0xf]
  %v2545 = vld [vmem:[%s7 + $0x10] sm:$0xf]
  %v2546 = vld [vmem:[%s7 + $0x14] sm:$0xf]
  %v2547 = vld [vmem:[%s7 + $0x18] sm:$0xf]
  %v2548 = vld [vmem:[%s7 + $0x1c] sm:$0xf]
  %v2549 = vld [vmem:[%s7 + $0x20] sm:$0xf]
  %v2550 = vld [vmem:[%s7 + $0x24] sm:$0xf]
  %v2551 = vld [vmem:[%s7 + $0x28] sm:$0xf]
  %v2552 = vld [vmem:[%s7 + $0x2c] sm:$0xf]
  %v2553 = vld [vmem:[%s7 + $0x30] sm:$0xf]
  %v2554 = vld [vmem:[%s7 + $0x34] sm:$0xf]
  %v2555 = vld [vmem:[%s7 + $0x38] sm:$0xf]
  %v2556 = vld [vmem:[%s7 + $0x3c] sm:$0xf]
  %v2557 = vld [vmem:[%s7 + $0x40] sm:$0xf]
  %v2558 = vld [vmem:[%s7 + $0x44] sm:$0xf]
  %v2559 = vld [vmem:[%s7 + $0x48] sm:$0xf]
  %v2560 = vld [vmem:[%s7 + $0x4c] sm:$0xf]
  %v2561 = vld [vmem:[%s7 + $0x50] sm:$0xf]
  %v2562 = vld [vmem:[%s7 + $0x54] sm:$0xf]
  %v2563 = vld [vmem:[%s7 + $0x58] sm:$0xf]
  %v2564 = vld [vmem:[%s7 + $0x5c] sm:$0xf]
  %v2565 = vld [vmem:[%s7 + $0x60] sm:$0xf]
  %v2566 = vld [vmem:[%s7 + $0x64] sm:$0xf]
  %v2567 = vld [vmem:[%s7 + $0x68] sm:$0xf]
  %v2568 = vld [vmem:[%s7 + $0x6c] sm:$0xf]
  %v2569 = vld [vmem:[%s7 + $0x70] sm:$0xf]
  %v2570 = vld [vmem:[%s7 + $0x74] sm:$0xf]
  %v2571 = vld [vmem:[%s7 + $0x78] sm:$0xf]
  %v2572 = vld [vmem:[%s7 + $0x7c] sm:$0xf]
  %v2573 = vld [vmem:[%s8] sm:$0x1]
  %v2575 = vlaneseq
  %v2576 = vshrl.u32 %v2575, 7
  %v2577 = vsub.s32 0, %v2576
  %v2578 = vrot.slane %v2573, %v2577
  %v2612 = vunpack.c.l.b16 %v2541
  %v2613 = vunpack.c.l.b16 %v2542
  %v2614 = vunpack.c.l.b16 %v2543
  %v2615 = vunpack.c.l.b16 %v2544
  %v2616 = vunpack.c.l.b16 %v2545
  %v2617 = vunpack.c.l.b16 %v2546
  %v2618 = vunpack.c.l.b16 %v2547
  %v2619 = vunpack.c.l.b16 %v2548
  %v2620 = vunpack.c.l.b16 %v2549
  %v2621 = vunpack.c.l.b16 %v2550
  %v2622 = vunpack.c.l.b16 %v2551
  %v2623 = vunpack.c.l.b16 %v2552
  %v2624 = vunpack.c.l.b16 %v2553
  %v2625 = vunpack.c.l.b16 %v2554
  %v2626 = vunpack.c.l.b16 %v2555
  %v2627 = vunpack.c.l.b16 %v2556
  %v2628 = vunpack.c.l.b16 %v2557
  %v2629 = vunpack.c.l.b16 %v2558
  %v2630 = vunpack.c.l.b16 %v2559
  %v2631 = vunpack.c.l.b16 %v2560
  %v2632 = vunpack.c.l.b16 %v2561
  %v2633 = vunpack.c.l.b16 %v2562
  %v2634 = vunpack.c.l.b16 %v2563
  %v2635 = vunpack.c.l.b16 %v2564
  %v2636 = vunpack.c.l.b16 %v2565
  %v2637 = vunpack.c.l.b16 %v2566
  %v2638 = vunpack.c.l.b16 %v2567
  %v2639 = vunpack.c.l.b16 %v2568
  %v2640 = vunpack.c.l.b16 %v2569
  %v2641 = vunpack.c.l.b16 %v2570
  %v2642 = vunpack.c.l.b16 %v2571
  %v2643 = vunpack.c.l.b16 %v2572
  %v2644 = vpack.c.b16 %v2613, %v2612
  %v2645 = vpack.c.b16 %v2615, %v2614
  %v2646 = vpack.c.b16 %v2617, %v2616
  %v2647 = vpack.c.b16 %v2619, %v2618
  %v2648 = vpack.c.b16 %v2621, %v2620
  %v2649 = vpack.c.b16 %v2623, %v2622
  %v2650 = vpack.c.b16 %v2625, %v2624
  %v2651 = vpack.c.b16 %v2627, %v2626
  %v2652 = vpack.c.b16 %v2629, %v2628
  %v2653 = vpack.c.b16 %v2631, %v2630
  %v2654 = vpack.c.b16 %v2633, %v2632
  %v2655 = vpack.c.b16 %v2635, %v2634
  %v2656 = vpack.c.b16 %v2637, %v2636
  %v2657 = vpack.c.b16 %v2639, %v2638
  %v2658 = vpack.c.b16 %v2641, %v2640
  %v2659 = vpack.c.b16 %v2643, %v2642
  %2676 = vmatprep.subr.bf16.mxu0 0
  %2677 = vmatpush1.bf16.msra.mxu0 %v2644
  %2678 = vmatprep.subr.bf16.mxu0 0
  %2679 = vmatpush1.bf16.msra.mxu0 %v2645
  %2680 = vmatprep.subr.bf16.mxu0 0
  %2681 = vmatpush1.bf16.msra.mxu0 %v2646
  %2682 = vmatprep.subr.bf16.mxu0 0
  %2683 = vmatpush1.bf16.msra.mxu0 %v2647
  %2684 = vmatprep.subr.bf16.mxu0 0
  %2685 = vmatpush1.bf16.msra.mxu0 %v2648
  %2686 = vmatprep.subr.bf16.mxu0 0
  %2687 = vmatpush1.bf16.msra.mxu0 %v2649
  %2688 = vmatprep.subr.bf16.mxu0 0
  %2689 = vmatpush1.bf16.msra.mxu0 %v2650
  %2690 = vmatprep.subr.bf16.mxu0 0
  %2691 = vmatpush1.bf16.msra.mxu0 %v2651
  %2692 = vmatprep.subr.bf16.mxu0 0
  %2693 = vmatpush1.bf16.msra.mxu0 %v2652
  %2694 = vmatprep.subr.bf16.mxu0 0
  %2695 = vmatpush1.bf16.msra.mxu0 %v2653
  %2696 = vmatprep.subr.bf16.mxu0 0
  %2697 = vmatpush1.bf16.msra.mxu0 %v2654
  %2698 = vmatprep.subr.bf16.mxu0 0
  %2699 = vmatpush1.bf16.msra.mxu0 %v2655
  %2700 = vmatprep.subr.bf16.mxu0 0
  %2701 = vmatpush1.bf16.msra.mxu0 %v2656
  %2702 = vmatprep.subr.bf16.mxu0 0
  %2703 = vmatpush1.bf16.msra.mxu0 %v2657
  %2704 = vmatprep.subr.bf16.mxu0 0
  %2705 = vmatpush1.bf16.msra.mxu0 %v2658
  %2706 = vmatprep.subr.bf16.mxu0 0
  %2707 = vmatpush1.bf16.msra.mxu0 %v2659
  %2708 = vmatprep.mubr.bf16.mxu0 %v2540
  %2709 = vmatmul.mubr.bf16.gmra.mrb[0].mxu0 %v2539
  %v2710 = vpop.f32.mrb[0].mxu0
  %v2711 = vadd.f32 %v2578, %v2710
  %v2712 = vpop.f32.mrb[0].mxu0
  %v2713 = vpop.f32.mrb[0].mxu0
  %v2714 = vadd.f32 %v2578, %v2713
  %v2715 = vpop.f32.mrb[0].mxu0
  %2716 = vdwg.mxu0
  %2717 = vst [vmem:[%s9] sm:$0xff] %v2711
  %2718 = vst [vmem:[%s9 + $0x8] sm:$0xff] %v2714
  // Predicated region
  $region38: #{pointnet_tokenizer_forward.3} parent=0 // pred_check
    _
  $region39: #{pointnet_tokenizer_forward.3} parent=0 // pred_check_branch
    %2720 = sbr.rel (0) target = $region41
  $region40: #{pointnet_tokenizer_forward.3} parent=0 // pred_region
    _
  $region41: #{pointnet_tokenizer_forward.3} parent=0 // pred_fallthru
    _
  // Predicated region
  $region42: #{pointnet_tokenizer_forward.3} parent=0 // pred_check
    _
  $region43: #{pointnet_tokenizer_forward.3} parent=0 // pred_check_branch
    %2722 = sbr.rel (0) target = $region45
  $region44: #{pointnet_tokenizer_forward.3} parent=0 // pred_region
    _
  $region45: #{pointnet_tokenizer_forward.3} parent=0 // pred_fallthru
    _

</llo_original>
